<compile_context>
chip_gen: v7x
topology: tpu7x:2x2x1
jax: 0.10.0
libtpu: 0.0.40
codegen_flags: <defaults>
</compile_context>

<pallas_src>
import jax
import jax.numpy as jnp
from jax import lax
from jax.experimental import pallas as pl
from jax.experimental.pallas import tpu as pltpu


def _ru16(n):
    return ((n + 15) // 16) * 16


def _blob_layout(Din, D0, H, S):
    """Static row offsets of each weight inside the two packed bf16 blobs.

    blob A (width 6H): [ W_x_all (Din rows) | W_hh_blockdiag (2H rows) ]
    blob B (width max(H, 2S)): [ W_hid | W_base | W_z | W_head1 | W_headt ]
    """
    a = {"wx": 0, "whh": _ru16(Din)}
    a_rows = a["whh"] + 2 * H
    b = {"whid": 0}
    b["wbase"] = _ru16(2 * H)
    b["wz"] = b["wbase"] + _ru16(D0)
    b["wh1"] = b["wz"] + _ru16(S)
    b["wht"] = b["wh1"] + _ru16(H)
    b_rows = b["wht"] + H
    b_cols = max(H, 2 * S)
    return a, a_rows, b, b_rows, b_cols


def rnn_stinf_kernel(
    inp_ref,    # [T1, B, Din] bf16   Din = dim_data + 1 + dim_treat + dim_base
    x0ba_ref,   # [B, D0]      bf16   D0  = dim_data + dim_base + dim_treat
    eps_ref,    # [T1, B, S]   f32    reparameterisation noise
    wa_ref,     # [Ra, 6H]     bf16   fused input-proj weight + block-diag W_hh
    wb_ref,     # [Rb, max(H,2S)] bf16  hid_rnn_zt | base_h1 | hid_ztm1_zt | heads
    bias_ref,   # [3, 6H]      f32    row0: folded gate biases, row1/2: linear biases
    out_ref,    # [T1, B, 3S]  f32    lanes = [ z | mu | sigma ]
    gx_ref,     # [T1, B, 6H]  f32 scratch: precomputed gate-input projections
    hfwd_ref,   # [T1, B, H]   f32 scratch: forward GRU hidden states
    hbwd_ref,   # [T1, B, H]   f32 scratch: backward GRU hidden states
    cur_ref,    # [T1, B, H]   f32 scratch: cur_t = hid_rnn_zt(out_t)
):
    T1, B, Din = inp_ref.shape
    D0 = x0ba_ref.shape[1]
    S = eps_ref.shape[-1]
    H = cur_ref.shape[-1]
    f32 = jnp.float32
    bf16 = jnp.bfloat16
    a_off, _, b_off, _, _ = _blob_layout(Din, D0, H, S)

    # ---- one-time weight loads (already bf16; no in-kernel casts of weights) ----
    w_x = wa_ref[a_off["wx"]:a_off["wx"] + Din, :]             # [Din, 6H]
    w_hh = wa_ref[a_off["whh"]:a_off["whh"] + 2 * H, :]        # [2H, 6H] block-diag
    w_hid = wb_ref[b_off["whid"]:b_off["whid"] + 2 * H, 0:H]   # [2H, H]
    w_base = wb_ref[b_off["wbase"]:b_off["wbase"] + D0, 0:H]   # [D0, H]
    w_z = wb_ref[b_off["wz"]:b_off["wz"] + S, 0:H]             # [S, H]
    w_h1 = wb_ref[b_off["wh1"]:b_off["wh1"] + H, 0:2 * S]      # [H, 2S] = mu_z1|sigma_z1
    w_ht = wb_ref[b_off["wht"]:b_off["wht"] + H, 0:2 * S]      # [H, 2S] = mu_zt|sigma_zt

    # ---- fused input projection: ONE [T1*B, Din] x [Din, 6H] MXU matmul ----
    inp2d = inp_ref[...].reshape(T1 * B, Din)
    gx = jnp.dot(inp2d, w_x, preferred_element_type=f32) + bias_ref[0:1, :]
    gx_ref[...] = gx.reshape(T1, B, 6 * H)

    # ---- hoisted bias broadcasts (kept out of the serial loops) ----
    bhn_f = jnp.broadcast_to(bias_ref[1:2, 0:H], (B, H))
    bhn_b = jnp.broadcast_to(bias_ref[1:2, H:2 * H], (B, H))
    bz = jnp.broadcast_to(bias_ref[1:2, 4 * H:5 * H], (B, H))
    bh1 = jnp.broadcast_to(bias_ref[2:3, 0:2 * S], (B, 2 * S))
    bht = jnp.broadcast_to(bias_ref[2:3, 2 * S:4 * S], (B, 2 * S))

    def sigmoid(v):
        # 0.5*(1+tanh(x/2)) -> EUP tanh, no VALU divide
        return 0.5 * (jnp.tanh(0.5 * v) + 1.0)

    def softplus(v):
        # matches torch.nn.functional.softplus (threshold = 20)
        return jnp.where(v > 20.0, v, jnp.log(1.0 + jnp.exp(jnp.minimum(v, 20.0))))

    def gru_update(h, gxd, ghd, bhn):
        # gxd/ghd lanes: [r(0:H) | z(H:2H) | n(2H:3H)]
        rz = sigmoid(gxd[:, 0:2 * H] + ghd[:, 0:2 * H])
        r, zg = rz[:, 0:H], rz[:, H:2 * H]
        n = jnp.tanh(gxd[:, 2 * H:3 * H] + r * (ghd[:, 2 * H:3 * H] + bhn))
        return (1.0 - zg) * n + zg * h

    # ---- interleaved bidirectional GRU: ONE block-diag MXU dot per serial step ----
    h0 = jnp.zeros((B, H), f32)

    def bi_body(i, carry):
        h_f, h_b = carry
        tb = T1 - 1 - i
        h_cat = jnp.concatenate([h_f, h_b], axis=-1).astype(bf16)     # [B, 2H]
        gh = jnp.dot(h_cat, w_hh, preferred_element_type=f32)         # [B, 6H]
        gx_f = gx_ref[i]                                              # [B, 6H]
        gx_b = gx_ref[tb]
        h_f = gru_update(h_f, gx_f[:, 0:3 * H], gh[:, 0:3 * H], bhn_f)
        h_b = gru_update(h_b, gx_b[:, 3 * H:6 * H], gh[:, 3 * H:6 * H], bhn_b)
        hfwd_ref[i] = h_f
        hbwd_ref[tb] = h_b
        return (h_f, h_b)

    lax.fori_loop(0, T1, bi_body, (h0, h0), unroll=True)

    # ---- hoisted combiner projection: cur_t = hid_rnn_zt(out_t), one matmul ----
    hcat2d = jnp.concatenate(
        [hfwd_ref[...].reshape(T1 * B, H), hbwd_ref[...].reshape(T1 * B, H)],
        axis=-1).astype(bf16)                                         # [T1*B, 2H]
    cur = (jnp.dot(hcat2d, w_hid, preferred_element_type=f32)
           + bias_ref[1:2, 2 * H:3 * H])
    cur_ref[...] = cur.reshape(T1, B, H)

    # hid_base = base_h1([x_0, b, a_0])
    hid_base = (jnp.dot(x0ba_ref[...], w_base, preferred_element_type=f32)
                + bias_ref[1:2, 3 * H:4 * H])

    def combiner_step(t, prev_hid, w_head, bhead):
        h1 = jnp.tanh(0.5 * (prev_hid + cur_ref[t]))   # 'standard' combiner, no bn
        hv = jnp.dot(h1.astype(bf16), w_head, preferred_element_type=f32) + bhead
        mu = hv[:, 0:S]
        sig = softplus(hv[:, S:2 * S])
        z = mu + sig * eps_ref[t]                      # diag Normal reparam sample
        out_ref[t] = jnp.concatenate([z, mu, sig], axis=-1)
        return z

    # t = 0 : uses hid_base and the (mu_z1, sigma_z1) heads
    z0 = combiner_step(0, hid_base, w_h1, bh1)

    # t >= 1 : previous hidden is hid_ztm1_zt(z_{t-1}); heads (mu_zt, sigma_zt)
    def rec_body(t, z):
        prev = jnp.dot(z.astype(bf16), w_z, preferred_element_type=f32) + bz
        return combiner_step(t, prev, w_ht, bht)

    lax.fori_loop(1, T1, rec_body, z0, unroll=True)


def init_params(key, dim_base, dim_data, dim_treat, dim_hidden, dim_stochastic):
    H, S = dim_hidden, dim_stochastic
    din = dim_data + 1 + dim_treat + dim_base
    d0 = dim_data + dim_base + dim_treat

    def uni(k, shape, fan_in):
        bound = 1.0 / float(fan_in) ** 0.5
        return jax.random.uniform(k, shape, jnp.float32, -bound, bound)

    keys = iter(jax.random.split(key, 32))
    p = {}
    for d in ("f", "b"):  # forward / reverse GRU directions (PyTorch layout [in, 3H])
        p[f"wih_{d}"] = uni(next(keys), (din, 3 * H), H)
        p[f"whh_{d}"] = uni(next(keys), (H, 3 * H), H)
        p[f"bih_{d}"] = uni(next(keys), (1, 3 * H), H)
        p[f"bhh_{d}"] = uni(next(keys), (1, 3 * H), H)
    p["whid_f"] = uni(next(keys), (H, H), 2 * H)
    p["whid_b"] = uni(next(keys), (H, H), 2 * H)
    p["bhid"] = uni(next(keys), (1, H), 2 * H)
    p["wbase"] = uni(next(keys), (d0, H), d0)
    p["bbase"] = uni(next(keys), (1, H), d0)
    p["wz"] = uni(next(keys), (S, H), S)
    p["bz"] = uni(next(keys), (1, H), S)
    for name in ("mu1", "sig1", "mut", "sigt"):
        p[f"w{name}"] = uni(next(keys), (H, S), H)
        p[f"b{name}"] = uni(next(keys), (1, S), H)
    return p


def _pack_operands(params, H, S, Din, D0):
    """Fold GRU biases, build fused/block-diag weights, pack everything into 3 blobs."""
    f32 = jnp.float32

    def gru_parts(d):
        wih, whh = params[f"wih_{d}"], params[f"whh_{d}"]
        bih3 = params[f"bih_{d}"].reshape(3, H)
        bhh3 = params[f"bhh_{d}"].reshape(3, H)
        # Fold b_ih (all gates) + b_hh (r,z) into the input projection;
        # b_hn must stay inside r*(W_hn h + b_hn) (PyTorch GRU gate semantics).
        bx = jnp.concatenate([bih3[0] + bhh3[0], bih3[1] + bhh3[1], bih3[2]], 0)
        return wih, whh, bx, bhh3[2]

    wih_f, whh_f, bx_f, bhn_f = gru_parts("f")
    wih_b, whh_b, bx_b, bhn_b = gru_parts("b")

    # fused input-projection weight [Din, 6H], lanes = [f: r z n | b: r z n]
    w_x_all = jnp.concatenate([wih_f, wih_b], axis=1)
    bx_all = jnp.concatenate([bx_f, bx_b], axis=0)                       # [6H]
    # block-diagonal recurrent weight [2H, 6H] (rows 0:H -> h_f, H:2H -> h_b)
    zpad = jnp.zeros((H, 3 * H), f32)
    w_hh_bd = jnp.concatenate(
        [jnp.concatenate([whh_f, zpad], axis=1),
         jnp.concatenate([zpad, whh_b], axis=1)], axis=0)

    w_hid = jnp.concatenate([params["whid_f"], params["whid_b"]], axis=0)  # [2H, H]
    w_h1 = jnp.concatenate([params["wmu1"], params["wsig1"]], axis=1)      # [H, 2S]
    w_ht = jnp.concatenate([params["wmut"], params["wsigt"]], axis=1)      # [H, 2S]

    a_off, a_rows, b_off, b_rows, b_cols = _blob_layout(Din, D0, H, S)

    blob_a = jnp.zeros((a_rows, 6 * H), f32)
    blob_a = blob_a.at[a_off["wx"]:a_off["wx"] + Din, :].set(w_x_all)
    blob_a = blob_a.at[a_off["whh"]:a_off["whh"] + 2 * H, :].set(w_hh_bd)

    blob_b = jnp.zeros((b_rows, b_cols), f32)
    blob_b = blob_b.at[b_off["whid"]:b_off["whid"] + 2 * H, 0:H].set(w_hid)
    blob_b = blob_b.at[b_off["wbase"]:b_off["wbase"] + D0, 0:H].set(params["wbase"])
    blob_b = blob_b.at[b_off["wz"]:b_off["wz"] + S, 0:H].set(params["wz"])
    blob_b = blob_b.at[b_off["wh1"]:b_off["wh1"] + H, 0:2 * S].set(w_h1)
    blob_b = blob_b.at[b_off["wht"]:b_off["wht"] + H, 0:2 * S].set(w_ht)

    # bias blob (f32): row0 = folded gate biases; row1/row2 = linear-layer biases
    row1 = jnp.concatenate(
        [bhn_f, bhn_b, params["bhid"].reshape(-1), params["bbase"].reshape(-1),
         params["bz"].reshape(-1)], axis=0)
    row2 = jnp.concatenate(
        [params["bmu1"].reshape(-1), params["bsig1"].reshape(-1),
         params["bmut"].reshape(-1), params["bsigt"].reshape(-1)], axis=0)
    bias_blob = jnp.zeros((3, 6 * H), f32)
    bias_blob = bias_blob.at[0, :].set(bx_all)
    bias_blob = bias_blob.at[1, 0:row1.shape[0]].set(row1)
    bias_blob = bias_blob.at[2, 0:row2.shape[0]].set(row2)

    return blob_a.astype(jnp.bfloat16), blob_b.astype(jnp.bfloat16), bias_blob


def rnn_stinf_forward(params, x, a, m, b, eps):
    """x:[B,T,Dx]  a:[B,T,Da]  m:[B,T,Dx]  b:[B,Db]  eps:[B,T-1,S] -> (Z_t, (mu, sigma))."""
    B, T, _ = x.shape
    T1 = T - 1
    H = params["whh_f"].shape[0]
    S = params["wz"].shape[0]

    # glue: build the GRU input and the base-hidden input (pure reshapes/concat)
    rnn_mask = (jnp.sum(m[:, 1:], axis=-1) > 1).astype(jnp.float32)          # [B, T1]
    b_rep = jnp.broadcast_to(b[:, None, :], (B, T1, b.shape[-1]))
    inp = jnp.concatenate([x[:, 1:, :], rnn_mask[..., None], a[:, 1:, :], b_rep], -1)
    inp = jnp.transpose(inp, (1, 0, 2)).astype(jnp.bfloat16)                 # [T1,B,Din]
    x0ba = jnp.concatenate([x[:, 0, :], b, a[:, 0, :]], -1).astype(jnp.bfloat16)
    eps_t = jnp.transpose(eps, (1, 0, 2)).astype(jnp.float32)                # [T1,B,S]

    Din = inp.shape[-1]
    D0 = x0ba.shape[-1]

    # TODO(synk): pack_padded_sequence / get_masks variable-length handling of the
    # biGRU is not reproduced; all sequences are assumed full length (lens == T-1).

    blob_a, blob_b, bias_blob = _pack_operands(params, H, S, Din, D0)

    vmem = pl.BlockSpec(memory_space=pltpu.MemorySpace.VMEM)
    out = pl.pallas_call(
        rnn_stinf_kernel,
        out_shape=jax.ShapeDtypeStruct((T1, B, 3 * S), jnp.float32),
        in_specs=[vmem] * 6,
        out_specs=vmem,
        scratch_shapes=[
            pltpu.VMEM((T1, B, 6 * H), jnp.float32),   # fused gate-input projections
            pltpu.VMEM((T1, B, H), jnp.float32),       # forward GRU hidden states
            pltpu.VMEM((T1, B, H), jnp.float32),       # backward GRU hidden states
            pltpu.VMEM((T1, B, H), jnp.float32),       # cur_t = hid_rnn_zt(out_t)
        ],
    )(inp, x0ba, eps_t, blob_a, blob_b, bias_blob)

    # split the lane-fused output slab and return batch-first like the PyTorch module
    Z_t = jnp.transpose(out[:, :, 0:S], (1, 0, 2))
    mu = jnp.transpose(out[:, :, S:2 * S], (1, 0, 2))
    sigma = jnp.transpose(out[:, :, 2 * S:3 * S], (1, 0, 2))
    # q_zt (Independent Normal over the last dim) represented by its (mu, sigma)
    return Z_t, (mu, sigma)


if __name__ == "__main__":
    key = jax.random.PRNGKey(0)
    B, T = 8, 8
    dim_base, dim_data, dim_treat = 2, 4, 3
    dim_hidden, dim_stochastic = 32, 8

    kp, kx, ka, km, kb, ke = jax.random.split(key, 6)
    params = init_params(kp, dim_base, dim_data, dim_treat, dim_hidden, dim_stochastic)

    x = jax.random.normal(kx, (B, T, dim_data), jnp.float32)
    a = jax.random.normal(ka, (B, T, dim_treat), jnp.float32)
    m = (jax.random.uniform(km, (B, T, dim_data)) > 0.2).astype(jnp.float32)
    b = jax.random.normal(kb, (B, dim_base), jnp.float32)
    eps = jax.random.normal(ke, (B, T - 1, dim_stochastic), jnp.float32)

    Z_t, (mu, sigma) = jax.jit(rnn_stinf_forward)(params, x, a, m, b, eps)
    jax.block_until_ready((Z_t, mu, sigma))

    assert Z_t.shape == (B, T - 1, dim_stochastic)
    assert mu.shape == (B, T - 1, dim_stochastic)
    assert sigma.shape == (B, T - 1, dim_stochastic)
    assert bool(jnp.all(jnp.isfinite(Z_t)))
    assert bool(jnp.all(jnp.isfinite(mu)))
    assert bool(jnp.all(sigma > 0.0))
    print("KERNEL_OK")
</pallas_src>

<mosaic_0001>
module attributes {stable_mosaic.version = 11 : i64} {
  func.func @rnn_stinf_kernel(%arg0: memref<7x8x10xbf16, #tpu.memory_space<vmem>>, %arg1: memref<8x9xbf16, #tpu.memory_space<vmem>>, %arg2: memref<7x8x8xf32, #tpu.memory_space<vmem>>, %arg3: memref<80x192xbf16, #tpu.memory_space<vmem>>, %arg4: memref<160x32xbf16, #tpu.memory_space<vmem>>, %arg5: memref<3x192xf32, #tpu.memory_space<vmem>>, %arg6: memref<7x8x24xf32, #tpu.memory_space<vmem>>, %arg7: memref<7x8x192xf32, #tpu.memory_space<vmem>>, %arg8: memref<7x8x32xf32, #tpu.memory_space<vmem>>, %arg9: memref<7x8x32xf32, #tpu.memory_space<vmem>>, %arg10: memref<7x8x32xf32, #tpu.memory_space<vmem>>) attributes {dimension_semantics = [], scalar_prefetch = 0 : i64, scratch_operands = 4 : i64, tpu.core_type = #tpu.core_type<tc>} {
    %c0 = arith.constant 0 : index
    %c0_0 = arith.constant 0 : index
    %0 = vector.load %arg3[%c0, %c0_0] : memref<80x192xbf16, #tpu.memory_space<vmem>>, vector<10x192xbf16>
    %c16 = arith.constant 16 : index
    %c0_1 = arith.constant 0 : index
    %1 = vector.load %arg3[%c16, %c0_1] : memref<80x192xbf16, #tpu.memory_space<vmem>>, vector<64x192xbf16>
    %c0_2 = arith.constant 0 : index
    %c0_3 = arith.constant 0 : index
    %2 = vector.load %arg4[%c0_2, %c0_3] : memref<160x32xbf16, #tpu.memory_space<vmem>>, vector<64x32xbf16>
    %c64 = arith.constant 64 : index
    %c0_4 = arith.constant 0 : index
    %3 = vector.load %arg4[%c64, %c0_4] : memref<160x32xbf16, #tpu.memory_space<vmem>>, vector<9x32xbf16>
    %c80 = arith.constant 80 : index
    %c0_5 = arith.constant 0 : index
    %4 = vector.load %arg4[%c80, %c0_5] : memref<160x32xbf16, #tpu.memory_space<vmem>>, vector<8x32xbf16>
    %c96 = arith.constant 96 : index
    %c0_6 = arith.constant 0 : index
    %5 = vector.load %arg4[%c96, %c0_6] : memref<160x32xbf16, #tpu.memory_space<vmem>>, vector<32x16xbf16>
    %c128 = arith.constant 128 : index
    %c0_7 = arith.constant 0 : index
    %6 = vector.load %arg4[%c128, %c0_7] : memref<160x32xbf16, #tpu.memory_space<vmem>>, vector<32x16xbf16>
    %c0_8 = arith.constant 0 : index
    %c0_9 = arith.constant 0 : index
    %c0_10 = arith.constant 0 : index
    %7 = vector.load %arg0[%c0_8, %c0_9, %c0_10] : memref<7x8x10xbf16, #tpu.memory_space<vmem>>, vector<7x8x10xbf16>
    %8 = vector.shape_cast %7 : vector<7x8x10xbf16> to vector<56x10xbf16>
    %cst = arith.constant dense<0.000000e+00> : vector<56x192xf32>
    %9 = tpu.matmul %8, %0, %cst {dimension_numbers = #tpu.dot_dimension_numbers<[1], [0], [0], [1], [0, 0, 1, 1], [], []>} : vector<56x10xbf16>, vector<10x192xbf16>, vector<56x192xf32> -> vector<56x192xf32>
    %c0_11 = arith.constant 0 : index
    %c0_12 = arith.constant 0 : index
    %10 = vector.load %arg5[%c0_11, %c0_12] : memref<3x192xf32, #tpu.memory_space<vmem>>, vector<1x192xf32>
    %11 = vector.broadcast %10 : vector<1x192xf32> to vector<56x192xf32>
    %12 = arith.addf %9, %11 : vector<56x192xf32>
    %13 = vector.shape_cast %12 : vector<56x192xf32> to vector<7x8x192xf32>
    %c0_13 = arith.constant 0 : index
    %c0_14 = arith.constant 0 : index
    %c0_15 = arith.constant 0 : index
    %14 = vector.load %arg7[%c0_13, %c0_14, %c0_15] : memref<7x8x192xf32, #tpu.memory_space<vmem>>, vector<7x8x192xf32>
    tpu.vector_store %arg7[%c0_13, %c0_14, %c0_15], %13 {strides = array<i32>} : memref<7x8x192xf32, #tpu.memory_space<vmem>>, vector<7x8x192xf32>,
    %c1 = arith.constant 1 : index
    %c0_16 = arith.constant 0 : index
    %15 = vector.load %arg5[%c1, %c0_16] : memref<3x192xf32, #tpu.memory_space<vmem>>, vector<1x32xf32>
    %16 = vector.shape_cast %15 : vector<1x32xf32> to vector<1x32xf32>
    %17 = vector.broadcast %16 : vector<1x32xf32> to vector<8x32xf32>
    %c1_17 = arith.constant 1 : index
    %c32 = arith.constant 32 : index
    %18 = vector.load %arg5[%c1_17, %c32] : memref<3x192xf32, #tpu.memory_space<vmem>>, vector<1x32xf32>
    %19 = vector.shape_cast %18 : vector<1x32xf32> to vector<1x32xf32>
    %20 = vector.broadcast %19 : vector<1x32xf32> to vector<8x32xf32>
    %c1_18 = arith.constant 1 : index
    %c128_19 = arith.constant 128 : index
    %21 = vector.load %arg5[%c1_18, %c128_19] : memref<3x192xf32, #tpu.memory_space<vmem>>, vector<1x32xf32>
    %22 = vector.shape_cast %21 : vector<1x32xf32> to vector<1x32xf32>
    %23 = vector.broadcast %22 : vector<1x32xf32> to vector<8x32xf32>
    %c2 = arith.constant 2 : index
    %c0_20 = arith.constant 0 : index
    %24 = vector.load %arg5[%c2, %c0_20] : memref<3x192xf32, #tpu.memory_space<vmem>>, vector<1x16xf32>
    %25 = vector.shape_cast %24 : vector<1x16xf32> to vector<1x16xf32>
    %26 = vector.broadcast %25 : vector<1x16xf32> to vector<8x16xf32>
    %c2_21 = arith.constant 2 : index
    %c16_22 = arith.constant 16 : index
    %27 = vector.load %arg5[%c2_21, %c16_22] : memref<3x192xf32, #tpu.memory_space<vmem>>, vector<1x16xf32>
    %28 = vector.shape_cast %27 : vector<1x16xf32> to vector<1x16xf32>
    %29 = vector.broadcast %28 : vector<1x16xf32> to vector<8x16xf32>
    %cst_23 = arith.constant 0.000000e+00 : f32
    %30 = vector.broadcast %cst_23 : f32 to vector<8x32xf32>
    %c0_i32 = arith.constant 0 : i32
    %c6_i32 = arith.constant 6 : i32
    %31 = arith.subi %c6_i32, %c0_i32 : i32
    %32 = tpu.concatenate %30, %30 in 1 : vector<8x32xf32>, vector<8x32xf32> -> vector<8x64xf32>
    %33 = arith.truncf %32 : vector<8x64xf32> to vector<8x64xbf16>
    %cst_24 = arith.constant dense<0.000000e+00> : vector<8x192xf32>
    %34 = tpu.matmul %33, %1, %cst_24 {dimension_numbers = #tpu.dot_dimension_numbers<[1], [0], [0], [1], [0, 0, 1, 1], [], []>} : vector<8x64xbf16>, vector<64x192xbf16>, vector<8x192xf32> -> vector<8x192xf32>
    %35 = arith.index_cast %c0_i32 : i32 to index
    %c0_25 = arith.constant 0 : index
    %c0_26 = arith.constant 0 : index
    %36 = vector.load %arg7[%35, %c0_25, %c0_26] : memref<7x8x192xf32, #tpu.memory_space<vmem>>, vector<1x8x192xf32>
    %37 = vector.shape_cast %36 : vector<1x8x192xf32> to vector<8x192xf32>
    %38 = arith.index_cast %31 : i32 to index
    %c0_27 = arith.constant 0 : index
    %c0_28 = arith.constant 0 : index
    %39 = vector.load %arg7[%38, %c0_27, %c0_28] : memref<7x8x192xf32, #tpu.memory_space<vmem>>, vector<1x8x192xf32>
    %40 = vector.shape_cast %39 : vector<1x8x192xf32> to vector<8x192xf32>
    %41 = vector.extract_strided_slice %37 {offsets = [0, 0], sizes = [8, 96], strides = [1, 1]} : vector<8x192xf32> to vector<8x96xf32>
    %42 = vector.extract_strided_slice %34 {offsets = [0, 0], sizes = [8, 96], strides = [1, 1]} : vector<8x192xf32> to vector<8x96xf32>
    %43 = vector.extract_strided_slice %41 {offsets = [0, 0], sizes = [8, 64], strides = [1, 1]} : vector<8x96xf32> to vector<8x64xf32>
    %44 = vector.extract_strided_slice %42 {offsets = [0, 0], sizes = [8, 64], strides = [1, 1]} : vector<8x96xf32> to vector<8x64xf32>
    %45 = arith.addf %43, %44 : vector<8x64xf32>
    %cst_29 = arith.constant 5.000000e-01 : f32
    %46 = vector.broadcast %cst_29 : f32 to vector<8x64xf32>
    %47 = arith.mulf %46, %45 : vector<8x64xf32>
    %48 = math.tanh %47 : vector<8x64xf32>
    %cst_30 = arith.constant 1.000000e+00 : f32
    %49 = vector.broadcast %cst_30 : f32 to vector<8x64xf32>
    %50 = arith.addf %48, %49 : vector<8x64xf32>
    %cst_31 = arith.constant 5.000000e-01 : f32
    %51 = vector.broadcast %cst_31 : f32 to vector<8x64xf32>
    %52 = arith.mulf %51, %50 : vector<8x64xf32>
    %53 = vector.extract_strided_slice %52 {offsets = [0, 0], sizes = [8, 32], strides = [1, 1]} : vector<8x64xf32> to vector<8x32xf32>
    %54 = vector.extract_strided_slice %52 {offsets = [0, 32], sizes = [8, 32], strides = [1, 1]} : vector<8x64xf32> to vector<8x32xf32>
    %55 = vector.extract_strided_slice %41 {offsets = [0, 64], sizes = [8, 32], strides = [1, 1]} : vector<8x96xf32> to vector<8x32xf32>
    %56 = vector.extract_strided_slice %42 {offsets = [0, 64], sizes = [8, 32], strides = [1, 1]} : vector<8x96xf32> to vector<8x32xf32>
    %57 = arith.addf %56, %17 : vector<8x32xf32>
    %58 = arith.mulf %53, %57 : vector<8x32xf32>
    %59 = arith.addf %55, %58 : vector<8x32xf32>
    %60 = math.tanh %59 : vector<8x32xf32>
    %cst_32 = arith.constant 1.000000e+00 : f32
    %61 = vector.broadcast %cst_32 : f32 to vector<8x32xf32>
    %62 = arith.subf %61, %54 : vector<8x32xf32>
    %63 = arith.mulf %62, %60 : vector<8x32xf32>
    %64 = arith.mulf %54, %30 : vector<8x32xf32>
    %65 = arith.addf %63, %64 : vector<8x32xf32>
    %66 = vector.extract_strided_slice %40 {offsets = [0, 96], sizes = [8, 96], strides = [1, 1]} : vector<8x192xf32> to vector<8x96xf32>
    %67 = vector.extract_strided_slice %34 {offsets = [0, 96], sizes = [8, 96], strides = [1, 1]} : vector<8x192xf32> to vector<8x96xf32>
    %68 = vector.extract_strided_slice %66 {offsets = [0, 0], sizes = [8, 64], strides = [1, 1]} : vector<8x96xf32> to vector<8x64xf32>
    %69 = vector.extract_strided_slice %67 {offsets = [0, 0], sizes = [8, 64], strides = [1, 1]} : vector<8x96xf32> to vector<8x64xf32>
    %70 = arith.addf %68, %69 : vector<8x64xf32>
    %cst_33 = arith.constant 5.000000e-01 : f32
    %71 = vector.broadcast %cst_33 : f32 to vector<8x64xf32>
    %72 = arith.mulf %71, %70 : vector<8x64xf32>
    %73 = math.tanh %72 : vector<8x64xf32>
    %cst_34 = arith.constant 1.000000e+00 : f32
    %74 = vector.broadcast %cst_34 : f32 to vector<8x64xf32>
    %75 = arith.addf %73, %74 : vector<8x64xf32>
    %cst_35 = arith.constant 5.000000e-01 : f32
    %76 = vector.broadcast %cst_35 : f32 to vector<8x64xf32>
    %77 = arith.mulf %76, %75 : vector<8x64xf32>
    %78 = vector.extract_strided_slice %77 {offsets = [0, 0], sizes = [8, 32], strides = [1, 1]} : vector<8x64xf32> to vector<8x32xf32>
    %79 = vector.extract_strided_slice %77 {offsets = [0, 32], sizes = [8, 32], strides = [1, 1]} : vector<8x64xf32> to vector<8x32xf32>
    %80 = vector.extract_strided_slice %66 {offsets = [0, 64], sizes = [8, 32], strides = [1, 1]} : vector<8x96xf32> to vector<8x32xf32>
    %81 = vector.extract_strided_slice %67 {offsets = [0, 64], sizes = [8, 32], strides = [1, 1]} : vector<8x96xf32> to vector<8x32xf32>
    %82 = arith.addf %81, %20 : vector<8x32xf32>
    %83 = arith.mulf %78, %82 : vector<8x32xf32>
    %84 = arith.addf %80, %83 : vector<8x32xf32>
    %85 = math.tanh %84 : vector<8x32xf32>
    %cst_36 = arith.constant 1.000000e+00 : f32
    %86 = vector.broadcast %cst_36 : f32 to vector<8x32xf32>
    %87 = arith.subf %86, %79 : vector<8x32xf32>
    %88 = arith.mulf %87, %85 : vector<8x32xf32>
    %89 = arith.mulf %79, %30 : vector<8x32xf32>
    %90 = arith.addf %88, %89 : vector<8x32xf32>
    %91 = arith.index_cast %c0_i32 : i32 to index
    %c0_37 = arith.constant 0 : index
    %c0_38 = arith.constant 0 : index
    %92 = vector.load %arg8[%91, %c0_37, %c0_38] : memref<7x8x32xf32, #tpu.memory_space<vmem>>, vector<1x8x32xf32>
    %93 = vector.shape_cast %92 : vector<1x8x32xf32> to vector<8x32xf32>
    %94 = vector.shape_cast %65 : vector<8x32xf32> to vector<1x8x32xf32>
    tpu.vector_store %arg8[%91, %c0_37, %c0_38], %94 {strides = array<i32>} : memref<7x8x32xf32, #tpu.memory_space<vmem>>, vector<1x8x32xf32>,
    %95 = arith.index_cast %31 : i32 to index
    %c0_39 = arith.constant 0 : index
    %c0_40 = arith.constant 0 : index
    %96 = vector.load %arg9[%95, %c0_39, %c0_40] : memref<7x8x32xf32, #tpu.memory_space<vmem>>, vector<1x8x32xf32>
    %97 = vector.shape_cast %96 : vector<1x8x32xf32> to vector<8x32xf32>
    %98 = vector.shape_cast %90 : vector<8x32xf32> to vector<1x8x32xf32>
    tpu.vector_store %arg9[%95, %c0_39, %c0_40], %98 {strides = array<i32>} : memref<7x8x32xf32, #tpu.memory_space<vmem>>, vector<1x8x32xf32>,
    %c1_i32 = arith.constant 1 : i32
    %c6_i32_41 = arith.constant 6 : i32
    %99 = arith.subi %c6_i32_41, %c1_i32 : i32
    %100 = tpu.concatenate %65, %90 in 1 : vector<8x32xf32>, vector<8x32xf32> -> vector<8x64xf32>
    %101 = arith.truncf %100 : vector<8x64xf32> to vector<8x64xbf16>
    %cst_42 = arith.constant dense<0.000000e+00> : vector<8x192xf32>
    %102 = tpu.matmul %101, %1, %cst_42 {dimension_numbers = #tpu.dot_dimension_numbers<[1], [0], [0], [1], [0, 0, 1, 1], [], []>} : vector<8x64xbf16>, vector<64x192xbf16>, vector<8x192xf32> -> vector<8x192xf32>
    %103 = arith.index_cast %c1_i32 : i32 to index
    %c0_43 = arith.constant 0 : index
    %c0_44 = arith.constant 0 : index
    %104 = vector.load %arg7[%103, %c0_43, %c0_44] : memref<7x8x192xf32, #tpu.memory_space<vmem>>, vector<1x8x192xf32>
    %105 = vector.shape_cast %104 : vector<1x8x192xf32> to vector<8x192xf32>
    %106 = arith.index_cast %99 : i32 to index
    %c0_45 = arith.constant 0 : index
    %c0_46 = arith.constant 0 : index
    %107 = vector.load %arg7[%106, %c0_45, %c0_46] : memref<7x8x192xf32, #tpu.memory_space<vmem>>, vector<1x8x192xf32>
    %108 = vector.shape_cast %107 : vector<1x8x192xf32> to vector<8x192xf32>
    %109 = vector.extract_strided_slice %105 {offsets = [0, 0], sizes = [8, 96], strides = [1, 1]} : vector<8x192xf32> to vector<8x96xf32>
    %110 = vector.extract_strided_slice %102 {offsets = [0, 0], sizes = [8, 96], strides = [1, 1]} : vector<8x192xf32> to vector<8x96xf32>
    %111 = vector.extract_strided_slice %109 {offsets = [0, 0], sizes = [8, 64], strides = [1, 1]} : vector<8x96xf32> to vector<8x64xf32>
    %112 = vector.extract_strided_slice %110 {offsets = [0, 0], sizes = [8, 64], strides = [1, 1]} : vector<8x96xf32> to vector<8x64xf32>
    %113 = arith.addf %111, %112 : vector<8x64xf32>
    %cst_47 = arith.constant 5.000000e-01 : f32
    %114 = vector.broadcast %cst_47 : f32 to vector<8x64xf32>
    %115 = arith.mulf %114, %113 : vector<8x64xf32>
    %116 = math.tanh %115 : vector<8x64xf32>
    %cst_48 = arith.constant 1.000000e+00 : f32
    %117 = vector.broadcast %cst_48 : f32 to vector<8x64xf32>
    %118 = arith.addf %116, %117 : vector<8x64xf32>
    %cst_49 = arith.constant 5.000000e-01 : f32
    %119 = vector.broadcast %cst_49 : f32 to vector<8x64xf32>
    %120 = arith.mulf %119, %118 : vector<8x64xf32>
    %121 = vector.extract_strided_slice %120 {offsets = [0, 0], sizes = [8, 32], strides = [1, 1]} : vector<8x64xf32> to vector<8x32xf32>
    %122 = vector.extract_strided_slice %120 {offsets = [0, 32], sizes = [8, 32], strides = [1, 1]} : vector<8x64xf32> to vector<8x32xf32>
    %123 = vector.extract_strided_slice %109 {offsets = [0, 64], sizes = [8, 32], strides = [1, 1]} : vector<8x96xf32> to vector<8x32xf32>
    %124 = vector.extract_strided_slice %110 {offsets = [0, 64], sizes = [8, 32], strides = [1, 1]} : vector<8x96xf32> to vector<8x32xf32>
    %125 = arith.addf %124, %17 : vector<8x32xf32>
    %126 = arith.mulf %121, %125 : vector<8x32xf32>
    %127 = arith.addf %123, %126 : vector<8x32xf32>
    %128 = math.tanh %127 : vector<8x32xf32>
    %cst_50 = arith.constant 1.000000e+00 : f32
    %129 = vector.broadcast %cst_50 : f32 to vector<8x32xf32>
    %130 = arith.subf %129, %122 : vector<8x32xf32>
    %131 = arith.mulf %130, %128 : vector<8x32xf32>
    %132 = arith.mulf %122, %65 : vector<8x32xf32>
    %133 = arith.addf %131, %132 : vector<8x32xf32>
    %134 = vector.extract_strided_slice %108 {offsets = [0, 96], sizes = [8, 96], strides = [1, 1]} : vector<8x192xf32> to vector<8x96xf32>
    %135 = vector.extract_strided_slice %102 {offsets = [0, 96], sizes = [8, 96], strides = [1, 1]} : vector<8x192xf32> to vector<8x96xf32>
    %136 = vector.extract_strided_slice %134 {offsets = [0, 0], sizes = [8, 64], strides = [1, 1]} : vector<8x96xf32> to vector<8x64xf32>
    %137 = vector.extract_strided_slice %135 {offsets = [0, 0], sizes = [8, 64], strides = [1, 1]} : vector<8x96xf32> to vector<8x64xf32>
    %138 = arith.addf %136, %137 : vector<8x64xf32>
    %cst_51 = arith.constant 5.000000e-01 : f32
    %139 = vector.broadcast %cst_51 : f32 to vector<8x64xf32>
    %140 = arith.mulf %139, %138 : vector<8x64xf32>
    %141 = math.tanh %140 : vector<8x64xf32>
    %cst_52 = arith.constant 1.000000e+00 : f32
    %142 = vector.broadcast %cst_52 : f32 to vector<8x64xf32>
    %143 = arith.addf %141, %142 : vector<8x64xf32>
    %cst_53 = arith.constant 5.000000e-01 : f32
    %144 = vector.broadcast %cst_53 : f32 to vector<8x64xf32>
    %145 = arith.mulf %144, %143 : vector<8x64xf32>
    %146 = vector.extract_strided_slice %145 {offsets = [0, 0], sizes = [8, 32], strides = [1, 1]} : vector<8x64xf32> to vector<8x32xf32>
    %147 = vector.extract_strided_slice %145 {offsets = [0, 32], sizes = [8, 32], strides = [1, 1]} : vector<8x64xf32> to vector<8x32xf32>
    %148 = vector.extract_strided_slice %134 {offsets = [0, 64], sizes = [8, 32], strides = [1, 1]} : vector<8x96xf32> to vector<8x32xf32>
    %149 = vector.extract_strided_slice %135 {offsets = [0, 64], sizes = [8, 32], strides = [1, 1]} : vector<8x96xf32> to vector<8x32xf32>
    %150 = arith.addf %149, %20 : vector<8x32xf32>
    %151 = arith.mulf %146, %150 : vector<8x32xf32>
    %152 = arith.addf %148, %151 : vector<8x32xf32>
    %153 = math.tanh %152 : vector<8x32xf32>
    %cst_54 = arith.constant 1.000000e+00 : f32
    %154 = vector.broadcast %cst_54 : f32 to vector<8x32xf32>
    %155 = arith.subf %154, %147 : vector<8x32xf32>
    %156 = arith.mulf %155, %153 : vector<8x32xf32>
    %157 = arith.mulf %147, %90 : vector<8x32xf32>
    %158 = arith.addf %156, %157 : vector<8x32xf32>
    %159 = arith.index_cast %c1_i32 : i32 to index
    %c0_55 = arith.constant 0 : index
    %c0_56 = arith.constant 0 : index
    %160 = vector.load %arg8[%159, %c0_55, %c0_56] : memref<7x8x32xf32, #tpu.memory_space<vmem>>, vector<1x8x32xf32>
    %161 = vector.shape_cast %160 : vector<1x8x32xf32> to vector<8x32xf32>
    %162 = vector.shape_cast %133 : vector<8x32xf32> to vector<1x8x32xf32>
    tpu.vector_store %arg8[%159, %c0_55, %c0_56], %162 {strides = array<i32>} : memref<7x8x32xf32, #tpu.memory_space<vmem>>, vector<1x8x32xf32>,
    %163 = arith.index_cast %99 : i32 to index
    %c0_57 = arith.constant 0 : index
    %c0_58 = arith.constant 0 : index
    %164 = vector.load %arg9[%163, %c0_57, %c0_58] : memref<7x8x32xf32, #tpu.memory_space<vmem>>, vector<1x8x32xf32>
    %165 = vector.shape_cast %164 : vector<1x8x32xf32> to vector<8x32xf32>
    %166 = vector.shape_cast %158 : vector<8x32xf32> to vector<1x8x32xf32>
    tpu.vector_store %arg9[%163, %c0_57, %c0_58], %166 {strides = array<i32>} : memref<7x8x32xf32, #tpu.memory_space<vmem>>, vector<1x8x32xf32>,
    %c2_i32 = arith.constant 2 : i32
    %c6_i32_59 = arith.constant 6 : i32
    %167 = arith.subi %c6_i32_59, %c2_i32 : i32
    %168 = tpu.concatenate %133, %158 in 1 : vector<8x32xf32>, vector<8x32xf32> -> vector<8x64xf32>
    %169 = arith.truncf %168 : vector<8x64xf32> to vector<8x64xbf16>
    %cst_60 = arith.constant dense<0.000000e+00> : vector<8x192xf32>
    %170 = tpu.matmul %169, %1, %cst_60 {dimension_numbers = #tpu.dot_dimension_numbers<[1], [0], [0], [1], [0, 0, 1, 1], [], []>} : vector<8x64xbf16>, vector<64x192xbf16>, vector<8x192xf32> -> vector<8x192xf32>
    %171 = arith.index_cast %c2_i32 : i32 to index
    %c0_61 = arith.constant 0 : index
    %c0_62 = arith.constant 0 : index
    %172 = vector.load %arg7[%171, %c0_61, %c0_62] : memref<7x8x192xf32, #tpu.memory_space<vmem>>, vector<1x8x192xf32>
    %173 = vector.shape_cast %172 : vector<1x8x192xf32> to vector<8x192xf32>
    %174 = arith.index_cast %167 : i32 to index
    %c0_63 = arith.constant 0 : index
    %c0_64 = arith.constant 0 : index
    %175 = vector.load %arg7[%174, %c0_63, %c0_64] : memref<7x8x192xf32, #tpu.memory_space<vmem>>, vector<1x8x192xf32>
    %176 = vector.shape_cast %175 : vector<1x8x192xf32> to vector<8x192xf32>
    %177 = vector.extract_strided_slice %173 {offsets = [0, 0], sizes = [8, 96], strides = [1, 1]} : vector<8x192xf32> to vector<8x96xf32>
    %178 = vector.extract_strided_slice %170 {offsets = [0, 0], sizes = [8, 96], strides = [1, 1]} : vector<8x192xf32> to vector<8x96xf32>
    %179 = vector.extract_strided_slice %177 {offsets = [0, 0], sizes = [8, 64], strides = [1, 1]} : vector<8x96xf32> to vector<8x64xf32>
    %180 = vector.extract_strided_slice %178 {offsets = [0, 0], sizes = [8, 64], strides = [1, 1]} : vector<8x96xf32> to vector<8x64xf32>
    %181 = arith.addf %179, %180 : vector<8x64xf32>
    %cst_65 = arith.constant 5.000000e-01 : f32
    %182 = vector.broadcast %cst_65 : f32 to vector<8x64xf32>
    %183 = arith.mulf %182, %181 : vector<8x64xf32>
    %184 = math.tanh %183 : vector<8x64xf32>
    %cst_66 = arith.constant 1.000000e+00 : f32
    %185 = vector.broadcast %cst_66 : f32 to vector<8x64xf32>
    %186 = arith.addf %184, %185 : vector<8x64xf32>
    %cst_67 = arith.constant 5.000000e-01 : f32
    %187 = vector.broadcast %cst_67 : f32 to vector<8x64xf32>
    %188 = arith.mulf %187, %186 : vector<8x64xf32>
    %189 = vector.extract_strided_slice %188 {offsets = [0, 0], sizes = [8, 32], strides = [1, 1]} : vector<8x64xf32> to vector<8x32xf32>
    %190 = vector.extract_strided_slice %188 {offsets = [0, 32], sizes = [8, 32], strides = [1, 1]} : vector<8x64xf32> to vector<8x32xf32>
    %191 = vector.extract_strided_slice %177 {offsets = [0, 64], sizes = [8, 32], strides = [1, 1]} : vector<8x96xf32> to vector<8x32xf32>
    %192 = vector.extract_strided_slice %178 {offsets = [0, 64], sizes = [8, 32], strides = [1, 1]} : vector<8x96xf32> to vector<8x32xf32>
    %193 = arith.addf %192, %17 : vector<8x32xf32>
    %194 = arith.mulf %189, %193 : vector<8x32xf32>
    %195 = arith.addf %191, %194 : vector<8x32xf32>
    %196 = math.tanh %195 : vector<8x32xf32>
    %cst_68 = arith.constant 1.000000e+00 : f32
    %197 = vector.broadcast %cst_68 : f32 to vector<8x32xf32>
    %198 = arith.subf %197, %190 : vector<8x32xf32>
    %199 = arith.mulf %198, %196 : vector<8x32xf32>
    %200 = arith.mulf %190, %133 : vector<8x32xf32>
    %201 = arith.addf %199, %200 : vector<8x32xf32>
    %202 = vector.extract_strided_slice %176 {offsets = [0, 96], sizes = [8, 96], strides = [1, 1]} : vector<8x192xf32> to vector<8x96xf32>
    %203 = vector.extract_strided_slice %170 {offsets = [0, 96], sizes = [8, 96], strides = [1, 1]} : vector<8x192xf32> to vector<8x96xf32>
    %204 = vector.extract_strided_slice %202 {offsets = [0, 0], sizes = [8, 64], strides = [1, 1]} : vector<8x96xf32> to vector<8x64xf32>
    %205 = vector.extract_strided_slice %203 {offsets = [0, 0], sizes = [8, 64], strides = [1, 1]} : vector<8x96xf32> to vector<8x64xf32>
    %206 = arith.addf %204, %205 : vector<8x64xf32>
    %cst_69 = arith.constant 5.000000e-01 : f32
    %207 = vector.broadcast %cst_69 : f32 to vector<8x64xf32>
    %208 = arith.mulf %207, %206 : vector<8x64xf32>
    %209 = math.tanh %208 : vector<8x64xf32>
    %cst_70 = arith.constant 1.000000e+00 : f32
    %210 = vector.broadcast %cst_70 : f32 to vector<8x64xf32>
    %211 = arith.addf %209, %210 : vector<8x64xf32>
    %cst_71 = arith.constant 5.000000e-01 : f32
    %212 = vector.broadcast %cst_71 : f32 to vector<8x64xf32>
    %213 = arith.mulf %212, %211 : vector<8x64xf32>
    %214 = vector.extract_strided_slice %213 {offsets = [0, 0], sizes = [8, 32], strides = [1, 1]} : vector<8x64xf32> to vector<8x32xf32>
    %215 = vector.extract_strided_slice %213 {offsets = [0, 32], sizes = [8, 32], strides = [1, 1]} : vector<8x64xf32> to vector<8x32xf32>
    %216 = vector.extract_strided_slice %202 {offsets = [0, 64], sizes = [8, 32], strides = [1, 1]} : vector<8x96xf32> to vector<8x32xf32>
    %217 = vector.extract_strided_slice %203 {offsets = [0, 64], sizes = [8, 32], strides = [1, 1]} : vector<8x96xf32> to vector<8x32xf32>
    %218 = arith.addf %217, %20 : vector<8x32xf32>
    %219 = arith.mulf %214, %218 : vector<8x32xf32>
    %220 = arith.addf %216, %219 : vector<8x32xf32>
    %221 = math.tanh %220 : vector<8x32xf32>
    %cst_72 = arith.constant 1.000000e+00 : f32
    %222 = vector.broadcast %cst_72 : f32 to vector<8x32xf32>
    %223 = arith.subf %222, %215 : vector<8x32xf32>
    %224 = arith.mulf %223, %221 : vector<8x32xf32>
    %225 = arith.mulf %215, %158 : vector<8x32xf32>
    %226 = arith.addf %224, %225 : vector<8x32xf32>
    %227 = arith.index_cast %c2_i32 : i32 to index
    %c0_73 = arith.constant 0 : index
    %c0_74 = arith.constant 0 : index
    %228 = vector.load %arg8[%227, %c0_73, %c0_74] : memref<7x8x32xf32, #tpu.memory_space<vmem>>, vector<1x8x32xf32>
    %229 = vector.shape_cast %228 : vector<1x8x32xf32> to vector<8x32xf32>
    %230 = vector.shape_cast %201 : vector<8x32xf32> to vector<1x8x32xf32>
    tpu.vector_store %arg8[%227, %c0_73, %c0_74], %230 {strides = array<i32>} : memref<7x8x32xf32, #tpu.memory_space<vmem>>, vector<1x8x32xf32>,
    %231 = arith.index_cast %167 : i32 to index
    %c0_75 = arith.constant 0 : index
    %c0_76 = arith.constant 0 : index
    %232 = vector.load %arg9[%231, %c0_75, %c0_76] : memref<7x8x32xf32, #tpu.memory_space<vmem>>, vector<1x8x32xf32>
    %233 = vector.shape_cast %232 : vector<1x8x32xf32> to vector<8x32xf32>
    %234 = vector.shape_cast %226 : vector<8x32xf32> to vector<1x8x32xf32>
    tpu.vector_store %arg9[%231, %c0_75, %c0_76], %234 {strides = array<i32>} : memref<7x8x32xf32, #tpu.memory_space<vmem>>, vector<1x8x32xf32>,
    %c3_i32 = arith.constant 3 : i32
    %c6_i32_77 = arith.constant 6 : i32
    %235 = arith.subi %c6_i32_77, %c3_i32 : i32
    %236 = tpu.concatenate %201, %226 in 1 : vector<8x32xf32>, vector<8x32xf32> -> vector<8x64xf32>
    %237 = arith.truncf %236 : vector<8x64xf32> to vector<8x64xbf16>
    %cst_78 = arith.constant dense<0.000000e+00> : vector<8x192xf32>
    %238 = tpu.matmul %237, %1, %cst_78 {dimension_numbers = #tpu.dot_dimension_numbers<[1], [0], [0], [1], [0, 0, 1, 1], [], []>} : vector<8x64xbf16>, vector<64x192xbf16>, vector<8x192xf32> -> vector<8x192xf32>
    %239 = arith.index_cast %c3_i32 : i32 to index
    %c0_79 = arith.constant 0 : index
    %c0_80 = arith.constant 0 : index
    %240 = vector.load %arg7[%239, %c0_79, %c0_80] : memref<7x8x192xf32, #tpu.memory_space<vmem>>, vector<1x8x192xf32>
    %241 = vector.shape_cast %240 : vector<1x8x192xf32> to vector<8x192xf32>
    %242 = arith.index_cast %235 : i32 to index
    %c0_81 = arith.constant 0 : index
    %c0_82 = arith.constant 0 : index
    %243 = vector.load %arg7[%242, %c0_81, %c0_82] : memref<7x8x192xf32, #tpu.memory_space<vmem>>, vector<1x8x192xf32>
    %244 = vector.shape_cast %243 : vector<1x8x192xf32> to vector<8x192xf32>
    %245 = vector.extract_strided_slice %241 {offsets = [0, 0], sizes = [8, 96], strides = [1, 1]} : vector<8x192xf32> to vector<8x96xf32>
    %246 = vector.extract_strided_slice %238 {offsets = [0, 0], sizes = [8, 96], strides = [1, 1]} : vector<8x192xf32> to vector<8x96xf32>
    %247 = vector.extract_strided_slice %245 {offsets = [0, 0], sizes = [8, 64], strides = [1, 1]} : vector<8x96xf32> to vector<8x64xf32>
    %248 = vector.extract_strided_slice %246 {offsets = [0, 0], sizes = [8, 64], strides = [1, 1]} : vector<8x96xf32> to vector<8x64xf32>
    %249 = arith.addf %247, %248 : vector<8x64xf32>
    %cst_83 = arith.constant 5.000000e-01 : f32
    %250 = vector.broadcast %cst_83 : f32 to vector<8x64xf32>
    %251 = arith.mulf %250, %249 : vector<8x64xf32>
    %252 = math.tanh %251 : vector<8x64xf32>
    %cst_84 = arith.constant 1.000000e+00 : f32
    %253 = vector.broadcast %cst_84 : f32 to vector<8x64xf32>
    %254 = arith.addf %252, %253 : vector<8x64xf32>
    %cst_85 = arith.constant 5.000000e-01 : f32
    %255 = vector.broadcast %cst_85 : f32 to vector<8x64xf32>
    %256 = arith.mulf %255, %254 : vector<8x64xf32>
    %257 = vector.extract_strided_slice %256 {offsets = [0, 0], sizes = [8, 32], strides = [1, 1]} : vector<8x64xf32> to vector<8x32xf32>
    %258 = vector.extract_strided_slice %256 {offsets = [0, 32], sizes = [8, 32], strides = [1, 1]} : vector<8x64xf32> to vector<8x32xf32>
    %259 = vector.extract_strided_slice %245 {offsets = [0, 64], sizes = [8, 32], strides = [1, 1]} : vector<8x96xf32> to vector<8x32xf32>
    %260 = vector.extract_strided_slice %246 {offsets = [0, 64], sizes = [8, 32], strides = [1, 1]} : vector<8x96xf32> to vector<8x32xf32>
    %261 = arith.addf %260, %17 : vector<8x32xf32>
    %262 = arith.mulf %257, %261 : vector<8x32xf32>
    %263 = arith.addf %259, %262 : vector<8x32xf32>
    %264 = math.tanh %263 : vector<8x32xf32>
    %cst_86 = arith.constant 1.000000e+00 : f32
    %265 = vector.broadcast %cst_86 : f32 to vector<8x32xf32>
    %266 = arith.subf %265, %258 : vector<8x32xf32>
    %267 = arith.mulf %266, %264 : vector<8x32xf32>
    %268 = arith.mulf %258, %201 : vector<8x32xf32>
    %269 = arith.addf %267, %268 : vector<8x32xf32>
    %270 = vector.extract_strided_slice %244 {offsets = [0, 96], sizes = [8, 96], strides = [1, 1]} : vector<8x192xf32> to vector<8x96xf32>
    %271 = vector.extract_strided_slice %238 {offsets = [0, 96], sizes = [8, 96], strides = [1, 1]} : vector<8x192xf32> to vector<8x96xf32>
    %272 = vector.extract_strided_slice %270 {offsets = [0, 0], sizes = [8, 64], strides = [1, 1]} : vector<8x96xf32> to vector<8x64xf32>
    %273 = vector.extract_strided_slice %271 {offsets = [0, 0], sizes = [8, 64], strides = [1, 1]} : vector<8x96xf32> to vector<8x64xf32>
    %274 = arith.addf %272, %273 : vector<8x64xf32>
    %cst_87 = arith.constant 5.000000e-01 : f32
    %275 = vector.broadcast %cst_87 : f32 to vector<8x64xf32>
    %276 = arith.mulf %275, %274 : vector<8x64xf32>
    %277 = math.tanh %276 : vector<8x64xf32>
    %cst_88 = arith.constant 1.000000e+00 : f32
    %278 = vector.broadcast %cst_88 : f32 to vector<8x64xf32>
    %279 = arith.addf %277, %278 : vector<8x64xf32>
    %cst_89 = arith.constant 5.000000e-01 : f32
    %280 = vector.broadcast %cst_89 : f32 to vector<8x64xf32>
    %281 = arith.mulf %280, %279 : vector<8x64xf32>
    %282 = vector.extract_strided_slice %281 {offsets = [0, 0], sizes = [8, 32], strides = [1, 1]} : vector<8x64xf32> to vector<8x32xf32>
    %283 = vector.extract_strided_slice %281 {offsets = [0, 32], sizes = [8, 32], strides = [1, 1]} : vector<8x64xf32> to vector<8x32xf32>
    %284 = vector.extract_strided_slice %270 {offsets = [0, 64], sizes = [8, 32], strides = [1, 1]} : vector<8x96xf32> to vector<8x32xf32>
    %285 = vector.extract_strided_slice %271 {offsets = [0, 64], sizes = [8, 32], strides = [1, 1]} : vector<8x96xf32> to vector<8x32xf32>
    %286 = arith.addf %285, %20 : vector<8x32xf32>
    %287 = arith.mulf %282, %286 : vector<8x32xf32>
    %288 = arith.addf %284, %287 : vector<8x32xf32>
    %289 = math.tanh %288 : vector<8x32xf32>
    %cst_90 = arith.constant 1.000000e+00 : f32
    %290 = vector.broadcast %cst_90 : f32 to vector<8x32xf32>
    %291 = arith.subf %290, %283 : vector<8x32xf32>
    %292 = arith.mulf %291, %289 : vector<8x32xf32>
    %293 = arith.mulf %283, %226 : vector<8x32xf32>
    %294 = arith.addf %292, %293 : vector<8x32xf32>
    %295 = arith.index_cast %c3_i32 : i32 to index
    %c0_91 = arith.constant 0 : index
    %c0_92 = arith.constant 0 : index
    %296 = vector.load %arg8[%295, %c0_91, %c0_92] : memref<7x8x32xf32, #tpu.memory_space<vmem>>, vector<1x8x32xf32>
    %297 = vector.shape_cast %296 : vector<1x8x32xf32> to vector<8x32xf32>
    %298 = vector.shape_cast %269 : vector<8x32xf32> to vector<1x8x32xf32>
    tpu.vector_store %arg8[%295, %c0_91, %c0_92], %298 {strides = array<i32>} : memref<7x8x32xf32, #tpu.memory_space<vmem>>, vector<1x8x32xf32>,
    %299 = arith.index_cast %235 : i32 to index
    %c0_93 = arith.constant 0 : index
    %c0_94 = arith.constant 0 : index
    %300 = vector.load %arg9[%299, %c0_93, %c0_94] : memref<7x8x32xf32, #tpu.memory_space<vmem>>, vector<1x8x32xf32>
    %301 = vector.shape_cast %300 : vector<1x8x32xf32> to vector<8x32xf32>
    %302 = vector.shape_cast %294 : vector<8x32xf32> to vector<1x8x32xf32>
    tpu.vector_store %arg9[%299, %c0_93, %c0_94], %302 {strides = array<i32>} : memref<7x8x32xf32, #tpu.memory_space<vmem>>, vector<1x8x32xf32>,
    %c4_i32 = arith.constant 4 : i32
    %c6_i32_95 = arith.constant 6 : i32
    %303 = arith.subi %c6_i32_95, %c4_i32 : i32
    %304 = tpu.concatenate %269, %294 in 1 : vector<8x32xf32>, vector<8x32xf32> -> vector<8x64xf32>
    %305 = arith.truncf %304 : vector<8x64xf32> to vector<8x64xbf16>
    %cst_96 = arith.constant dense<0.000000e+00> : vector<8x192xf32>
    %306 = tpu.matmul %305, %1, %cst_96 {dimension_numbers = #tpu.dot_dimension_numbers<[1], [0], [0], [1], [0, 0, 1, 1], [], []>} : vector<8x64xbf16>, vector<64x192xbf16>, vector<8x192xf32> -> vector<8x192xf32>
    %307 = arith.index_cast %c4_i32 : i32 to index
    %c0_97 = arith.constant 0 : index
    %c0_98 = arith.constant 0 : index
    %308 = vector.load %arg7[%307, %c0_97, %c0_98] : memref<7x8x192xf32, #tpu.memory_space<vmem>>, vector<1x8x192xf32>
    %309 = vector.shape_cast %308 : vector<1x8x192xf32> to vector<8x192xf32>
    %310 = arith.index_cast %303 : i32 to index
    %c0_99 = arith.constant 0 : index
    %c0_100 = arith.constant 0 : index
    %311 = vector.load %arg7[%310, %c0_99, %c0_100] : memref<7x8x192xf32, #tpu.memory_space<vmem>>, vector<1x8x192xf32>
    %312 = vector.shape_cast %311 : vector<1x8x192xf32> to vector<8x192xf32>
    %313 = vector.extract_strided_slice %309 {offsets = [0, 0], sizes = [8, 96], strides = [1, 1]} : vector<8x192xf32> to vector<8x96xf32>
    %314 = vector.extract_strided_slice %306 {offsets = [0, 0], sizes = [8, 96], strides = [1, 1]} : vector<8x192xf32> to vector<8x96xf32>
    %315 = vector.extract_strided_slice %313 {offsets = [0, 0], sizes = [8, 64], strides = [1, 1]} : vector<8x96xf32> to vector<8x64xf32>
    %316 = vector.extract_strided_slice %314 {offsets = [0, 0], sizes = [8, 64], strides = [1, 1]} : vector<8x96xf32> to vector<8x64xf32>
    %317 = arith.addf %315, %316 : vector<8x64xf32>
    %cst_101 = arith.constant 5.000000e-01 : f32
    %318 = vector.broadcast %cst_101 : f32 to vector<8x64xf32>
    %319 = arith.mulf %318, %317 : vector<8x64xf32>
    %320 = math.tanh %319 : vector<8x64xf32>
    %cst_102 = arith.constant 1.000000e+00 : f32
    %321 = vector.broadcast %cst_102 : f32 to vector<8x64xf32>
    %322 = arith.addf %320, %321 : vector<8x64xf32>
    %cst_103 = arith.constant 5.000000e-01 : f32
    %323 = vector.broadcast %cst_103 : f32 to vector<8x64xf32>
    %324 = arith.mulf %323, %322 : vector<8x64xf32>
    %325 = vector.extract_strided_slice %324 {offsets = [0, 0], sizes = [8, 32], strides = [1, 1]} : vector<8x64xf32> to vector<8x32xf32>
    %326 = vector.extract_strided_slice %324 {offsets = [0, 32], sizes = [8, 32], strides = [1, 1]} : vector<8x64xf32> to vector<8x32xf32>
    %327 = vector.extract_strided_slice %313 {offsets = [0, 64], sizes = [8, 32], strides = [1, 1]} : vector<8x96xf32> to vector<8x32xf32>
    %328 = vector.extract_strided_slice %314 {offsets = [0, 64], sizes = [8, 32], strides = [1, 1]} : vector<8x96xf32> to vector<8x32xf32>
    %329 = arith.addf %328, %17 : vector<8x32xf32>
    %330 = arith.mulf %325, %329 : vector<8x32xf32>
    %331 = arith.addf %327, %330 : vector<8x32xf32>
    %332 = math.tanh %331 : vector<8x32xf32>
    %cst_104 = arith.constant 1.000000e+00 : f32
    %333 = vector.broadcast %cst_104 : f32 to vector<8x32xf32>
    %334 = arith.subf %333, %326 : vector<8x32xf32>
    %335 = arith.mulf %334, %332 : vector<8x32xf32>
    %336 = arith.mulf %326, %269 : vector<8x32xf32>
    %337 = arith.addf %335, %336 : vector<8x32xf32>
    %338 = vector.extract_strided_slice %312 {offsets = [0, 96], sizes = [8, 96], strides = [1, 1]} : vector<8x192xf32> to vector<8x96xf32>
    %339 = vector.extract_strided_slice %306 {offsets = [0, 96], sizes = [8, 96], strides = [1, 1]} : vector<8x192xf32> to vector<8x96xf32>
    %340 = vector.extract_strided_slice %338 {offsets = [0, 0], sizes = [8, 64], strides = [1, 1]} : vector<8x96xf32> to vector<8x64xf32>
    %341 = vector.extract_strided_slice %339 {offsets = [0, 0], sizes = [8, 64], strides = [1, 1]} : vector<8x96xf32> to vector<8x64xf32>
    %342 = arith.addf %340, %341 : vector<8x64xf32>
    %cst_105 = arith.constant 5.000000e-01 : f32
    %343 = vector.broadcast %cst_105 : f32 to vector<8x64xf32>
    %344 = arith.mulf %343, %342 : vector<8x64xf32>
    %345 = math.tanh %344 : vector<8x64xf32>
    %cst_106 = arith.constant 1.000000e+00 : f32
    %346 = vector.broadcast %cst_106 : f32 to vector<8x64xf32>
    %347 = arith.addf %345, %346 : vector<8x64xf32>
    %cst_107 = arith.constant 5.000000e-01 : f32
    %348 = vector.broadcast %cst_107 : f32 to vector<8x64xf32>
    %349 = arith.mulf %348, %347 : vector<8x64xf32>
    %350 = vector.extract_strided_slice %349 {offsets = [0, 0], sizes = [8, 32], strides = [1, 1]} : vector<8x64xf32> to vector<8x32xf32>
    %351 = vector.extract_strided_slice %349 {offsets = [0, 32], sizes = [8, 32], strides = [1, 1]} : vector<8x64xf32> to vector<8x32xf32>
    %352 = vector.extract_strided_slice %338 {offsets = [0, 64], sizes = [8, 32], strides = [1, 1]} : vector<8x96xf32> to vector<8x32xf32>
    %353 = vector.extract_strided_slice %339 {offsets = [0, 64], sizes = [8, 32], strides = [1, 1]} : vector<8x96xf32> to vector<8x32xf32>
    %354 = arith.addf %353, %20 : vector<8x32xf32>
    %355 = arith.mulf %350, %354 : vector<8x32xf32>
    %356 = arith.addf %352, %355 : vector<8x32xf32>
    %357 = math.tanh %356 : vector<8x32xf32>
    %cst_108 = arith.constant 1.000000e+00 : f32
    %358 = vector.broadcast %cst_108 : f32 to vector<8x32xf32>
    %359 = arith.subf %358, %351 : vector<8x32xf32>
    %360 = arith.mulf %359, %357 : vector<8x32xf32>
    %361 = arith.mulf %351, %294 : vector<8x32xf32>
    %362 = arith.addf %360, %361 : vector<8x32xf32>
    %363 = arith.index_cast %c4_i32 : i32 to index
    %c0_109 = arith.constant 0 : index
    %c0_110 = arith.constant 0 : index
    %364 = vector.load %arg8[%363, %c0_109, %c0_110] : memref<7x8x32xf32, #tpu.memory_space<vmem>>, vector<1x8x32xf32>
    %365 = vector.shape_cast %364 : vector<1x8x32xf32> to vector<8x32xf32>
    %366 = vector.shape_cast %337 : vector<8x32xf32> to vector<1x8x32xf32>
    tpu.vector_store %arg8[%363, %c0_109, %c0_110], %366 {strides = array<i32>} : memref<7x8x32xf32, #tpu.memory_space<vmem>>, vector<1x8x32xf32>,
    %367 = arith.index_cast %303 : i32 to index
    %c0_111 = arith.constant 0 : index
    %c0_112 = arith.constant 0 : index
    %368 = vector.load %arg9[%367, %c0_111, %c0_112] : memref<7x8x32xf32, #tpu.memory_space<vmem>>, vector<1x8x32xf32>
    %369 = vector.shape_cast %368 : vector<1x8x32xf32> to vector<8x32xf32>
    %370 = vector.shape_cast %362 : vector<8x32xf32> to vector<1x8x32xf32>
    tpu.vector_store %arg9[%367, %c0_111, %c0_112], %370 {strides = array<i32>} : memref<7x8x32xf32, #tpu.memory_space<vmem>>, vector<1x8x32xf32>,
    %c5_i32 = arith.constant 5 : i32
    %c6_i32_113 = arith.constant 6 : i32
    %371 = arith.subi %c6_i32_113, %c5_i32 : i32
    %372 = tpu.concatenate %337, %362 in 1 : vector<8x32xf32>, vector<8x32xf32> -> vector<8x64xf32>
    %373 = arith.truncf %372 : vector<8x64xf32> to vector<8x64xbf16>
    %cst_114 = arith.constant dense<0.000000e+00> : vector<8x192xf32>
    %374 = tpu.matmul %373, %1, %cst_114 {dimension_numbers = #tpu.dot_dimension_numbers<[1], [0], [0], [1], [0, 0, 1, 1], [], []>} : vector<8x64xbf16>, vector<64x192xbf16>, vector<8x192xf32> -> vector<8x192xf32>
    %375 = arith.index_cast %c5_i32 : i32 to index
    %c0_115 = arith.constant 0 : index
    %c0_116 = arith.constant 0 : index
    %376 = vector.load %arg7[%375, %c0_115, %c0_116] : memref<7x8x192xf32, #tpu.memory_space<vmem>>, vector<1x8x192xf32>
    %377 = vector.shape_cast %376 : vector<1x8x192xf32> to vector<8x192xf32>
    %378 = arith.index_cast %371 : i32 to index
    %c0_117 = arith.constant 0 : index
    %c0_118 = arith.constant 0 : index
    %379 = vector.load %arg7[%378, %c0_117, %c0_118] : memref<7x8x192xf32, #tpu.memory_space<vmem>>, vector<1x8x192xf32>
    %380 = vector.shape_cast %379 : vector<1x8x192xf32> to vector<8x192xf32>
    %381 = vector.extract_strided_slice %377 {offsets = [0, 0], sizes = [8, 96], strides = [1, 1]} : vector<8x192xf32> to vector<8x96xf32>
    %382 = vector.extract_strided_slice %374 {offsets = [0, 0], sizes = [8, 96], strides = [1, 1]} : vector<8x192xf32> to vector<8x96xf32>
    %383 = vector.extract_strided_slice %381 {offsets = [0, 0], sizes = [8, 64], strides = [1, 1]} : vector<8x96xf32> to vector<8x64xf32>
    %384 = vector.extract_strided_slice %382 {offsets = [0, 0], sizes = [8, 64], strides = [1, 1]} : vector<8x96xf32> to vector<8x64xf32>
    %385 = arith.addf %383, %384 : vector<8x64xf32>
    %cst_119 = arith.constant 5.000000e-01 : f32
    %386 = vector.broadcast %cst_119 : f32 to vector<8x64xf32>
    %387 = arith.mulf %386, %385 : vector<8x64xf32>
    %388 = math.tanh %387 : vector<8x64xf32>
    %cst_120 = arith.constant 1.000000e+00 : f32
    %389 = vector.broadcast %cst_120 : f32 to vector<8x64xf32>
    %390 = arith.addf %388, %389 : vector<8x64xf32>
    %cst_121 = arith.constant 5.000000e-01 : f32
    %391 = vector.broadcast %cst_121 : f32 to vector<8x64xf32>
    %392 = arith.mulf %391, %390 : vector<8x64xf32>
    %393 = vector.extract_strided_slice %392 {offsets = [0, 0], sizes = [8, 32], strides = [1, 1]} : vector<8x64xf32> to vector<8x32xf32>
    %394 = vector.extract_strided_slice %392 {offsets = [0, 32], sizes = [8, 32], strides = [1, 1]} : vector<8x64xf32> to vector<8x32xf32>
    %395 = vector.extract_strided_slice %381 {offsets = [0, 64], sizes = [8, 32], strides = [1, 1]} : vector<8x96xf32> to vector<8x32xf32>
    %396 = vector.extract_strided_slice %382 {offsets = [0, 64], sizes = [8, 32], strides = [1, 1]} : vector<8x96xf32> to vector<8x32xf32>
    %397 = arith.addf %396, %17 : vector<8x32xf32>
    %398 = arith.mulf %393, %397 : vector<8x32xf32>
    %399 = arith.addf %395, %398 : vector<8x32xf32>
    %400 = math.tanh %399 : vector<8x32xf32>
    %cst_122 = arith.constant 1.000000e+00 : f32
    %401 = vector.broadcast %cst_122 : f32 to vector<8x32xf32>
    %402 = arith.subf %401, %394 : vector<8x32xf32>
    %403 = arith.mulf %402, %400 : vector<8x32xf32>
    %404 = arith.mulf %394, %337 : vector<8x32xf32>
    %405 = arith.addf %403, %404 : vector<8x32xf32>
    %406 = vector.extract_strided_slice %380 {offsets = [0, 96], sizes = [8, 96], strides = [1, 1]} : vector<8x192xf32> to vector<8x96xf32>
    %407 = vector.extract_strided_slice %374 {offsets = [0, 96], sizes = [8, 96], strides = [1, 1]} : vector<8x192xf32> to vector<8x96xf32>
    %408 = vector.extract_strided_slice %406 {offsets = [0, 0], sizes = [8, 64], strides = [1, 1]} : vector<8x96xf32> to vector<8x64xf32>
    %409 = vector.extract_strided_slice %407 {offsets = [0, 0], sizes = [8, 64], strides = [1, 1]} : vector<8x96xf32> to vector<8x64xf32>
    %410 = arith.addf %408, %409 : vector<8x64xf32>
    %cst_123 = arith.constant 5.000000e-01 : f32
    %411 = vector.broadcast %cst_123 : f32 to vector<8x64xf32>
    %412 = arith.mulf %411, %410 : vector<8x64xf32>
    %413 = math.tanh %412 : vector<8x64xf32>
    %cst_124 = arith.constant 1.000000e+00 : f32
    %414 = vector.broadcast %cst_124 : f32 to vector<8x64xf32>
    %415 = arith.addf %413, %414 : vector<8x64xf32>
    %cst_125 = arith.constant 5.000000e-01 : f32
    %416 = vector.broadcast %cst_125 : f32 to vector<8x64xf32>
    %417 = arith.mulf %416, %415 : vector<8x64xf32>
    %418 = vector.extract_strided_slice %417 {offsets = [0, 0], sizes = [8, 32], strides = [1, 1]} : vector<8x64xf32> to vector<8x32xf32>
    %419 = vector.extract_strided_slice %417 {offsets = [0, 32], sizes = [8, 32], strides = [1, 1]} : vector<8x64xf32> to vector<8x32xf32>
    %420 = vector.extract_strided_slice %406 {offsets = [0, 64], sizes = [8, 32], strides = [1, 1]} : vector<8x96xf32> to vector<8x32xf32>
    %421 = vector.extract_strided_slice %407 {offsets = [0, 64], sizes = [8, 32], strides = [1, 1]} : vector<8x96xf32> to vector<8x32xf32>
    %422 = arith.addf %421, %20 : vector<8x32xf32>
    %423 = arith.mulf %418, %422 : vector<8x32xf32>
    %424 = arith.addf %420, %423 : vector<8x32xf32>
    %425 = math.tanh %424 : vector<8x32xf32>
    %cst_126 = arith.constant 1.000000e+00 : f32
    %426 = vector.broadcast %cst_126 : f32 to vector<8x32xf32>
    %427 = arith.subf %426, %419 : vector<8x32xf32>
    %428 = arith.mulf %427, %425 : vector<8x32xf32>
    %429 = arith.mulf %419, %362 : vector<8x32xf32>
    %430 = arith.addf %428, %429 : vector<8x32xf32>
    %431 = arith.index_cast %c5_i32 : i32 to index
    %c0_127 = arith.constant 0 : index
    %c0_128 = arith.constant 0 : index
    %432 = vector.load %arg8[%431, %c0_127, %c0_128] : memref<7x8x32xf32, #tpu.memory_space<vmem>>, vector<1x8x32xf32>
    %433 = vector.shape_cast %432 : vector<1x8x32xf32> to vector<8x32xf32>
    %434 = vector.shape_cast %405 : vector<8x32xf32> to vector<1x8x32xf32>
    tpu.vector_store %arg8[%431, %c0_127, %c0_128], %434 {strides = array<i32>} : memref<7x8x32xf32, #tpu.memory_space<vmem>>, vector<1x8x32xf32>,
    %435 = arith.index_cast %371 : i32 to index
    %c0_129 = arith.constant 0 : index
    %c0_130 = arith.constant 0 : index
    %436 = vector.load %arg9[%435, %c0_129, %c0_130] : memref<7x8x32xf32, #tpu.memory_space<vmem>>, vector<1x8x32xf32>
    %437 = vector.shape_cast %436 : vector<1x8x32xf32> to vector<8x32xf32>
    %438 = vector.shape_cast %430 : vector<8x32xf32> to vector<1x8x32xf32>
    tpu.vector_store %arg9[%435, %c0_129, %c0_130], %438 {strides = array<i32>} : memref<7x8x32xf32, #tpu.memory_space<vmem>>, vector<1x8x32xf32>,
    %c6_i32_131 = arith.constant 6 : i32
    %c6_i32_132 = arith.constant 6 : i32
    %439 = arith.subi %c6_i32_132, %c6_i32_131 : i32
    %440 = tpu.concatenate %405, %430 in 1 : vector<8x32xf32>, vector<8x32xf32> -> vector<8x64xf32>
    %441 = arith.truncf %440 : vector<8x64xf32> to vector<8x64xbf16>
    %cst_133 = arith.constant dense<0.000000e+00> : vector<8x192xf32>
    %442 = tpu.matmul %441, %1, %cst_133 {dimension_numbers = #tpu.dot_dimension_numbers<[1], [0], [0], [1], [0, 0, 1, 1], [], []>} : vector<8x64xbf16>, vector<64x192xbf16>, vector<8x192xf32> -> vector<8x192xf32>
    %443 = arith.index_cast %c6_i32_131 : i32 to index
    %c0_134 = arith.constant 0 : index
    %c0_135 = arith.constant 0 : index
    %444 = vector.load %arg7[%443, %c0_134, %c0_135] : memref<7x8x192xf32, #tpu.memory_space<vmem>>, vector<1x8x192xf32>
    %445 = vector.shape_cast %444 : vector<1x8x192xf32> to vector<8x192xf32>
    %446 = arith.index_cast %439 : i32 to index
    %c0_136 = arith.constant 0 : index
    %c0_137 = arith.constant 0 : index
    %447 = vector.load %arg7[%446, %c0_136, %c0_137] : memref<7x8x192xf32, #tpu.memory_space<vmem>>, vector<1x8x192xf32>
    %448 = vector.shape_cast %447 : vector<1x8x192xf32> to vector<8x192xf32>
    %449 = vector.extract_strided_slice %445 {offsets = [0, 0], sizes = [8, 96], strides = [1, 1]} : vector<8x192xf32> to vector<8x96xf32>
    %450 = vector.extract_strided_slice %442 {offsets = [0, 0], sizes = [8, 96], strides = [1, 1]} : vector<8x192xf32> to vector<8x96xf32>
    %451 = vector.extract_strided_slice %449 {offsets = [0, 0], sizes = [8, 64], strides = [1, 1]} : vector<8x96xf32> to vector<8x64xf32>
    %452 = vector.extract_strided_slice %450 {offsets = [0, 0], sizes = [8, 64], strides = [1, 1]} : vector<8x96xf32> to vector<8x64xf32>
    %453 = arith.addf %451, %452 : vector<8x64xf32>
    %cst_138 = arith.constant 5.000000e-01 : f32
    %454 = vector.broadcast %cst_138 : f32 to vector<8x64xf32>
    %455 = arith.mulf %454, %453 : vector<8x64xf32>
    %456 = math.tanh %455 : vector<8x64xf32>
    %cst_139 = arith.constant 1.000000e+00 : f32
    %457 = vector.broadcast %cst_139 : f32 to vector<8x64xf32>
    %458 = arith.addf %456, %457 : vector<8x64xf32>
    %cst_140 = arith.constant 5.000000e-01 : f32
    %459 = vector.broadcast %cst_140 : f32 to vector<8x64xf32>
    %460 = arith.mulf %459, %458 : vector<8x64xf32>
    %461 = vector.extract_strided_slice %460 {offsets = [0, 0], sizes = [8, 32], strides = [1, 1]} : vector<8x64xf32> to vector<8x32xf32>
    %462 = vector.extract_strided_slice %460 {offsets = [0, 32], sizes = [8, 32], strides = [1, 1]} : vector<8x64xf32> to vector<8x32xf32>
    %463 = vector.extract_strided_slice %449 {offsets = [0, 64], sizes = [8, 32], strides = [1, 1]} : vector<8x96xf32> to vector<8x32xf32>
    %464 = vector.extract_strided_slice %450 {offsets = [0, 64], sizes = [8, 32], strides = [1, 1]} : vector<8x96xf32> to vector<8x32xf32>
    %465 = arith.addf %464, %17 : vector<8x32xf32>
    %466 = arith.mulf %461, %465 : vector<8x32xf32>
    %467 = arith.addf %463, %466 : vector<8x32xf32>
    %468 = math.tanh %467 : vector<8x32xf32>
    %cst_141 = arith.constant 1.000000e+00 : f32
    %469 = vector.broadcast %cst_141 : f32 to vector<8x32xf32>
    %470 = arith.subf %469, %462 : vector<8x32xf32>
    %471 = arith.mulf %470, %468 : vector<8x32xf32>
    %472 = arith.mulf %462, %405 : vector<8x32xf32>
    %473 = arith.addf %471, %472 : vector<8x32xf32>
    %474 = vector.extract_strided_slice %448 {offsets = [0, 96], sizes = [8, 96], strides = [1, 1]} : vector<8x192xf32> to vector<8x96xf32>
    %475 = vector.extract_strided_slice %442 {offsets = [0, 96], sizes = [8, 96], strides = [1, 1]} : vector<8x192xf32> to vector<8x96xf32>
    %476 = vector.extract_strided_slice %474 {offsets = [0, 0], sizes = [8, 64], strides = [1, 1]} : vector<8x96xf32> to vector<8x64xf32>
    %477 = vector.extract_strided_slice %475 {offsets = [0, 0], sizes = [8, 64], strides = [1, 1]} : vector<8x96xf32> to vector<8x64xf32>
    %478 = arith.addf %476, %477 : vector<8x64xf32>
    %cst_142 = arith.constant 5.000000e-01 : f32
    %479 = vector.broadcast %cst_142 : f32 to vector<8x64xf32>
    %480 = arith.mulf %479, %478 : vector<8x64xf32>
    %481 = math.tanh %480 : vector<8x64xf32>
    %cst_143 = arith.constant 1.000000e+00 : f32
    %482 = vector.broadcast %cst_143 : f32 to vector<8x64xf32>
    %483 = arith.addf %481, %482 : vector<8x64xf32>
    %cst_144 = arith.constant 5.000000e-01 : f32
    %484 = vector.broadcast %cst_144 : f32 to vector<8x64xf32>
    %485 = arith.mulf %484, %483 : vector<8x64xf32>
    %486 = vector.extract_strided_slice %485 {offsets = [0, 0], sizes = [8, 32], strides = [1, 1]} : vector<8x64xf32> to vector<8x32xf32>
    %487 = vector.extract_strided_slice %485 {offsets = [0, 32], sizes = [8, 32], strides = [1, 1]} : vector<8x64xf32> to vector<8x32xf32>
    %488 = vector.extract_strided_slice %474 {offsets = [0, 64], sizes = [8, 32], strides = [1, 1]} : vector<8x96xf32> to vector<8x32xf32>
    %489 = vector.extract_strided_slice %475 {offsets = [0, 64], sizes = [8, 32], strides = [1, 1]} : vector<8x96xf32> to vector<8x32xf32>
    %490 = arith.addf %489, %20 : vector<8x32xf32>
    %491 = arith.mulf %486, %490 : vector<8x32xf32>
    %492 = arith.addf %488, %491 : vector<8x32xf32>
    %493 = math.tanh %492 : vector<8x32xf32>
    %cst_145 = arith.constant 1.000000e+00 : f32
    %494 = vector.broadcast %cst_145 : f32 to vector<8x32xf32>
    %495 = arith.subf %494, %487 : vector<8x32xf32>
    %496 = arith.mulf %495, %493 : vector<8x32xf32>
    %497 = arith.mulf %487, %430 : vector<8x32xf32>
    %498 = arith.addf %496, %497 : vector<8x32xf32>
    %499 = arith.index_cast %c6_i32_131 : i32 to index
    %c0_146 = arith.constant 0 : index
    %c0_147 = arith.constant 0 : index
    %500 = vector.load %arg8[%499, %c0_146, %c0_147] : memref<7x8x32xf32, #tpu.memory_space<vmem>>, vector<1x8x32xf32>
    %501 = vector.shape_cast %500 : vector<1x8x32xf32> to vector<8x32xf32>
    %502 = vector.shape_cast %473 : vector<8x32xf32> to vector<1x8x32xf32>
    tpu.vector_store %arg8[%499, %c0_146, %c0_147], %502 {strides = array<i32>} : memref<7x8x32xf32, #tpu.memory_space<vmem>>, vector<1x8x32xf32>,
    %503 = arith.index_cast %439 : i32 to index
    %c0_148 = arith.constant 0 : index
    %c0_149 = arith.constant 0 : index
    %504 = vector.load %arg9[%503, %c0_148, %c0_149] : memref<7x8x32xf32, #tpu.memory_space<vmem>>, vector<1x8x32xf32>
    %505 = vector.shape_cast %504 : vector<1x8x32xf32> to vector<8x32xf32>
    %506 = vector.shape_cast %498 : vector<8x32xf32> to vector<1x8x32xf32>
    tpu.vector_store %arg9[%503, %c0_148, %c0_149], %506 {strides = array<i32>} : memref<7x8x32xf32, #tpu.memory_space<vmem>>, vector<1x8x32xf32>,
    %c7_i32 = arith.constant 7 : i32
    %c0_150 = arith.constant 0 : index
    %c0_151 = arith.constant 0 : index
    %c0_152 = arith.constant 0 : index
    %507 = vector.load %arg8[%c0_150, %c0_151, %c0_152] : memref<7x8x32xf32, #tpu.memory_space<vmem>>, vector<7x8x32xf32>
    %508 = vector.shape_cast %507 : vector<7x8x32xf32> to vector<56x32xf32>
    %c0_153 = arith.constant 0 : index
    %c0_154 = arith.constant 0 : index
    %c0_155 = arith.constant 0 : index
    %509 = vector.load %arg9[%c0_153, %c0_154, %c0_155] : memref<7x8x32xf32, #tpu.memory_space<vmem>>, vector<7x8x32xf32>
    %510 = vector.shape_cast %509 : vector<7x8x32xf32> to vector<56x32xf32>
    %511 = tpu.concatenate %508, %510 in 1 : vector<56x32xf32>, vector<56x32xf32> -> vector<56x64xf32>
    %512 = arith.truncf %511 : vector<56x64xf32> to vector<56x64xbf16>
    %cst_156 = arith.constant dense<0.000000e+00> : vector<56x32xf32>
    %513 = tpu.matmul %512, %2, %cst_156 {dimension_numbers = #tpu.dot_dimension_numbers<[1], [0], [0], [1], [0, 0, 1, 1], [], []>} : vector<56x64xbf16>, vector<64x32xbf16>, vector<56x32xf32> -> vector<56x32xf32>
    %c1_157 = arith.constant 1 : index
    %c64_158 = arith.constant 64 : index
    %514 = vector.load %arg5[%c1_157, %c64_158] : memref<3x192xf32, #tpu.memory_space<vmem>>, vector<1x32xf32>
    %515 = vector.broadcast %514 : vector<1x32xf32> to vector<56x32xf32>
    %516 = arith.addf %513, %515 : vector<56x32xf32>
    %517 = vector.shape_cast %516 : vector<56x32xf32> to vector<7x8x32xf32>
    %c0_159 = arith.constant 0 : index
    %c0_160 = arith.constant 0 : index
    %c0_161 = arith.constant 0 : index
    %518 = vector.load %arg10[%c0_159, %c0_160, %c0_161] : memref<7x8x32xf32, #tpu.memory_space<vmem>>, vector<7x8x32xf32>
    tpu.vector_store %arg10[%c0_159, %c0_160, %c0_161], %517 {strides = array<i32>} : memref<7x8x32xf32, #tpu.memory_space<vmem>>, vector<7x8x32xf32>,
    %c0_162 = arith.constant 0 : index
    %c0_163 = arith.constant 0 : index
    %519 = vector.load %arg1[%c0_162, %c0_163] : memref<8x9xbf16, #tpu.memory_space<vmem>>, vector<8x9xbf16>
    %cst_164 = arith.constant dense<0.000000e+00> : vector<8x32xf32>
    %520 = tpu.matmul %519, %3, %cst_164 {dimension_numbers = #tpu.dot_dimension_numbers<[1], [0], [0], [1], [0, 0, 1, 1], [], []>} : vector<8x9xbf16>, vector<9x32xbf16>, vector<8x32xf32> -> vector<8x32xf32>
    %c1_165 = arith.constant 1 : index
    %c96_166 = arith.constant 96 : index
    %521 = vector.load %arg5[%c1_165, %c96_166] : memref<3x192xf32, #tpu.memory_space<vmem>>, vector<1x32xf32>
    %522 = vector.broadcast %521 : vector<1x32xf32> to vector<8x32xf32>
    %523 = arith.addf %520, %522 : vector<8x32xf32>
    %c0_167 = arith.constant 0 : index
    %c0_168 = arith.constant 0 : index
    %c0_169 = arith.constant 0 : index
    %524 = vector.load %arg10[%c0_167, %c0_168, %c0_169] : memref<7x8x32xf32, #tpu.memory_space<vmem>>, vector<1x8x32xf32>
    %525 = vector.shape_cast %524 : vector<1x8x32xf32> to vector<8x32xf32>
    %526 = arith.addf %523, %525 : vector<8x32xf32>
    %cst_170 = arith.constant 5.000000e-01 : f32
    %527 = vector.broadcast %cst_170 : f32 to vector<8x32xf32>
    %528 = arith.mulf %527, %526 : vector<8x32xf32>
    %529 = math.tanh %528 : vector<8x32xf32>
    %530 = arith.truncf %529 : vector<8x32xf32> to vector<8x32xbf16>
    %cst_171 = arith.constant dense<0.000000e+00> : vector<8x16xf32>
    %531 = tpu.matmul %530, %5, %cst_171 {dimension_numbers = #tpu.dot_dimension_numbers<[1], [0], [0], [1], [0, 0, 1, 1], [], []>} : vector<8x32xbf16>, vector<32x16xbf16>, vector<8x16xf32> -> vector<8x16xf32>
    %532 = arith.addf %531, %26 : vector<8x16xf32>
    %533 = vector.extract_strided_slice %532 {offsets = [0, 0], sizes = [8, 8], strides = [1, 1]} : vector<8x16xf32> to vector<8x8xf32>
    %534 = vector.extract_strided_slice %532 {offsets = [0, 8], sizes = [8, 8], strides = [1, 1]} : vector<8x16xf32> to vector<8x8xf32>
    %cst_172 = arith.constant 2.000000e+01 : f32
    %535 = vector.broadcast %cst_172 : f32 to vector<8x8xf32>
    %536 = arith.cmpf ogt, %534, %535 : vector<8x8xf32>
    %cst_173 = arith.constant 2.000000e+01 : f32
    %537 = vector.broadcast %cst_173 : f32 to vector<8x8xf32>
    %538 = arith.minimumf %534, %537 : vector<8x8xf32>
    %539 = math.exp %538 : vector<8x8xf32>
    %cst_174 = arith.constant 1.000000e+00 : f32
    %540 = vector.broadcast %cst_174 : f32 to vector<8x8xf32>
    %541 = arith.addf %540, %539 : vector<8x8xf32>
    %542 = math.log %541 : vector<8x8xf32>
    %543 = arith.select %536, %534, %542 : vector<8x8xi1>, vector<8x8xf32>
    %c0_175 = arith.constant 0 : index
    %c0_176 = arith.constant 0 : index
    %c0_177 = arith.constant 0 : index
    %544 = vector.load %arg2[%c0_175, %c0_176, %c0_177] : memref<7x8x8xf32, #tpu.memory_space<vmem>>, vector<1x8x8xf32>
    %545 = vector.shape_cast %544 : vector<1x8x8xf32> to vector<8x8xf32>
    %546 = arith.mulf %543, %545 : vector<8x8xf32>
    %547 = arith.addf %533, %546 : vector<8x8xf32>
    %548 = tpu.concatenate %547, %533, %543 in 1 : vector<8x8xf32>, vector<8x8xf32>, vector<8x8xf32> -> vector<8x24xf32>
    %c0_178 = arith.constant 0 : index
    %c0_179 = arith.constant 0 : index
    %c0_180 = arith.constant 0 : index
    %549 = vector.load %arg6[%c0_178, %c0_179, %c0_180] : memref<7x8x24xf32, #tpu.memory_space<vmem>>, vector<1x8x24xf32>
    %550 = vector.shape_cast %549 : vector<1x8x24xf32> to vector<8x24xf32>
    %551 = vector.shape_cast %548 : vector<8x24xf32> to vector<1x8x24xf32>
    tpu.vector_store %arg6[%c0_178, %c0_179, %c0_180], %551 {strides = array<i32>} : memref<7x8x24xf32, #tpu.memory_space<vmem>>, vector<1x8x24xf32>,
    %c1_i32_181 = arith.constant 1 : i32
    %552 = arith.truncf %547 : vector<8x8xf32> to vector<8x8xbf16>
    %cst_182 = arith.constant dense<0.000000e+00> : vector<8x32xf32>
    %553 = tpu.matmul %552, %4, %cst_182 {dimension_numbers = #tpu.dot_dimension_numbers<[1], [0], [0], [1], [0, 0, 1, 1], [], []>} : vector<8x8xbf16>, vector<8x32xbf16>, vector<8x32xf32> -> vector<8x32xf32>
    %554 = arith.addf %553, %23 : vector<8x32xf32>
    %555 = arith.index_cast %c1_i32_181 : i32 to index
    %c0_183 = arith.constant 0 : index
    %c0_184 = arith.constant 0 : index
    %556 = vector.load %arg10[%555, %c0_183, %c0_184] : memref<7x8x32xf32, #tpu.memory_space<vmem>>, vector<1x8x32xf32>
    %557 = vector.shape_cast %556 : vector<1x8x32xf32> to vector<8x32xf32>
    %558 = arith.addf %554, %557 : vector<8x32xf32>
    %cst_185 = arith.constant 5.000000e-01 : f32
    %559 = vector.broadcast %cst_185 : f32 to vector<8x32xf32>
    %560 = arith.mulf %559, %558 : vector<8x32xf32>
    %561 = math.tanh %560 : vector<8x32xf32>
    %562 = arith.truncf %561 : vector<8x32xf32> to vector<8x32xbf16>
    %cst_186 = arith.constant dense<0.000000e+00> : vector<8x16xf32>
    %563 = tpu.matmul %562, %6, %cst_186 {dimension_numbers = #tpu.dot_dimension_numbers<[1], [0], [0], [1], [0, 0, 1, 1], [], []>} : vector<8x32xbf16>, vector<32x16xbf16>, vector<8x16xf32> -> vector<8x16xf32>
    %564 = arith.addf %563, %29 : vector<8x16xf32>
    %565 = vector.extract_strided_slice %564 {offsets = [0, 0], sizes = [8, 8], strides = [1, 1]} : vector<8x16xf32> to vector<8x8xf32>
    %566 = vector.extract_strided_slice %564 {offsets = [0, 8], sizes = [8, 8], strides = [1, 1]} : vector<8x16xf32> to vector<8x8xf32>
    %cst_187 = arith.constant 2.000000e+01 : f32
    %567 = vector.broadcast %cst_187 : f32 to vector<8x8xf32>
    %568 = arith.cmpf ogt, %566, %567 : vector<8x8xf32>
    %cst_188 = arith.constant 2.000000e+01 : f32
    %569 = vector.broadcast %cst_188 : f32 to vector<8x8xf32>
    %570 = arith.minimumf %566, %569 : vector<8x8xf32>
    %571 = math.exp %570 : vector<8x8xf32>
    %cst_189 = arith.constant 1.000000e+00 : f32
    %572 = vector.broadcast %cst_189 : f32 to vector<8x8xf32>
    %573 = arith.addf %572, %571 : vector<8x8xf32>
    %574 = math.log %573 : vector<8x8xf32>
    %575 = arith.select %568, %566, %574 : vector<8x8xi1>, vector<8x8xf32>
    %576 = arith.index_cast %c1_i32_181 : i32 to index
    %c0_190 = arith.constant 0 : index
    %c0_191 = arith.constant 0 : index
    %577 = vector.load %arg2[%576, %c0_190, %c0_191] : memref<7x8x8xf32, #tpu.memory_space<vmem>>, vector<1x8x8xf32>
    %578 = vector.shape_cast %577 : vector<1x8x8xf32> to vector<8x8xf32>
    %579 = arith.mulf %575, %578 : vector<8x8xf32>
    %580 = arith.addf %565, %579 : vector<8x8xf32>
    %581 = tpu.concatenate %580, %565, %575 in 1 : vector<8x8xf32>, vector<8x8xf32>, vector<8x8xf32> -> vector<8x24xf32>
    %582 = arith.index_cast %c1_i32_181 : i32 to index
    %c0_192 = arith.constant 0 : index
    %c0_193 = arith.constant 0 : index
    %583 = vector.load %arg6[%582, %c0_192, %c0_193] : memref<7x8x24xf32, #tpu.memory_space<vmem>>, vector<1x8x24xf32>
    %584 = vector.shape_cast %583 : vector<1x8x24xf32> to vector<8x24xf32>
    %585 = vector.shape_cast %581 : vector<8x24xf32> to vector<1x8x24xf32>
    tpu.vector_store %arg6[%582, %c0_192, %c0_193], %585 {strides = array<i32>} : memref<7x8x24xf32, #tpu.memory_space<vmem>>, vector<1x8x24xf32>,
    %c2_i32_194 = arith.constant 2 : i32
    %586 = arith.truncf %580 : vector<8x8xf32> to vector<8x8xbf16>
    %cst_195 = arith.constant dense<0.000000e+00> : vector<8x32xf32>
    %587 = tpu.matmul %586, %4, %cst_195 {dimension_numbers = #tpu.dot_dimension_numbers<[1], [0], [0], [1], [0, 0, 1, 1], [], []>} : vector<8x8xbf16>, vector<8x32xbf16>, vector<8x32xf32> -> vector<8x32xf32>
    %588 = arith.addf %587, %23 : vector<8x32xf32>
    %589 = arith.index_cast %c2_i32_194 : i32 to index
    %c0_196 = arith.constant 0 : index
    %c0_197 = arith.constant 0 : index
    %590 = vector.load %arg10[%589, %c0_196, %c0_197] : memref<7x8x32xf32, #tpu.memory_space<vmem>>, vector<1x8x32xf32>
    %591 = vector.shape_cast %590 : vector<1x8x32xf32> to vector<8x32xf32>
    %592 = arith.addf %588, %591 : vector<8x32xf32>
    %cst_198 = arith.constant 5.000000e-01 : f32
    %593 = vector.broadcast %cst_198 : f32 to vector<8x32xf32>
    %594 = arith.mulf %593, %592 : vector<8x32xf32>
    %595 = math.tanh %594 : vector<8x32xf32>
    %596 = arith.truncf %595 : vector<8x32xf32> to vector<8x32xbf16>
    %cst_199 = arith.constant dense<0.000000e+00> : vector<8x16xf32>
    %597 = tpu.matmul %596, %6, %cst_199 {dimension_numbers = #tpu.dot_dimension_numbers<[1], [0], [0], [1], [0, 0, 1, 1], [], []>} : vector<8x32xbf16>, vector<32x16xbf16>, vector<8x16xf32> -> vector<8x16xf32>
    %598 = arith.addf %597, %29 : vector<8x16xf32>
    %599 = vector.extract_strided_slice %598 {offsets = [0, 0], sizes = [8, 8], strides = [1, 1]} : vector<8x16xf32> to vector<8x8xf32>
    %600 = vector.extract_strided_slice %598 {offsets = [0, 8], sizes = [8, 8], strides = [1, 1]} : vector<8x16xf32> to vector<8x8xf32>
    %cst_200 = arith.constant 2.000000e+01 : f32
    %601 = vector.broadcast %cst_200 : f32 to vector<8x8xf32>
    %602 = arith.cmpf ogt, %600, %601 : vector<8x8xf32>
    %cst_201 = arith.constant 2.000000e+01 : f32
    %603 = vector.broadcast %cst_201 : f32 to vector<8x8xf32>
    %604 = arith.minimumf %600, %603 : vector<8x8xf32>
    %605 = math.exp %604 : vector<8x8xf32>
    %cst_202 = arith.constant 1.000000e+00 : f32
    %606 = vector.broadcast %cst_202 : f32 to vector<8x8xf32>
    %607 = arith.addf %606, %605 : vector<8x8xf32>
    %608 = math.log %607 : vector<8x8xf32>
    %609 = arith.select %602, %600, %608 : vector<8x8xi1>, vector<8x8xf32>
    %610 = arith.index_cast %c2_i32_194 : i32 to index
    %c0_203 = arith.constant 0 : index
    %c0_204 = arith.constant 0 : index
    %611 = vector.load %arg2[%610, %c0_203, %c0_204] : memref<7x8x8xf32, #tpu.memory_space<vmem>>, vector<1x8x8xf32>
    %612 = vector.shape_cast %611 : vector<1x8x8xf32> to vector<8x8xf32>
    %613 = arith.mulf %609, %612 : vector<8x8xf32>
    %614 = arith.addf %599, %613 : vector<8x8xf32>
    %615 = tpu.concatenate %614, %599, %609 in 1 : vector<8x8xf32>, vector<8x8xf32>, vector<8x8xf32> -> vector<8x24xf32>
    %616 = arith.index_cast %c2_i32_194 : i32 to index
    %c0_205 = arith.constant 0 : index
    %c0_206 = arith.constant 0 : index
    %617 = vector.load %arg6[%616, %c0_205, %c0_206] : memref<7x8x24xf32, #tpu.memory_space<vmem>>, vector<1x8x24xf32>
    %618 = vector.shape_cast %617 : vector<1x8x24xf32> to vector<8x24xf32>
    %619 = vector.shape_cast %615 : vector<8x24xf32> to vector<1x8x24xf32>
    tpu.vector_store %arg6[%616, %c0_205, %c0_206], %619 {strides = array<i32>} : memref<7x8x24xf32, #tpu.memory_space<vmem>>, vector<1x8x24xf32>,
    %c3_i32_207 = arith.constant 3 : i32
    %620 = arith.truncf %614 : vector<8x8xf32> to vector<8x8xbf16>
    %cst_208 = arith.constant dense<0.000000e+00> : vector<8x32xf32>
    %621 = tpu.matmul %620, %4, %cst_208 {dimension_numbers = #tpu.dot_dimension_numbers<[1], [0], [0], [1], [0, 0, 1, 1], [], []>} : vector<8x8xbf16>, vector<8x32xbf16>, vector<8x32xf32> -> vector<8x32xf32>
    %622 = arith.addf %621, %23 : vector<8x32xf32>
    %623 = arith.index_cast %c3_i32_207 : i32 to index
    %c0_209 = arith.constant 0 : index
    %c0_210 = arith.constant 0 : index
    %624 = vector.load %arg10[%623, %c0_209, %c0_210] : memref<7x8x32xf32, #tpu.memory_space<vmem>>, vector<1x8x32xf32>
    %625 = vector.shape_cast %624 : vector<1x8x32xf32> to vector<8x32xf32>
    %626 = arith.addf %622, %625 : vector<8x32xf32>
    %cst_211 = arith.constant 5.000000e-01 : f32
    %627 = vector.broadcast %cst_211 : f32 to vector<8x32xf32>
    %628 = arith.mulf %627, %626 : vector<8x32xf32>
    %629 = math.tanh %628 : vector<8x32xf32>
    %630 = arith.truncf %629 : vector<8x32xf32> to vector<8x32xbf16>
    %cst_212 = arith.constant dense<0.000000e+00> : vector<8x16xf32>
    %631 = tpu.matmul %630, %6, %cst_212 {dimension_numbers = #tpu.dot_dimension_numbers<[1], [0], [0], [1], [0, 0, 1, 1], [], []>} : vector<8x32xbf16>, vector<32x16xbf16>, vector<8x16xf32> -> vector<8x16xf32>
    %632 = arith.addf %631, %29 : vector<8x16xf32>
    %633 = vector.extract_strided_slice %632 {offsets = [0, 0], sizes = [8, 8], strides = [1, 1]} : vector<8x16xf32> to vector<8x8xf32>
    %634 = vector.extract_strided_slice %632 {offsets = [0, 8], sizes = [8, 8], strides = [1, 1]} : vector<8x16xf32> to vector<8x8xf32>
    %cst_213 = arith.constant 2.000000e+01 : f32
    %635 = vector.broadcast %cst_213 : f32 to vector<8x8xf32>
    %636 = arith.cmpf ogt, %634, %635 : vector<8x8xf32>
    %cst_214 = arith.constant 2.000000e+01 : f32
    %637 = vector.broadcast %cst_214 : f32 to vector<8x8xf32>
    %638 = arith.minimumf %634, %637 : vector<8x8xf32>
    %639 = math.exp %638 : vector<8x8xf32>
    %cst_215 = arith.constant 1.000000e+00 : f32
    %640 = vector.broadcast %cst_215 : f32 to vector<8x8xf32>
    %641 = arith.addf %640, %639 : vector<8x8xf32>
    %642 = math.log %641 : vector<8x8xf32>
    %643 = arith.select %636, %634, %642 : vector<8x8xi1>, vector<8x8xf32>
    %644 = arith.index_cast %c3_i32_207 : i32 to index
    %c0_216 = arith.constant 0 : index
    %c0_217 = arith.constant 0 : index
    %645 = vector.load %arg2[%644, %c0_216, %c0_217] : memref<7x8x8xf32, #tpu.memory_space<vmem>>, vector<1x8x8xf32>
    %646 = vector.shape_cast %645 : vector<1x8x8xf32> to vector<8x8xf32>
    %647 = arith.mulf %643, %646 : vector<8x8xf32>
    %648 = arith.addf %633, %647 : vector<8x8xf32>
    %649 = tpu.concatenate %648, %633, %643 in 1 : vector<8x8xf32>, vector<8x8xf32>, vector<8x8xf32> -> vector<8x24xf32>
    %650 = arith.index_cast %c3_i32_207 : i32 to index
    %c0_218 = arith.constant 0 : index
    %c0_219 = arith.constant 0 : index
    %651 = vector.load %arg6[%650, %c0_218, %c0_219] : memref<7x8x24xf32, #tpu.memory_space<vmem>>, vector<1x8x24xf32>
    %652 = vector.shape_cast %651 : vector<1x8x24xf32> to vector<8x24xf32>
    %653 = vector.shape_cast %649 : vector<8x24xf32> to vector<1x8x24xf32>
    tpu.vector_store %arg6[%650, %c0_218, %c0_219], %653 {strides = array<i32>} : memref<7x8x24xf32, #tpu.memory_space<vmem>>, vector<1x8x24xf32>,
    %c4_i32_220 = arith.constant 4 : i32
    %654 = arith.truncf %648 : vector<8x8xf32> to vector<8x8xbf16>
    %cst_221 = arith.constant dense<0.000000e+00> : vector<8x32xf32>
    %655 = tpu.matmul %654, %4, %cst_221 {dimension_numbers = #tpu.dot_dimension_numbers<[1], [0], [0], [1], [0, 0, 1, 1], [], []>} : vector<8x8xbf16>, vector<8x32xbf16>, vector<8x32xf32> -> vector<8x32xf32>
    %656 = arith.addf %655, %23 : vector<8x32xf32>
    %657 = arith.index_cast %c4_i32_220 : i32 to index
    %c0_222 = arith.constant 0 : index
    %c0_223 = arith.constant 0 : index
    %658 = vector.load %arg10[%657, %c0_222, %c0_223] : memref<7x8x32xf32, #tpu.memory_space<vmem>>, vector<1x8x32xf32>
    %659 = vector.shape_cast %658 : vector<1x8x32xf32> to vector<8x32xf32>
    %660 = arith.addf %656, %659 : vector<8x32xf32>
    %cst_224 = arith.constant 5.000000e-01 : f32
    %661 = vector.broadcast %cst_224 : f32 to vector<8x32xf32>
    %662 = arith.mulf %661, %660 : vector<8x32xf32>
    %663 = math.tanh %662 : vector<8x32xf32>
    %664 = arith.truncf %663 : vector<8x32xf32> to vector<8x32xbf16>
    %cst_225 = arith.constant dense<0.000000e+00> : vector<8x16xf32>
    %665 = tpu.matmul %664, %6, %cst_225 {dimension_numbers = #tpu.dot_dimension_numbers<[1], [0], [0], [1], [0, 0, 1, 1], [], []>} : vector<8x32xbf16>, vector<32x16xbf16>, vector<8x16xf32> -> vector<8x16xf32>
    %666 = arith.addf %665, %29 : vector<8x16xf32>
    %667 = vector.extract_strided_slice %666 {offsets = [0, 0], sizes = [8, 8], strides = [1, 1]} : vector<8x16xf32> to vector<8x8xf32>
    %668 = vector.extract_strided_slice %666 {offsets = [0, 8], sizes = [8, 8], strides = [1, 1]} : vector<8x16xf32> to vector<8x8xf32>
    %cst_226 = arith.constant 2.000000e+01 : f32
    %669 = vector.broadcast %cst_226 : f32 to vector<8x8xf32>
    %670 = arith.cmpf ogt, %668, %669 : vector<8x8xf32>
    %cst_227 = arith.constant 2.000000e+01 : f32
    %671 = vector.broadcast %cst_227 : f32 to vector<8x8xf32>
    %672 = arith.minimumf %668, %671 : vector<8x8xf32>
    %673 = math.exp %672 : vector<8x8xf32>
    %cst_228 = arith.constant 1.000000e+00 : f32
    %674 = vector.broadcast %cst_228 : f32 to vector<8x8xf32>
    %675 = arith.addf %674, %673 : vector<8x8xf32>
    %676 = math.log %675 : vector<8x8xf32>
    %677 = arith.select %670, %668, %676 : vector<8x8xi1>, vector<8x8xf32>
    %678 = arith.index_cast %c4_i32_220 : i32 to index
    %c0_229 = arith.constant 0 : index
    %c0_230 = arith.constant 0 : index
    %679 = vector.load %arg2[%678, %c0_229, %c0_230] : memref<7x8x8xf32, #tpu.memory_space<vmem>>, vector<1x8x8xf32>
    %680 = vector.shape_cast %679 : vector<1x8x8xf32> to vector<8x8xf32>
    %681 = arith.mulf %677, %680 : vector<8x8xf32>
    %682 = arith.addf %667, %681 : vector<8x8xf32>
    %683 = tpu.concatenate %682, %667, %677 in 1 : vector<8x8xf32>, vector<8x8xf32>, vector<8x8xf32> -> vector<8x24xf32>
    %684 = arith.index_cast %c4_i32_220 : i32 to index
    %c0_231 = arith.constant 0 : index
    %c0_232 = arith.constant 0 : index
    %685 = vector.load %arg6[%684, %c0_231, %c0_232] : memref<7x8x24xf32, #tpu.memory_space<vmem>>, vector<1x8x24xf32>
    %686 = vector.shape_cast %685 : vector<1x8x24xf32> to vector<8x24xf32>
    %687 = vector.shape_cast %683 : vector<8x24xf32> to vector<1x8x24xf32>
    tpu.vector_store %arg6[%684, %c0_231, %c0_232], %687 {strides = array<i32>} : memref<7x8x24xf32, #tpu.memory_space<vmem>>, vector<1x8x24xf32>,
    %c5_i32_233 = arith.constant 5 : i32
    %688 = arith.truncf %682 : vector<8x8xf32> to vector<8x8xbf16>
    %cst_234 = arith.constant dense<0.000000e+00> : vector<8x32xf32>
    %689 = tpu.matmul %688, %4, %cst_234 {dimension_numbers = #tpu.dot_dimension_numbers<[1], [0], [0], [1], [0, 0, 1, 1], [], []>} : vector<8x8xbf16>, vector<8x32xbf16>, vector<8x32xf32> -> vector<8x32xf32>
    %690 = arith.addf %689, %23 : vector<8x32xf32>
    %691 = arith.index_cast %c5_i32_233 : i32 to index
    %c0_235 = arith.constant 0 : index
    %c0_236 = arith.constant 0 : index
    %692 = vector.load %arg10[%691, %c0_235, %c0_236] : memref<7x8x32xf32, #tpu.memory_space<vmem>>, vector<1x8x32xf32>
    %693 = vector.shape_cast %692 : vector<1x8x32xf32> to vector<8x32xf32>
    %694 = arith.addf %690, %693 : vector<8x32xf32>
    %cst_237 = arith.constant 5.000000e-01 : f32
    %695 = vector.broadcast %cst_237 : f32 to vector<8x32xf32>
    %696 = arith.mulf %695, %694 : vector<8x32xf32>
    %697 = math.tanh %696 : vector<8x32xf32>
    %698 = arith.truncf %697 : vector<8x32xf32> to vector<8x32xbf16>
    %cst_238 = arith.constant dense<0.000000e+00> : vector<8x16xf32>
    %699 = tpu.matmul %698, %6, %cst_238 {dimension_numbers = #tpu.dot_dimension_numbers<[1], [0], [0], [1], [0, 0, 1, 1], [], []>} : vector<8x32xbf16>, vector<32x16xbf16>, vector<8x16xf32> -> vector<8x16xf32>
    %700 = arith.addf %699, %29 : vector<8x16xf32>
    %701 = vector.extract_strided_slice %700 {offsets = [0, 0], sizes = [8, 8], strides = [1, 1]} : vector<8x16xf32> to vector<8x8xf32>
    %702 = vector.extract_strided_slice %700 {offsets = [0, 8], sizes = [8, 8], strides = [1, 1]} : vector<8x16xf32> to vector<8x8xf32>
    %cst_239 = arith.constant 2.000000e+01 : f32
    %703 = vector.broadcast %cst_239 : f32 to vector<8x8xf32>
    %704 = arith.cmpf ogt, %702, %703 : vector<8x8xf32>
    %cst_240 = arith.constant 2.000000e+01 : f32
    %705 = vector.broadcast %cst_240 : f32 to vector<8x8xf32>
    %706 = arith.minimumf %702, %705 : vector<8x8xf32>
    %707 = math.exp %706 : vector<8x8xf32>
    %cst_241 = arith.constant 1.000000e+00 : f32
    %708 = vector.broadcast %cst_241 : f32 to vector<8x8xf32>
    %709 = arith.addf %708, %707 : vector<8x8xf32>
    %710 = math.log %709 : vector<8x8xf32>
    %711 = arith.select %704, %702, %710 : vector<8x8xi1>, vector<8x8xf32>
    %712 = arith.index_cast %c5_i32_233 : i32 to index
    %c0_242 = arith.constant 0 : index
    %c0_243 = arith.constant 0 : index
    %713 = vector.load %arg2[%712, %c0_242, %c0_243] : memref<7x8x8xf32, #tpu.memory_space<vmem>>, vector<1x8x8xf32>
    %714 = vector.shape_cast %713 : vector<1x8x8xf32> to vector<8x8xf32>
    %715 = arith.mulf %711, %714 : vector<8x8xf32>
    %716 = arith.addf %701, %715 : vector<8x8xf32>
    %717 = tpu.concatenate %716, %701, %711 in 1 : vector<8x8xf32>, vector<8x8xf32>, vector<8x8xf32> -> vector<8x24xf32>
    %718 = arith.index_cast %c5_i32_233 : i32 to index
    %c0_244 = arith.constant 0 : index
    %c0_245 = arith.constant 0 : index
    %719 = vector.load %arg6[%718, %c0_244, %c0_245] : memref<7x8x24xf32, #tpu.memory_space<vmem>>, vector<1x8x24xf32>
    %720 = vector.shape_cast %719 : vector<1x8x24xf32> to vector<8x24xf32>
    %721 = vector.shape_cast %717 : vector<8x24xf32> to vector<1x8x24xf32>
    tpu.vector_store %arg6[%718, %c0_244, %c0_245], %721 {strides = array<i32>} : memref<7x8x24xf32, #tpu.memory_space<vmem>>, vector<1x8x24xf32>,
    %c6_i32_246 = arith.constant 6 : i32
    %722 = arith.truncf %716 : vector<8x8xf32> to vector<8x8xbf16>
    %cst_247 = arith.constant dense<0.000000e+00> : vector<8x32xf32>
    %723 = tpu.matmul %722, %4, %cst_247 {dimension_numbers = #tpu.dot_dimension_numbers<[1], [0], [0], [1], [0, 0, 1, 1], [], []>} : vector<8x8xbf16>, vector<8x32xbf16>, vector<8x32xf32> -> vector<8x32xf32>
    %724 = arith.addf %723, %23 : vector<8x32xf32>
    %725 = arith.index_cast %c6_i32_246 : i32 to index
    %c0_248 = arith.constant 0 : index
    %c0_249 = arith.constant 0 : index
    %726 = vector.load %arg10[%725, %c0_248, %c0_249] : memref<7x8x32xf32, #tpu.memory_space<vmem>>, vector<1x8x32xf32>
    %727 = vector.shape_cast %726 : vector<1x8x32xf32> to vector<8x32xf32>
    %728 = arith.addf %724, %727 : vector<8x32xf32>
    %cst_250 = arith.constant 5.000000e-01 : f32
    %729 = vector.broadcast %cst_250 : f32 to vector<8x32xf32>
    %730 = arith.mulf %729, %728 : vector<8x32xf32>
    %731 = math.tanh %730 : vector<8x32xf32>
    %732 = arith.truncf %731 : vector<8x32xf32> to vector<8x32xbf16>
    %cst_251 = arith.constant dense<0.000000e+00> : vector<8x16xf32>
    %733 = tpu.matmul %732, %6, %cst_251 {dimension_numbers = #tpu.dot_dimension_numbers<[1], [0], [0], [1], [0, 0, 1, 1], [], []>} : vector<8x32xbf16>, vector<32x16xbf16>, vector<8x16xf32> -> vector<8x16xf32>
    %734 = arith.addf %733, %29 : vector<8x16xf32>
    %735 = vector.extract_strided_slice %734 {offsets = [0, 0], sizes = [8, 8], strides = [1, 1]} : vector<8x16xf32> to vector<8x8xf32>
    %736 = vector.extract_strided_slice %734 {offsets = [0, 8], sizes = [8, 8], strides = [1, 1]} : vector<8x16xf32> to vector<8x8xf32>
    %cst_252 = arith.constant 2.000000e+01 : f32
    %737 = vector.broadcast %cst_252 : f32 to vector<8x8xf32>
    %738 = arith.cmpf ogt, %736, %737 : vector<8x8xf32>
    %cst_253 = arith.constant 2.000000e+01 : f32
    %739 = vector.broadcast %cst_253 : f32 to vector<8x8xf32>
    %740 = arith.minimumf %736, %739 : vector<8x8xf32>
    %741 = math.exp %740 : vector<8x8xf32>
    %cst_254 = arith.constant 1.000000e+00 : f32
    %742 = vector.broadcast %cst_254 : f32 to vector<8x8xf32>
    %743 = arith.addf %742, %741 : vector<8x8xf32>
    %744 = math.log %743 : vector<8x8xf32>
    %745 = arith.select %738, %736, %744 : vector<8x8xi1>, vector<8x8xf32>
    %746 = arith.index_cast %c6_i32_246 : i32 to index
    %c0_255 = arith.constant 0 : index
    %c0_256 = arith.constant 0 : index
    %747 = vector.load %arg2[%746, %c0_255, %c0_256] : memref<7x8x8xf32, #tpu.memory_space<vmem>>, vector<1x8x8xf32>
    %748 = vector.shape_cast %747 : vector<1x8x8xf32> to vector<8x8xf32>
    %749 = arith.mulf %745, %748 : vector<8x8xf32>
    %750 = arith.addf %735, %749 : vector<8x8xf32>
    %751 = tpu.concatenate %750, %735, %745 in 1 : vector<8x8xf32>, vector<8x8xf32>, vector<8x8xf32> -> vector<8x24xf32>
    %752 = arith.index_cast %c6_i32_246 : i32 to index
    %c0_257 = arith.constant 0 : index
    %c0_258 = arith.constant 0 : index
    %753 = vector.load %arg6[%752, %c0_257, %c0_258] : memref<7x8x24xf32, #tpu.memory_space<vmem>>, vector<1x8x24xf32>
    %754 = vector.shape_cast %753 : vector<1x8x24xf32> to vector<8x24xf32>
    %755 = vector.shape_cast %751 : vector<8x24xf32> to vector<1x8x24xf32>
    tpu.vector_store %arg6[%752, %c0_257, %c0_258], %755 {strides = array<i32>} : memref<7x8x24xf32, #tpu.memory_space<vmem>>, vector<1x8x24xf32>,
    %c6_i32_259 = arith.constant 6 : i32
    return
  }
}

</mosaic_0001>

<llo_original>
// kernel: rnn_stinf_forward.1
$region0: #{rnn_stinf_forward.1}
  #allocation0 [shape = 'u32[]', space=smem, size = 0x4, offset = 0x4, fixed_abs, tag = 'smem constant byte address 0x4 - core index']
  #allocation1 [shape = 'u32[144,128]{1,0:T(1,128)}', space=vmem, size = 0x12000, scoped, tag = 'internal scratch']
  #allocation2 [shape = 'f32[7,8,192]{2,1,0:T(8,128)}', space=vmem, size = 0xe000, scoped, tag = 'scratch operand']
  #allocation3 [shape = 'f32[7,8,32]{2,1,0:T(8,128)}', space=vmem, size = 0x7000, scoped, tag = 'scratch operand']
  #allocation4 [shape = 'f32[7,8,32]{2,1,0:T(8,128)}', space=vmem, size = 0x7000, scoped, tag = 'scratch operand']
  #allocation5 [shape = 'f32[7,8,32]{2,1,0:T(8,128)}', space=vmem, size = 0x7000, scoped, tag = 'scratch operand']
  %s0 = inlined_call_operand.vmem [shape: bf16[7,8,10], index: 0, kind: input, shape index: {}]
  %s1 = inlined_call_operand.vmem [shape: bf16[8,9], index: 1, kind: input, shape index: {}]
  %s2 = inlined_call_operand.vmem [shape: f32[7,8,8], index: 2, kind: input, shape index: {}]
  %s3 = inlined_call_operand.vmem [shape: bf16[80,192], index: 3, kind: input, shape index: {}]
  %s4 = inlined_call_operand.vmem [shape: bf16[160,32], index: 4, kind: input, shape index: {}]
  %s5 = inlined_call_operand.vmem [shape: f32[3,192], index: 5, kind: input, shape index: {}]
  %s6 = inlined_call_operand.vmem [shape: f32[7,8,24], index: 6, kind: output, shape index: {}]
  %s7 = sld [smem:[#allocation0]]
  $region34: #{rnn_stinf_forward.1} parent=0
    _
  %s9 = ssub.s32 1, %s7
  %s10 = scalar_select 0, %s9, %s7
  // Predicated region
  $region2: #{rnn_stinf_forward.1} parent=0 // pred_check
    _
  $region3: #{rnn_stinf_forward.1} parent=0 // pred_check_branch
    %12 = sbr.rel (0) target = $region5
  $region4: #{rnn_stinf_forward.1} parent=0 // pred_region
    _
  $region5: #{rnn_stinf_forward.1} parent=0 // pred_fallthru
    _
  // Predicated region
  $region6: #{rnn_stinf_forward.1} parent=0 // pred_check
    _
  $region7: #{rnn_stinf_forward.1} parent=0 // pred_check_branch
    %14 = sbr.rel (0) target = $region9
  $region8: #{rnn_stinf_forward.1} parent=0 // pred_region
    _
  $region9: #{rnn_stinf_forward.1} parent=0 // pred_fallthru
    _
  // Predicated region
  $region10: #{rnn_stinf_forward.1} parent=0 // pred_check
    _
  $region11: #{rnn_stinf_forward.1} parent=0 // pred_check_branch
    %16 = sbr.rel (0) target = $region13
  $region12: #{rnn_stinf_forward.1} parent=0 // pred_region
    _
  $region13: #{rnn_stinf_forward.1} parent=0 // pred_fallthru
    _
  // Predicated region
  $region14: #{rnn_stinf_forward.1} parent=0 // pred_check
    _
  $region15: #{rnn_stinf_forward.1} parent=0 // pred_check_branch
    %18 = sbr.rel (0) target = $region17
  $region16: #{rnn_stinf_forward.1} parent=0 // pred_region
    _
  $region17: #{rnn_stinf_forward.1} parent=0 // pred_fallthru
    _
  // Predicated region
  $region18: #{rnn_stinf_forward.1} parent=0 // pred_check
    _
  $region19: #{rnn_stinf_forward.1} parent=0 // pred_check_branch
    %20 = sbr.rel (0) target = $region21
  $region20: #{rnn_stinf_forward.1} parent=0 // pred_region
    _
  $region21: #{rnn_stinf_forward.1} parent=0 // pred_fallthru
    _
  // Predicated region
  $region22: #{rnn_stinf_forward.1} parent=0 // pred_check
    _
  $region23: #{rnn_stinf_forward.1} parent=0 // pred_check_branch
    %22 = sbr.rel (0) target = $region25
  $region24: #{rnn_stinf_forward.1} parent=0 // pred_region
    _
  $region25: #{rnn_stinf_forward.1} parent=0 // pred_fallthru
    _
  %v24 = vld [vmem:[%s3] sm:$0xff]
  %v25 = vld [vmem:[%s3 + $0x8] sm:$0x11]
  %v26 = vld [vmem:[%s3 + $0x10] sm:$0xff]
  %v27 = vld [vmem:[%s3 + $0x18] sm:$0xff]
  %v28 = vld [vmem:[%s3 + $0x20] sm:$0xff]
  %v29 = vld [vmem:[%s3 + $0x28] sm:$0xff]
  %v30 = vld [vmem:[%s3 + $0x30] sm:$0xff]
  %v31 = vld [vmem:[%s3 + $0x38] sm:$0xff]
  %v32 = vld [vmem:[%s3 + $0x40] sm:$0xff]
  %v33 = vld [vmem:[%s3 + $0x48] sm:$0xff]
  %v34 = vld [vmem:[%s4] sm:$0xf]
  %v35 = vld [vmem:[%s4 + $0x4] sm:$0xf]
  %v36 = vld [vmem:[%s4 + $0x8] sm:$0xf]
  %v37 = vld [vmem:[%s4 + $0xc] sm:$0xf]
  %v38 = vld [vmem:[%s4 + $0x10] sm:$0xf]
  %v39 = vld [vmem:[%s4 + $0x14] sm:$0xf]
  %v40 = vld [vmem:[%s4 + $0x18] sm:$0xf]
  %v41 = vld [vmem:[%s4 + $0x1c] sm:$0xf]
  %v42 = vld [vmem:[%s4 + $0x20] sm:$0xf]
  %v43 = vld [vmem:[%s4 + $0x24] sm:$0x1]
  %v44 = vld [vmem:[%s4 + $0x28] sm:$0xf]
  %v45 = vld [vmem:[%s4 + $0x30] sm:$0xf]
  %v46 = vld [vmem:[%s4 + $0x34] sm:$0xf]
  %v47 = vld [vmem:[%s4 + $0x38] sm:$0xf]
  %v48 = vld [vmem:[%s4 + $0x3c] sm:$0xf]
  %v49 = vld [vmem:[%s4 + $0x40] sm:$0xf]
  %v50 = vld [vmem:[%s4 + $0x44] sm:$0xf]
  %v51 = vld [vmem:[%s4 + $0x48] sm:$0xf]
  %v52 = vld [vmem:[%s4 + $0x4c] sm:$0xf]
  %v53 = vld [vmem:[%s0] sm:$0xf]
  %v54 = vld [vmem:[%s0 + $0x4] sm:$0xf]
  %v55 = vld [vmem:[%s0 + $0x8] sm:$0xf]
  %v56 = vld [vmem:[%s0 + $0xc] sm:$0xf]
  %v57 = vld [vmem:[%s0 + $0x10] sm:$0xf]
  %v58 = vld [vmem:[%s0 + $0x14] sm:$0xf]
  %v59 = vld [vmem:[%s0 + $0x18] sm:$0xf]
  %v60 = vld [vmem:[%s5] ss:$4 sm:$0x3]
  %v62 = vlaneseq
  %v63 = vshrl.u32 %v62, 7
  %v64 = vsub.s32 0, %v63
  %v65 = vrot.slane %v60, %v64
  %v66 = vlaneseq
  %v67 = vshrl.u32 %v66, 7
  %v68 = vsub.s32 1, %v67
  %v69 = vrot.slane %v60, %v68
  %v79 = vunpack.c.l.b16 %v53
  %v80 = vunpack.c.l.b16 %v54
  %v81 = vunpack.c.l.b16 %v55
  %v82 = vunpack.c.l.b16 %v56
  %v83 = vunpack.c.l.b16 %v57
  %v84 = vunpack.c.l.b16 %v58
  %v85 = vunpack.c.l.b16 %v59
  %v86 = vpack.c.b16 %v80, %v79
  %v87 = vpack.c.b16 %v82, %v81
  %v88 = vpack.c.b16 %v84, %v83
  %v89 = vpack.c.b16 %v85, %v85
  %v92 = vunpack.c.l.b16 %v24
  %v93 = vunpack.c.h.b16 %v24
  %v94 = vunpack.c.l.b16 %v25
  %v95 = vunpack.c.h.b16 %v25
  %v96 = vpack.c.b16 %v94, %v92
  %v97 = vpack.c.b16 %v95, %v93
  %vm98 = vcmask 80896
  %v100 = vsel %vm98, %v86, 0
  %v103 = vsel %vm98, %v87, 0
  %v106 = vsel %vm98, %v88, 0
  %v109 = vsel %vm98, %v89, 0
  %vm111 = vcmask 1044480
  %v113 = vsel %vm111, %v96, 0
  %v116 = vsel %vm111, %v97, 0
  %118 = vmatprep.subr.bf16.mxu0 %v116
  %119 = vmatpush1.bf16.msra.mxu0 %v113
  %120 = vmatprep.subr.bf16.mxu0 0
  %121 = vmatpush1.bf16.msra.mxu0 0
  %122 = vmatprep.subr.bf16.mxu0 0
  %123 = vmatpush1.bf16.msra.mxu0 0
  %124 = vmatprep.subr.bf16.mxu0 0
  %125 = vmatpush1.bf16.msra.mxu0 0
  %126 = vmatprep.subr.bf16.mxu0 0
  %127 = vmatpush1.bf16.msra.mxu0 0
  %128 = vmatprep.subr.bf16.mxu0 0
  %129 = vmatpush1.bf16.msra.mxu0 0
  %130 = vmatprep.subr.bf16.mxu0 0
  %131 = vmatpush1.bf16.msra.mxu0 0
  %132 = vmatprep.subr.bf16.mxu0 0
  %133 = vmatpush1.bf16.msra.mxu0 0
  %134 = vmatprep.subr.bf16.mxu0 0
  %135 = vmatpush1.bf16.msra.mxu0 0
  %136 = vmatprep.subr.bf16.mxu0 0
  %137 = vmatpush1.bf16.msra.mxu0 0
  %138 = vmatprep.subr.bf16.mxu0 0
  %139 = vmatpush1.bf16.msra.mxu0 0
  %140 = vmatprep.subr.bf16.mxu0 0
  %141 = vmatpush1.bf16.msra.mxu0 0
  %142 = vmatprep.subr.bf16.mxu0 0
  %143 = vmatpush1.bf16.msra.mxu0 0
  %144 = vmatprep.subr.bf16.mxu0 0
  %145 = vmatpush1.bf16.msra.mxu0 0
  %146 = vmatprep.subr.bf16.mxu0 0
  %147 = vmatpush1.bf16.msra.mxu0 0
  %148 = vmatprep.subr.bf16.mxu0 0
  %149 = vmatpush1.bf16.msra.mxu0 0
  %150 = vmatprep.mubr.bf16.mxu0 0
  %151 = vmatmul.mubr.bf16.gmra.mrb[0].mxu0 %v100
  %v152 = vpop.f32.mrb[0].mxu0
  %v153 = vadd.f32 %v65, %v152
  %v154 = vpop.f32.mrb[0].mxu0
  %v155 = vadd.f32 %v69, %v154
  %v156 = vpop.f32.mrb[0].mxu0
  %v157 = vadd.f32 %v65, %v156
  %v158 = vpop.f32.mrb[0].mxu0
  %v159 = vadd.f32 %v69, %v158
  %160 = vmatprep.mubr.bf16.mxu0 0
  %161 = vmatmul.mubr.bf16.gmra.mrb[0].mxu0 %v103
  %v162 = vpop.f32.mrb[0].mxu0
  %v163 = vadd.f32 %v65, %v162
  %v164 = vpop.f32.mrb[0].mxu0
  %v165 = vadd.f32 %v69, %v164
  %v166 = vpop.f32.mrb[0].mxu0
  %v167 = vadd.f32 %v65, %v166
  %v168 = vpop.f32.mrb[0].mxu0
  %v169 = vadd.f32 %v69, %v168
  %170 = vmatprep.mubr.bf16.mxu0 0
  %171 = vmatmul.mubr.bf16.gmra.mrb[0].mxu0 %v106
  %v172 = vpop.f32.mrb[0].mxu0
  %v173 = vadd.f32 %v65, %v172
  %v174 = vpop.f32.mrb[0].mxu0
  %v175 = vadd.f32 %v69, %v174
  %v176 = vpop.f32.mrb[0].mxu0
  %v177 = vadd.f32 %v65, %v176
  %v178 = vpop.f32.mrb[0].mxu0
  %v179 = vadd.f32 %v69, %v178
  %180 = vmatprep.mubr.bf16.mxu0 0
  %181 = vmatmul.mubr.bf16.gmra.mrb[0].mxu0 %v109
  %v182 = vpop.f32.mrb[0].mxu0
  %v183 = vadd.f32 %v65, %v182
  %v184 = vpop.f32.mrb[0].mxu0
  %v185 = vadd.f32 %v69, %v184
  %v186 = vpop.f32.mrb[0].mxu0
  %v187 = vpop.f32.mrb[0].mxu0
  %188 = vdwg.mxu0
  %189 = vst [vmem:[#allocation2] sm:$0xff] %v153
  %vm190 = vcmask 523264
  %191 = vst.msk [vmem:[#allocation2 + $0x8] sm:$0xff] %vm190, %v155
  %192 = vst [vmem:[#allocation2 + $0x10] sm:$0xff] %v157
  %193 = vst.msk [vmem:[#allocation2 + $0x18] sm:$0xff] %vm190, %v159
  %194 = vst [vmem:[#allocation2 + $0x20] sm:$0xff] %v163
  %195 = vst.msk [vmem:[#allocation2 + $0x28] sm:$0xff] %vm190, %v165
  %196 = vst [vmem:[#allocation2 + $0x30] sm:$0xff] %v167
  %197 = vst.msk [vmem:[#allocation2 + $0x38] sm:$0xff] %vm190, %v169
  %198 = vst [vmem:[#allocation2 + $0x40] sm:$0xff] %v173
  %199 = vst.msk [vmem:[#allocation2 + $0x48] sm:$0xff] %vm190, %v175
  %200 = vst [vmem:[#allocation2 + $0x50] sm:$0xff] %v177
  %201 = vst.msk [vmem:[#allocation2 + $0x58] sm:$0xff] %vm190, %v179
  %202 = vst [vmem:[#allocation2 + $0x60] sm:$0xff] %v183
  %203 = vst.msk [vmem:[#allocation2 + $0x68] sm:$0xff] %vm190, %v185
  %v204 = vld [vmem:[%s5 + $0x1] sm:$0x1]
  %v205 = vlaneseq
  %v206 = vshrl.u32 %v205, 7
  %v207 = vsub.s32 0, %v206
  %v208 = vrot.slane %v204, %v207
  %v209 = vld [vmem:[%s5 + $0x5] sm:$0x1]
  %v210 = vlaneseq
  %v211 = vshrl.u32 %v210, 7
  %v212 = vsub.s32 0, %v211
  %v213 = vrot.slane %v209, %v212
  %v214 = vld [vmem:[%s5 + $0x2] sm:$0x1]
  %v215 = vlaneseq
  %v216 = vshrl.u32 %v215, 7
  %v217 = vsub.s32 0, %v216
  %v218 = vrot.slane %v214, %v217
  %v219 = vpack.c.bf16 0.0, 0.0
  %v228 = vunpack.c.l.b16 %v26
  %v229 = vunpack.c.h.b16 %v26
  %v230 = vunpack.c.l.b16 %v27
  %v231 = vunpack.c.h.b16 %v27
  %v232 = vunpack.c.l.b16 %v28
  %v233 = vunpack.c.h.b16 %v28
  %v234 = vunpack.c.l.b16 %v29
  %v235 = vunpack.c.h.b16 %v29
  %v236 = vunpack.c.l.b16 %v30
  %v237 = vunpack.c.h.b16 %v30
  %v238 = vunpack.c.l.b16 %v31
  %v239 = vunpack.c.h.b16 %v31
  %v240 = vunpack.c.l.b16 %v32
  %v241 = vunpack.c.h.b16 %v32
  %v242 = vunpack.c.l.b16 %v33
  %v243 = vunpack.c.h.b16 %v33
  %v244 = vpack.c.b16 %v230, %v228
  %v245 = vpack.c.b16 %v231, %v229
  %v246 = vpack.c.b16 %v234, %v232
  %v247 = vpack.c.b16 %v235, %v233
  %v248 = vpack.c.b16 %v238, %v236
  %v249 = vpack.c.b16 %v239, %v237
  %v250 = vpack.c.b16 %v242, %v240
  %v251 = vpack.c.b16 %v243, %v241
  %v261 = vsel %vm190, %v219, 0
  %263 = vmatprep.subr.bf16.mxu0 %v245
  %264 = vmatpush1.bf16.msra.mxu0 %v244
  %265 = vmatprep.subr.bf16.mxu0 %v247
  %266 = vmatpush1.bf16.msra.mxu0 %v246
  %267 = vmatprep.subr.bf16.mxu0 %v249
  %268 = vmatpush1.bf16.msra.mxu0 %v248
  %269 = vmatprep.subr.bf16.mxu0 %v251
  %270 = vmatpush1.bf16.msra.mxu0 %v250
  %271 = vmatprep.subr.bf16.mxu0 0
  %272 = vmatpush1.bf16.msra.mxu0 0
  %273 = vmatprep.subr.bf16.mxu0 0
  %274 = vmatpush1.bf16.msra.mxu0 0
  %275 = vmatprep.subr.bf16.mxu0 0
  %276 = vmatpush1.bf16.msra.mxu0 0
  %277 = vmatprep.subr.bf16.mxu0 0
  %278 = vmatpush1.bf16.msra.mxu0 0
  %279 = vmatprep.subr.bf16.mxu0 0
  %280 = vmatpush1.bf16.msra.mxu0 0
  %281 = vmatprep.subr.bf16.mxu0 0
  %282 = vmatpush1.bf16.msra.mxu0 0
  %283 = vmatprep.subr.bf16.mxu0 0
  %284 = vmatpush1.bf16.msra.mxu0 0
  %285 = vmatprep.subr.bf16.mxu0 0
  %286 = vmatpush1.bf16.msra.mxu0 0
  %287 = vmatprep.subr.bf16.mxu0 0
  %288 = vmatpush1.bf16.msra.mxu0 0
  %289 = vmatprep.subr.bf16.mxu0 0
  %290 = vmatpush1.bf16.msra.mxu0 0
  %291 = vmatprep.subr.bf16.mxu0 0
  %292 = vmatpush1.bf16.msra.mxu0 0
  %293 = vmatprep.subr.bf16.mxu0 0
  %294 = vmatpush1.bf16.msra.mxu0 0
  %295 = vmatprep.mubr.bf16.mxu0 0
  %296 = vmatmul.mubr.bf16.gmra.mrb[0].mxu0 %v261
  %v297 = vpop.f32.mrb[0].mxu0
  %v298 = vadd.f32 0.0, %v297
  %v299 = vpop.f32.mrb[0].mxu0
  %v300 = vadd.f32 0.0, %v299
  %v301 = vpop.f32.mrb[0].mxu0
  %v302 = vpop.f32.mrb[0].mxu0
  %303 = vdwg.mxu0
  %v304 = vld [vmem:[#allocation2] sm:$0xff]
  %s305 = scalar_lea.vmem [#allocation2], 96
  %v306 = vld [vmem:[%s305] sm:$0xff]
  %v307 = vld [vmem:[%s305 + $0x8] sm:$0xff]
  %v308 = vadd.f32 %v304, %v298
  %v309 = vmul.f32 %v308, 0.5
  %v310 = vtanh.pop %v309
  %v311 = vadd.f32 %v310, 1.0
  %v312 = vmul.f32 %v311, 0.5
  %314 = vrot.lane.b32.xlu0 %v208, 64
  %v315 = vpop.permute.xlu0 %314
  %v317 = vadd.f32 %v298, %v315
  %319 = vrot.lane.b32.xlu0 %v317, 64
  %v320 = vpop.permute.xlu0 %319
  %v322 = vmul.f32 %v312, %v320
  %324 = vrot.lane.b32.xlu0 %v322, 64
  %v325 = vpop.permute.xlu0 %324
  %v327 = vadd.f32 %v304, %v325
  %v328 = vtanh.pop %v327
  %v329 = vsub.f32 1.0, %v312
  %331 = vrot.lane.b32.xlu0 %v328, 96
  %v332 = vpop.permute.xlu0 %331
  %v334 = vmul.f32 %v329, %v332
  %v335 = vmul.f32 %v312, 0.0
  %v336 = vadd.f32 %v334, %v335
  %v337 = vadd.f32 %v306, %v298
  %v338 = vadd.f32 %v307, %v300
  %v339 = vmul.f32 %v337, 0.5
  %v340 = vmul.f32 %v338, 0.5
  %v341 = vtanh.pop %v339
  %v342 = vtanh.pop %v340
  %v343 = vadd.f32 %v341, 1.0
  %v344 = vadd.f32 %v342, 1.0
  %v345 = vmul.f32 %v343, 0.5
  %v346 = vmul.f32 %v344, 0.5
  %v347 = vadd.f32 %v300, %v208
  %349 = vrot.lane.b32.xlu0 %v347, 64
  %v350 = vpop.permute.xlu0 %349
  %v352 = vmul.f32 %v345, %v350
  %354 = vrot.lane.b32.xlu0 %v352, 64
  %v355 = vpop.permute.xlu0 %354
  %v357 = vadd.f32 %v307, %v355
  %v358 = vtanh.pop %v357
  %v359 = vsub.f32 1.0, %v346
  %361 = vrot.lane.b32.xlu0 %v358, 96
  %v362 = vpop.permute.xlu0 %361
  %v364 = vmul.f32 %v359, %v362
  %v365 = vmul.f32 %v346, 0.0
  %v366 = vadd.f32 %v364, %v365
  %368 = vrot.lane.b32.xlu0 %v336, 96
  %v369 = vpop.permute.xlu0 %368
  %vm371 = vcmask 261120
  %372 = vst.msk [vmem:[#allocation3] sm:$0xff] %vm371, %v369
  %s373 = scalar_lea.vmem [#allocation4], 48
  %374 = vst.msk [vmem:[%s373] sm:$0xff] %vm371, %v366
  %376 = vrot.lane.b32.xlu0 %v366, 32
  %v377 = vpop.permute.xlu0 %376
  %v379 = vsel %vm371, %v369, %v377
  %v380 = vpack.c.bf16 %v379, %v379
  %v382 = vsel %vm190, %v380, 0
  %384 = vmatprep.subr.bf16.mxu0 %v245
  %385 = vmatpush1.bf16.msra.mxu0 %v244
  %386 = vmatprep.subr.bf16.mxu0 %v247
  %387 = vmatpush1.bf16.msra.mxu0 %v246
  %388 = vmatprep.subr.bf16.mxu0 %v249
  %389 = vmatpush1.bf16.msra.mxu0 %v248
  %390 = vmatprep.subr.bf16.mxu0 %v251
  %391 = vmatpush1.bf16.msra.mxu0 %v250
  %392 = vmatprep.subr.bf16.mxu0 0
  %393 = vmatpush1.bf16.msra.mxu0 0
  %394 = vmatprep.subr.bf16.mxu0 0
  %395 = vmatpush1.bf16.msra.mxu0 0
  %396 = vmatprep.subr.bf16.mxu0 0
  %397 = vmatpush1.bf16.msra.mxu0 0
  %398 = vmatprep.subr.bf16.mxu0 0
  %399 = vmatpush1.bf16.msra.mxu0 0
  %400 = vmatprep.subr.bf16.mxu0 0
  %401 = vmatpush1.bf16.msra.mxu0 0
  %402 = vmatprep.subr.bf16.mxu0 0
  %403 = vmatpush1.bf16.msra.mxu0 0
  %404 = vmatprep.subr.bf16.mxu0 0
  %405 = vmatpush1.bf16.msra.mxu0 0
  %406 = vmatprep.subr.bf16.mxu0 0
  %407 = vmatpush1.bf16.msra.mxu0 0
  %408 = vmatprep.subr.bf16.mxu0 0
  %409 = vmatpush1.bf16.msra.mxu0 0
  %410 = vmatprep.subr.bf16.mxu0 0
  %411 = vmatpush1.bf16.msra.mxu0 0
  %412 = vmatprep.subr.bf16.mxu0 0
  %413 = vmatpush1.bf16.msra.mxu0 0
  %414 = vmatprep.subr.bf16.mxu0 0
  %415 = vmatpush1.bf16.msra.mxu0 0
  %416 = vmatprep.mubr.bf16.mxu0 0
  %417 = vmatmul.mubr.bf16.gmra.mrb[0].mxu0 %v382
  %v418 = vpop.f32.mrb[0].mxu0
  %v419 = vadd.f32 0.0, %v418
  %v420 = vpop.f32.mrb[0].mxu0
  %v421 = vadd.f32 0.0, %v420
  %v422 = vpop.f32.mrb[0].mxu0
  %v423 = vpop.f32.mrb[0].mxu0
  %424 = vdwg.mxu0
  %s425 = scalar_lea.vmem [#allocation2], 16
  %v426 = vld [vmem:[%s425] sm:$0xff]
  %s427 = scalar_lea.vmem [#allocation2], 80
  %v428 = vld [vmem:[%s427] sm:$0xff]
  %v429 = vld [vmem:[%s427 + $0x8] sm:$0xff]
  %v430 = vadd.f32 %v426, %v419
  %v431 = vmul.f32 %v430, 0.5
  %v432 = vtanh.pop %v431
  %v433 = vadd.f32 %v432, 1.0
  %v434 = vmul.f32 %v433, 0.5
  %v435 = vadd.f32 %v419, %v315
  %437 = vrot.lane.b32.xlu0 %v435, 64
  %v438 = vpop.permute.xlu0 %437
  %v440 = vmul.f32 %v434, %v438
  %442 = vrot.lane.b32.xlu0 %v440, 64
  %v443 = vpop.permute.xlu0 %442
  %v445 = vadd.f32 %v426, %v443
  %v446 = vtanh.pop %v445
  %v447 = vsub.f32 1.0, %v434
  %449 = vrot.lane.b32.xlu0 %v446, 96
  %v450 = vpop.permute.xlu0 %449
  %v452 = vmul.f32 %v447, %v450
  %v453 = vmul.f32 %v434, %v336
  %v454 = vadd.f32 %v452, %v453
  %v455 = vadd.f32 %v428, %v419
  %v456 = vadd.f32 %v429, %v421
  %v457 = vmul.f32 %v455, 0.5
  %v458 = vmul.f32 %v456, 0.5
  %v459 = vtanh.pop %v457
  %v460 = vtanh.pop %v458
  %v461 = vadd.f32 %v459, 1.0
  %v462 = vadd.f32 %v460, 1.0
  %v463 = vmul.f32 %v461, 0.5
  %v464 = vmul.f32 %v462, 0.5
  %v465 = vadd.f32 %v421, %v208
  %467 = vrot.lane.b32.xlu0 %v465, 64
  %v468 = vpop.permute.xlu0 %467
  %v470 = vmul.f32 %v463, %v468
  %472 = vrot.lane.b32.xlu0 %v470, 64
  %v473 = vpop.permute.xlu0 %472
  %v475 = vadd.f32 %v429, %v473
  %v476 = vtanh.pop %v475
  %v477 = vsub.f32 1.0, %v464
  %479 = vrot.lane.b32.xlu0 %v476, 96
  %v480 = vpop.permute.xlu0 %479
  %v482 = vmul.f32 %v477, %v480
  %v483 = vmul.f32 %v464, %v366
  %v484 = vadd.f32 %v482, %v483
  %486 = vrot.lane.b32.xlu0 %v454, 96
  %v487 = vpop.permute.xlu0 %486
  %s489 = scalar_lea.vmem [#allocation3], 8
  %490 = vst.msk [vmem:[%s489] sm:$0xff] %vm371, %v487
  %s491 = scalar_lea.vmem [#allocation4], 40
  %492 = vst.msk [vmem:[%s491] sm:$0xff] %vm371, %v484
  %494 = vrot.lane.b32.xlu0 %v484, 32
  %v495 = vpop.permute.xlu0 %494
  %v497 = vsel %vm371, %v487, %v495
  %v498 = vpack.c.bf16 %v497, %v497
  %v500 = vsel %vm190, %v498, 0
  %502 = vmatprep.subr.bf16.mxu0 %v245
  %503 = vmatpush1.bf16.msra.mxu0 %v244
  %504 = vmatprep.subr.bf16.mxu0 %v247
  %505 = vmatpush1.bf16.msra.mxu0 %v246
  %506 = vmatprep.subr.bf16.mxu0 %v249
  %507 = vmatpush1.bf16.msra.mxu0 %v248
  %508 = vmatprep.subr.bf16.mxu0 %v251
  %509 = vmatpush1.bf16.msra.mxu0 %v250
  %510 = vmatprep.subr.bf16.mxu0 0
  %511 = vmatpush1.bf16.msra.mxu0 0
  %512 = vmatprep.subr.bf16.mxu0 0
  %513 = vmatpush1.bf16.msra.mxu0 0
  %514 = vmatprep.subr.bf16.mxu0 0
  %515 = vmatpush1.bf16.msra.mxu0 0
  %516 = vmatprep.subr.bf16.mxu0 0
  %517 = vmatpush1.bf16.msra.mxu0 0
  %518 = vmatprep.subr.bf16.mxu0 0
  %519 = vmatpush1.bf16.msra.mxu0 0
  %520 = vmatprep.subr.bf16.mxu0 0
  %521 = vmatpush1.bf16.msra.mxu0 0
  %522 = vmatprep.subr.bf16.mxu0 0
  %523 = vmatpush1.bf16.msra.mxu0 0
  %524 = vmatprep.subr.bf16.mxu0 0
  %525 = vmatpush1.bf16.msra.mxu0 0
  %526 = vmatprep.subr.bf16.mxu0 0
  %527 = vmatpush1.bf16.msra.mxu0 0
  %528 = vmatprep.subr.bf16.mxu0 0
  %529 = vmatpush1.bf16.msra.mxu0 0
  %530 = vmatprep.subr.bf16.mxu0 0
  %531 = vmatpush1.bf16.msra.mxu0 0
  %532 = vmatprep.subr.bf16.mxu0 0
  %533 = vmatpush1.bf16.msra.mxu0 0
  %534 = vmatprep.mubr.bf16.mxu0 0
  %535 = vmatmul.mubr.bf16.gmra.mrb[0].mxu0 %v500
  %v536 = vpop.f32.mrb[0].mxu0
  %v537 = vadd.f32 0.0, %v536
  %v538 = vpop.f32.mrb[0].mxu0
  %v539 = vadd.f32 0.0, %v538
  %v540 = vpop.f32.mrb[0].mxu0
  %v541 = vpop.f32.mrb[0].mxu0
  %542 = vdwg.mxu0
  %s543 = scalar_lea.vmem [#allocation2], 32
  %v544 = vld [vmem:[%s543] sm:$0xff]
  %s545 = scalar_lea.vmem [#allocation2], 64
  %v546 = vld [vmem:[%s545] sm:$0xff]
  %v547 = vld [vmem:[%s545 + $0x8] sm:$0xff]
  %v548 = vadd.f32 %v544, %v537
  %v549 = vmul.f32 %v548, 0.5
  %v550 = vtanh.pop %v549
  %v551 = vadd.f32 %v550, 1.0
  %v552 = vmul.f32 %v551, 0.5
  %v553 = vadd.f32 %v537, %v315
  %555 = vrot.lane.b32.xlu0 %v553, 64
  %v556 = vpop.permute.xlu0 %555
  %v558 = vmul.f32 %v552, %v556
  %560 = vrot.lane.b32.xlu0 %v558, 64
  %v561 = vpop.permute.xlu0 %560
  %v563 = vadd.f32 %v544, %v561
  %v564 = vtanh.pop %v563
  %v565 = vsub.f32 1.0, %v552
  %567 = vrot.lane.b32.xlu0 %v564, 96
  %v568 = vpop.permute.xlu0 %567
  %v570 = vmul.f32 %v565, %v568
  %v571 = vmul.f32 %v552, %v454
  %v572 = vadd.f32 %v570, %v571
  %v573 = vadd.f32 %v546, %v537
  %v574 = vadd.f32 %v547, %v539
  %v575 = vmul.f32 %v573, 0.5
  %v576 = vmul.f32 %v574, 0.5
  %v577 = vtanh.pop %v575
  %v578 = vtanh.pop %v576
  %v579 = vadd.f32 %v577, 1.0
  %v580 = vadd.f32 %v578, 1.0
  %v581 = vmul.f32 %v579, 0.5
  %v582 = vmul.f32 %v580, 0.5
  %v583 = vadd.f32 %v539, %v208
  %585 = vrot.lane.b32.xlu0 %v583, 64
  %v586 = vpop.permute.xlu0 %585
  %v588 = vmul.f32 %v581, %v586
  %590 = vrot.lane.b32.xlu0 %v588, 64
  %v591 = vpop.permute.xlu0 %590
  %v593 = vadd.f32 %v547, %v591
  %v594 = vtanh.pop %v593
  %v595 = vsub.f32 1.0, %v582
  %597 = vrot.lane.b32.xlu0 %v594, 96
  %v598 = vpop.permute.xlu0 %597
  %v600 = vmul.f32 %v595, %v598
  %v601 = vmul.f32 %v582, %v484
  %v602 = vadd.f32 %v600, %v601
  %604 = vrot.lane.b32.xlu0 %v572, 96
  %v605 = vpop.permute.xlu0 %604
  %s607 = scalar_lea.vmem [#allocation3], 16
  %608 = vst.msk [vmem:[%s607] sm:$0xff] %vm371, %v605
  %s609 = scalar_lea.vmem [#allocation4], 32
  %610 = vst.msk [vmem:[%s609] sm:$0xff] %vm371, %v602
  %612 = vrot.lane.b32.xlu0 %v602, 32
  %v613 = vpop.permute.xlu0 %612
  %v615 = vsel %vm371, %v605, %v613
  %v616 = vpack.c.bf16 %v615, %v615
  %v618 = vsel %vm190, %v616, 0
  %620 = vmatprep.subr.bf16.mxu0 %v245
  %621 = vmatpush1.bf16.msra.mxu0 %v244
  %622 = vmatprep.subr.bf16.mxu0 %v247
  %623 = vmatpush1.bf16.msra.mxu0 %v246
  %624 = vmatprep.subr.bf16.mxu0 %v249
  %625 = vmatpush1.bf16.msra.mxu0 %v248
  %626 = vmatprep.subr.bf16.mxu0 %v251
  %627 = vmatpush1.bf16.msra.mxu0 %v250
  %628 = vmatprep.subr.bf16.mxu0 0
  %629 = vmatpush1.bf16.msra.mxu0 0
  %630 = vmatprep.subr.bf16.mxu0 0
  %631 = vmatpush1.bf16.msra.mxu0 0
  %632 = vmatprep.subr.bf16.mxu0 0
  %633 = vmatpush1.bf16.msra.mxu0 0
  %634 = vmatprep.subr.bf16.mxu0 0
  %635 = vmatpush1.bf16.msra.mxu0 0
  %636 = vmatprep.subr.bf16.mxu0 0
  %637 = vmatpush1.bf16.msra.mxu0 0
  %638 = vmatprep.subr.bf16.mxu0 0
  %639 = vmatpush1.bf16.msra.mxu0 0
  %640 = vmatprep.subr.bf16.mxu0 0
  %641 = vmatpush1.bf16.msra.mxu0 0
  %642 = vmatprep.subr.bf16.mxu0 0
  %643 = vmatpush1.bf16.msra.mxu0 0
  %644 = vmatprep.subr.bf16.mxu0 0
  %645 = vmatpush1.bf16.msra.mxu0 0
  %646 = vmatprep.subr.bf16.mxu0 0
  %647 = vmatpush1.bf16.msra.mxu0 0
  %648 = vmatprep.subr.bf16.mxu0 0
  %649 = vmatpush1.bf16.msra.mxu0 0
  %650 = vmatprep.subr.bf16.mxu0 0
  %651 = vmatpush1.bf16.msra.mxu0 0
  %652 = vmatprep.mubr.bf16.mxu0 0
  %653 = vmatmul.mubr.bf16.gmra.mrb[0].mxu0 %v618
  %v654 = vpop.f32.mrb[0].mxu0
  %v655 = vadd.f32 0.0, %v654
  %v656 = vpop.f32.mrb[0].mxu0
  %v657 = vadd.f32 0.0, %v656
  %v658 = vpop.f32.mrb[0].mxu0
  %v659 = vpop.f32.mrb[0].mxu0
  %660 = vdwg.mxu0
  %s661 = scalar_lea.vmem [#allocation2], 48
  %v662 = vld [vmem:[%s661] sm:$0xff]
  %v663 = vld [vmem:[%s661 + $0x8] sm:$0xff]
  %v664 = vadd.f32 %v662, %v655
  %v665 = vmul.f32 %v664, 0.5
  %v666 = vtanh.pop %v665
  %v667 = vadd.f32 %v666, 1.0
  %v668 = vmul.f32 %v667, 0.5
  %v669 = vadd.f32 %v655, %v315
  %671 = vrot.lane.b32.xlu0 %v669, 64
  %v672 = vpop.permute.xlu0 %671
  %v674 = vmul.f32 %v668, %v672
  %676 = vrot.lane.b32.xlu0 %v674, 64
  %v677 = vpop.permute.xlu0 %676
  %v679 = vadd.f32 %v662, %v677
  %v680 = vtanh.pop %v679
  %v681 = vsub.f32 1.0, %v668
  %683 = vrot.lane.b32.xlu0 %v680, 96
  %v684 = vpop.permute.xlu0 %683
  %v686 = vmul.f32 %v681, %v684
  %v687 = vmul.f32 %v668, %v572
  %v688 = vadd.f32 %v686, %v687
  %v689 = vadd.f32 %v663, %v657
  %v690 = vmul.f32 %v689, 0.5
  %v691 = vtanh.pop %v690
  %v692 = vadd.f32 %v691, 1.0
  %v693 = vmul.f32 %v692, 0.5
  %v694 = vadd.f32 %v657, %v208
  %696 = vrot.lane.b32.xlu0 %v694, 64
  %v697 = vpop.permute.xlu0 %696
  %v699 = vmul.f32 %v668, %v697
  %701 = vrot.lane.b32.xlu0 %v699, 64
  %v702 = vpop.permute.xlu0 %701
  %v704 = vadd.f32 %v663, %v702
  %v705 = vtanh.pop %v704
  %v706 = vsub.f32 1.0, %v693
  %708 = vrot.lane.b32.xlu0 %v705, 96
  %v709 = vpop.permute.xlu0 %708
  %v711 = vmul.f32 %v706, %v709
  %v712 = vmul.f32 %v693, %v602
  %v713 = vadd.f32 %v711, %v712
  %715 = vrot.lane.b32.xlu0 %v688, 96
  %v716 = vpop.permute.xlu0 %715
  %s718 = scalar_lea.vmem [#allocation3], 24
  %719 = vst.msk [vmem:[%s718] sm:$0xff] %vm371, %v716
  %s720 = scalar_lea.vmem [#allocation4], 24
  %721 = vst.msk [vmem:[%s720] sm:$0xff] %vm371, %v713
  %723 = vrot.lane.b32.xlu0 %v713, 32
  %v724 = vpop.permute.xlu0 %723
  %v726 = vsel %vm371, %v716, %v724
  %v727 = vpack.c.bf16 %v726, %v726
  %v729 = vsel %vm190, %v727, 0
  %731 = vmatprep.subr.bf16.mxu0 %v245
  %732 = vmatpush1.bf16.msra.mxu0 %v244
  %733 = vmatprep.subr.bf16.mxu0 %v247
  %734 = vmatpush1.bf16.msra.mxu0 %v246
  %735 = vmatprep.subr.bf16.mxu0 %v249
  %736 = vmatpush1.bf16.msra.mxu0 %v248
  %737 = vmatprep.subr.bf16.mxu0 %v251
  %738 = vmatpush1.bf16.msra.mxu0 %v250
  %739 = vmatprep.subr.bf16.mxu0 0
  %740 = vmatpush1.bf16.msra.mxu0 0
  %741 = vmatprep.subr.bf16.mxu0 0
  %742 = vmatpush1.bf16.msra.mxu0 0
  %743 = vmatprep.subr.bf16.mxu0 0
  %744 = vmatpush1.bf16.msra.mxu0 0
  %745 = vmatprep.subr.bf16.mxu0 0
  %746 = vmatpush1.bf16.msra.mxu0 0
  %747 = vmatprep.subr.bf16.mxu0 0
  %748 = vmatpush1.bf16.msra.mxu0 0
  %749 = vmatprep.subr.bf16.mxu0 0
  %750 = vmatpush1.bf16.msra.mxu0 0
  %751 = vmatprep.subr.bf16.mxu0 0
  %752 = vmatpush1.bf16.msra.mxu0 0
  %753 = vmatprep.subr.bf16.mxu0 0
  %754 = vmatpush1.bf16.msra.mxu0 0
  %755 = vmatprep.subr.bf16.mxu0 0
  %756 = vmatpush1.bf16.msra.mxu0 0
  %757 = vmatprep.subr.bf16.mxu0 0
  %758 = vmatpush1.bf16.msra.mxu0 0
  %759 = vmatprep.subr.bf16.mxu0 0
  %760 = vmatpush1.bf16.msra.mxu0 0
  %761 = vmatprep.subr.bf16.mxu0 0
  %762 = vmatpush1.bf16.msra.mxu0 0
  %763 = vmatprep.mubr.bf16.mxu0 0
  %764 = vmatmul.mubr.bf16.gmra.mrb[0].mxu0 %v729
  %v765 = vpop.f32.mrb[0].mxu0
  %v766 = vadd.f32 0.0, %v765
  %v767 = vpop.f32.mrb[0].mxu0
  %v768 = vadd.f32 0.0, %v767
  %v769 = vpop.f32.mrb[0].mxu0
  %v770 = vpop.f32.mrb[0].mxu0
  %771 = vdwg.mxu0
  %v772 = vld [vmem:[%s545] sm:$0xff]
  %v773 = vld [vmem:[%s543] sm:$0xff]
  %v774 = vld [vmem:[%s543 + $0x8] sm:$0xff]
  %v775 = vadd.f32 %v772, %v766
  %v776 = vmul.f32 %v775, 0.5
  %v777 = vtanh.pop %v776
  %v778 = vadd.f32 %v777, 1.0
  %v779 = vmul.f32 %v778, 0.5
  %v780 = vadd.f32 %v766, %v315
  %782 = vrot.lane.b32.xlu0 %v780, 64
  %v783 = vpop.permute.xlu0 %782
  %v785 = vmul.f32 %v779, %v783
  %787 = vrot.lane.b32.xlu0 %v785, 64
  %v788 = vpop.permute.xlu0 %787
  %v790 = vadd.f32 %v772, %v788
  %v791 = vtanh.pop %v790
  %v792 = vsub.f32 1.0, %v779
  %794 = vrot.lane.b32.xlu0 %v791, 96
  %v795 = vpop.permute.xlu0 %794
  %v797 = vmul.f32 %v792, %v795
  %v798 = vmul.f32 %v779, %v688
  %v799 = vadd.f32 %v797, %v798
  %v800 = vadd.f32 %v773, %v766
  %v801 = vadd.f32 %v774, %v768
  %v802 = vmul.f32 %v800, 0.5
  %v803 = vmul.f32 %v801, 0.5
  %v804 = vtanh.pop %v802
  %v805 = vtanh.pop %v803
  %v806 = vadd.f32 %v804, 1.0
  %v807 = vadd.f32 %v805, 1.0
  %v808 = vmul.f32 %v806, 0.5
  %v809 = vmul.f32 %v807, 0.5
  %v810 = vadd.f32 %v768, %v208
  %812 = vrot.lane.b32.xlu0 %v810, 64
  %v813 = vpop.permute.xlu0 %812
  %v815 = vmul.f32 %v808, %v813
  %817 = vrot.lane.b32.xlu0 %v815, 64
  %v818 = vpop.permute.xlu0 %817
  %v820 = vadd.f32 %v774, %v818
  %v821 = vtanh.pop %v820
  %v822 = vsub.f32 1.0, %v809
  %824 = vrot.lane.b32.xlu0 %v821, 96
  %v825 = vpop.permute.xlu0 %824
  %v827 = vmul.f32 %v822, %v825
  %v828 = vmul.f32 %v809, %v713
  %v829 = vadd.f32 %v827, %v828
  %831 = vrot.lane.b32.xlu0 %v799, 96
  %v832 = vpop.permute.xlu0 %831
  %s834 = scalar_lea.vmem [#allocation3], 32
  %835 = vst.msk [vmem:[%s834] sm:$0xff] %vm371, %v832
  %s836 = scalar_lea.vmem [#allocation4], 16
  %837 = vst.msk [vmem:[%s836] sm:$0xff] %vm371, %v829
  %839 = vrot.lane.b32.xlu0 %v829, 32
  %v840 = vpop.permute.xlu0 %839
  %v842 = vsel %vm371, %v832, %v840
  %v843 = vpack.c.bf16 %v842, %v842
  %v845 = vsel %vm190, %v843, 0
  %847 = vmatprep.subr.bf16.mxu0 %v245
  %848 = vmatpush1.bf16.msra.mxu0 %v244
  %849 = vmatprep.subr.bf16.mxu0 %v247
  %850 = vmatpush1.bf16.msra.mxu0 %v246
  %851 = vmatprep.subr.bf16.mxu0 %v249
  %852 = vmatpush1.bf16.msra.mxu0 %v248
  %853 = vmatprep.subr.bf16.mxu0 %v251
  %854 = vmatpush1.bf16.msra.mxu0 %v250
  %855 = vmatprep.subr.bf16.mxu0 0
  %856 = vmatpush1.bf16.msra.mxu0 0
  %857 = vmatprep.subr.bf16.mxu0 0
  %858 = vmatpush1.bf16.msra.mxu0 0
  %859 = vmatprep.subr.bf16.mxu0 0
  %860 = vmatpush1.bf16.msra.mxu0 0
  %861 = vmatprep.subr.bf16.mxu0 0
  %862 = vmatpush1.bf16.msra.mxu0 0
  %863 = vmatprep.subr.bf16.mxu0 0
  %864 = vmatpush1.bf16.msra.mxu0 0
  %865 = vmatprep.subr.bf16.mxu0 0
  %866 = vmatpush1.bf16.msra.mxu0 0
  %867 = vmatprep.subr.bf16.mxu0 0
  %868 = vmatpush1.bf16.msra.mxu0 0
  %869 = vmatprep.subr.bf16.mxu0 0
  %870 = vmatpush1.bf16.msra.mxu0 0
  %871 = vmatprep.subr.bf16.mxu0 0
  %872 = vmatpush1.bf16.msra.mxu0 0
  %873 = vmatprep.subr.bf16.mxu0 0
  %874 = vmatpush1.bf16.msra.mxu0 0
  %875 = vmatprep.subr.bf16.mxu0 0
  %876 = vmatpush1.bf16.msra.mxu0 0
  %877 = vmatprep.subr.bf16.mxu0 0
  %878 = vmatpush1.bf16.msra.mxu0 0
  %879 = vmatprep.mubr.bf16.mxu0 0
  %880 = vmatmul.mubr.bf16.gmra.mrb[0].mxu0 %v845
  %v881 = vpop.f32.mrb[0].mxu0
  %v882 = vadd.f32 0.0, %v881
  %v883 = vpop.f32.mrb[0].mxu0
  %v884 = vadd.f32 0.0, %v883
  %v885 = vpop.f32.mrb[0].mxu0
  %v886 = vpop.f32.mrb[0].mxu0
  %887 = vdwg.mxu0
  %v888 = vld [vmem:[%s427] sm:$0xff]
  %v889 = vld [vmem:[%s425] sm:$0xff]
  %v890 = vld [vmem:[%s425 + $0x8] sm:$0xff]
  %v891 = vadd.f32 %v888, %v882
  %v892 = vmul.f32 %v891, 0.5
  %v893 = vtanh.pop %v892
  %v894 = vadd.f32 %v893, 1.0
  %v895 = vmul.f32 %v894, 0.5
  %v896 = vadd.f32 %v882, %v315
  %898 = vrot.lane.b32.xlu0 %v896, 64
  %v899 = vpop.permute.xlu0 %898
  %v901 = vmul.f32 %v895, %v899
  %903 = vrot.lane.b32.xlu0 %v901, 64
  %v904 = vpop.permute.xlu0 %903
  %v906 = vadd.f32 %v888, %v904
  %v907 = vtanh.pop %v906
  %v908 = vsub.f32 1.0, %v895
  %910 = vrot.lane.b32.xlu0 %v907, 96
  %v911 = vpop.permute.xlu0 %910
  %v913 = vmul.f32 %v908, %v911
  %v914 = vmul.f32 %v895, %v799
  %v915 = vadd.f32 %v913, %v914
  %v916 = vadd.f32 %v889, %v882
  %v917 = vadd.f32 %v890, %v884
  %v918 = vmul.f32 %v916, 0.5
  %v919 = vmul.f32 %v917, 0.5
  %v920 = vtanh.pop %v918
  %v921 = vtanh.pop %v919
  %v922 = vadd.f32 %v920, 1.0
  %v923 = vadd.f32 %v921, 1.0
  %v924 = vmul.f32 %v922, 0.5
  %v925 = vmul.f32 %v923, 0.5
  %v926 = vadd.f32 %v884, %v208
  %928 = vrot.lane.b32.xlu0 %v926, 64
  %v929 = vpop.permute.xlu0 %928
  %v931 = vmul.f32 %v924, %v929
  %933 = vrot.lane.b32.xlu0 %v931, 64
  %v934 = vpop.permute.xlu0 %933
  %v936 = vadd.f32 %v890, %v934
  %v937 = vtanh.pop %v936
  %v938 = vsub.f32 1.0, %v925
  %940 = vrot.lane.b32.xlu0 %v937, 96
  %v941 = vpop.permute.xlu0 %940
  %v943 = vmul.f32 %v938, %v941
  %v944 = vmul.f32 %v925, %v829
  %v945 = vadd.f32 %v943, %v944
  %947 = vrot.lane.b32.xlu0 %v915, 96
  %v948 = vpop.permute.xlu0 %947
  %s950 = scalar_lea.vmem [#allocation3], 40
  %951 = vst.msk [vmem:[%s950] sm:$0xff] %vm371, %v948
  %s952 = scalar_lea.vmem [#allocation4], 8
  %953 = vst.msk [vmem:[%s952] sm:$0xff] %vm371, %v945
  %955 = vrot.lane.b32.xlu0 %v945, 32
  %v956 = vpop.permute.xlu0 %955
  %v958 = vsel %vm371, %v948, %v956
  %v959 = vpack.c.bf16 %v958, %v958
  %v961 = vsel %vm190, %v959, 0
  %963 = vmatprep.subr.bf16.mxu0 %v245
  %964 = vmatpush1.bf16.msra.mxu0 %v244
  %965 = vmatprep.subr.bf16.mxu0 %v247
  %966 = vmatpush1.bf16.msra.mxu0 %v246
  %967 = vmatprep.subr.bf16.mxu0 %v249
  %968 = vmatpush1.bf16.msra.mxu0 %v248
  %969 = vmatprep.subr.bf16.mxu0 %v251
  %970 = vmatpush1.bf16.msra.mxu0 %v250
  %971 = vmatprep.subr.bf16.mxu0 0
  %972 = vmatpush1.bf16.msra.mxu0 0
  %973 = vmatprep.subr.bf16.mxu0 0
  %974 = vmatpush1.bf16.msra.mxu0 0
  %975 = vmatprep.subr.bf16.mxu0 0
  %976 = vmatpush1.bf16.msra.mxu0 0
  %977 = vmatprep.subr.bf16.mxu0 0
  %978 = vmatpush1.bf16.msra.mxu0 0
  %979 = vmatprep.subr.bf16.mxu0 0
  %980 = vmatpush1.bf16.msra.mxu0 0
  %981 = vmatprep.subr.bf16.mxu0 0
  %982 = vmatpush1.bf16.msra.mxu0 0
  %983 = vmatprep.subr.bf16.mxu0 0
  %984 = vmatpush1.bf16.msra.mxu0 0
  %985 = vmatprep.subr.bf16.mxu0 0
  %986 = vmatpush1.bf16.msra.mxu0 0
  %987 = vmatprep.subr.bf16.mxu0 0
  %988 = vmatpush1.bf16.msra.mxu0 0
  %989 = vmatprep.subr.bf16.mxu0 0
  %990 = vmatpush1.bf16.msra.mxu0 0
  %991 = vmatprep.subr.bf16.mxu0 0
  %992 = vmatpush1.bf16.msra.mxu0 0
  %993 = vmatprep.subr.bf16.mxu0 0
  %994 = vmatpush1.bf16.msra.mxu0 0
  %995 = vmatprep.mubr.bf16.mxu0 0
  %996 = vmatmul.mubr.bf16.gmra.mrb[0].mxu0 %v961
  %v997 = vpop.f32.mrb[0].mxu0
  %v998 = vadd.f32 0.0, %v997
  %v999 = vpop.f32.mrb[0].mxu0
  %v1000 = vadd.f32 0.0, %v999
  %v1001 = vpop.f32.mrb[0].mxu0
  %v1002 = vpop.f32.mrb[0].mxu0
  %1003 = vdwg.mxu0
  %v1004 = vld [vmem:[%s305] sm:$0xff]
  %v1005 = vld [vmem:[#allocation2] sm:$0xff]
  %v1006 = vld [vmem:[#allocation2 + $0x8] sm:$0xff]
  %v1007 = vadd.f32 %v1004, %v998
  %v1008 = vmul.f32 %v1007, 0.5
  %v1009 = vtanh.pop %v1008
  %v1010 = vadd.f32 %v1009, 1.0
  %v1011 = vmul.f32 %v1010, 0.5
  %v1012 = vadd.f32 %v998, %v315
  %1014 = vrot.lane.b32.xlu0 %v1012, 64
  %v1015 = vpop.permute.xlu0 %1014
  %v1017 = vmul.f32 %v1011, %v1015
  %1019 = vrot.lane.b32.xlu0 %v1017, 64
  %v1020 = vpop.permute.xlu0 %1019
  %v1022 = vadd.f32 %v1004, %v1020
  %v1023 = vtanh.pop %v1022
  %v1024 = vsub.f32 1.0, %v1011
  %1026 = vrot.lane.b32.xlu0 %v1023, 96
  %v1027 = vpop.permute.xlu0 %1026
  %v1029 = vmul.f32 %v1024, %v1027
  %v1030 = vmul.f32 %v1011, %v915
  %v1031 = vadd.f32 %v1029, %v1030
  %v1032 = vadd.f32 %v1005, %v998
  %v1033 = vadd.f32 %v1006, %v1000
  %v1034 = vmul.f32 %v1032, 0.5
  %v1035 = vmul.f32 %v1033, 0.5
  %v1036 = vtanh.pop %v1034
  %v1037 = vtanh.pop %v1035
  %v1038 = vadd.f32 %v1036, 1.0
  %v1039 = vadd.f32 %v1037, 1.0
  %v1040 = vmul.f32 %v1038, 0.5
  %v1041 = vmul.f32 %v1039, 0.5
  %v1042 = vadd.f32 %v1000, %v208
  %1044 = vrot.lane.b32.xlu0 %v1042, 64
  %v1045 = vpop.permute.xlu0 %1044
  %v1047 = vmul.f32 %v1040, %v1045
  %1049 = vrot.lane.b32.xlu0 %v1047, 64
  %v1050 = vpop.permute.xlu0 %1049
  %v1052 = vadd.f32 %v1006, %v1050
  %v1053 = vtanh.pop %v1052
  %v1054 = vsub.f32 1.0, %v1041
  %1056 = vrot.lane.b32.xlu0 %v1053, 96
  %v1057 = vpop.permute.xlu0 %1056
  %v1059 = vmul.f32 %v1054, %v1057
  %v1060 = vmul.f32 %v1041, %v945
  %v1061 = vadd.f32 %v1059, %v1060
  %1063 = vrot.lane.b32.xlu0 %v1031, 96
  %v1064 = vpop.permute.xlu0 %1063
  %s1066 = scalar_lea.vmem [#allocation3], 48
  %1067 = vst.msk [vmem:[%s1066] sm:$0xff] %vm371, %v1064
  %1068 = vst.msk [vmem:[#allocation4] sm:$0xff] %vm371, %v1061
  %v1069 = vld [vmem:[#allocation3] sm:$0xff]
  %v1070 = vld [vmem:[#allocation3 + $0x8] sm:$0xff]
  %v1071 = vld [vmem:[#allocation3 + $0x10] sm:$0xff]
  %v1072 = vld [vmem:[#allocation3 + $0x18] sm:$0xff]
  %v1073 = vld [vmem:[#allocation3 + $0x20] sm:$0xff]
  %v1074 = vld [vmem:[#allocation3 + $0x28] sm:$0xff]
  %v1075 = vld [vmem:[#allocation3 + $0x30] sm:$0xff]
  %v1076 = vld [vmem:[#allocation4] sm:$0xff]
  %v1077 = vld [vmem:[#allocation4 + $0x8] sm:$0xff]
  %v1078 = vld [vmem:[#allocation4 + $0x10] sm:$0xff]
  %v1079 = vld [vmem:[#allocation4 + $0x18] sm:$0xff]
  %v1080 = vld [vmem:[#allocation4 + $0x20] sm:$0xff]
  %v1081 = vld [vmem:[#allocation4 + $0x28] sm:$0xff]
  %v1082 = vld [vmem:[#allocation4 + $0x30] sm:$0xff]
  %1090 = vrot.lane.b32.xlu0 %v1076, 32
  %v1091 = vpop.permute.xlu0 %1090
  %1092 = vrot.lane.b32.xlu0 %v1077, 32
  %v1093 = vpop.permute.xlu0 %1092
  %1094 = vrot.lane.b32.xlu0 %v1078, 32
  %v1095 = vpop.permute.xlu0 %1094
  %1096 = vrot.lane.b32.xlu0 %v1079, 32
  %v1097 = vpop.permute.xlu0 %1096
  %1098 = vrot.lane.b32.xlu0 %v1080, 32
  %v1099 = vpop.permute.xlu0 %1098
  %1100 = vrot.lane.b32.xlu0 %v1081, 32
  %v1101 = vpop.permute.xlu0 %1100
  %1102 = vrot.lane.b32.xlu0 %v1082, 32
  %v1103 = vpop.permute.xlu0 %1102
  %v1111 = vsel %vm371, %v1069, %v1091
  %v1112 = vsel %vm371, %v1070, %v1093
  %v1113 = vsel %vm371, %v1071, %v1095
  %v1114 = vsel %vm371, %v1072, %v1097
  %v1115 = vsel %vm371, %v1073, %v1099
  %v1116 = vsel %vm371, %v1074, %v1101
  %v1117 = vsel %vm371, %v1075, %v1103
  %v1118 = vpack.c.bf16 %v1112, %v1111
  %v1119 = vpack.c.bf16 %v1114, %v1113
  %v1120 = vpack.c.bf16 %v1116, %v1115
  %v1121 = vpack.c.bf16 %v1117, %v1117
  %v1122 = vld [vmem:[%s5 + $0x1] sm:$0x1]
  %v1123 = vlaneseq
  %v1124 = vshrl.u32 %v1123, 7
  %v1125 = vsub.s32 0, %v1124
  %v1126 = vrot.slane %v1122, %v1125
  %v1135 = vunpack.c.l.b16 %v34
  %v1136 = vunpack.c.l.b16 %v35
  %v1137 = vunpack.c.l.b16 %v36
  %v1138 = vunpack.c.l.b16 %v37
  %v1139 = vunpack.c.l.b16 %v38
  %v1140 = vunpack.c.l.b16 %v39
  %v1141 = vunpack.c.l.b16 %v40
  %v1142 = vunpack.c.l.b16 %v41
  %v1143 = vpack.c.b16 %v1136, %v1135
  %v1144 = vpack.c.b16 %v1138, %v1137
  %v1145 = vpack.c.b16 %v1140, %v1139
  %v1146 = vpack.c.b16 %v1142, %v1141
  %1152 = vrot.lane.b32.xlu0 %v1126, 64
  %v1153 = vpop.permute.xlu0 %1152
  %v1156 = vsel %vm190, %v1118, 0
  %v1159 = vsel %vm190, %v1119, 0
  %v1162 = vsel %vm190, %v1120, 0
  %v1165 = vsel %vm190, %v1121, 0
  %1167 = vmatprep.subr.bf16.mxu0 0
  %1168 = vmatpush1.bf16.msra.mxu0 %v1143
  %1169 = vmatprep.subr.bf16.mxu0 0
  %1170 = vmatpush1.bf16.msra.mxu0 %v1144
  %1171 = vmatprep.subr.bf16.mxu0 0
  %1172 = vmatpush1.bf16.msra.mxu0 %v1145
  %1173 = vmatprep.subr.bf16.mxu0 0
  %1174 = vmatpush1.bf16.msra.mxu0 %v1146
  %1175 = vmatprep.subr.bf16.mxu0 0
  %1176 = vmatpush1.bf16.msra.mxu0 0
  %1177 = vmatprep.subr.bf16.mxu0 0
  %1178 = vmatpush1.bf16.msra.mxu0 0
  %1179 = vmatprep.subr.bf16.mxu0 0
  %1180 = vmatpush1.bf16.msra.mxu0 0
  %1181 = vmatprep.subr.bf16.mxu0 0
  %1182 = vmatpush1.bf16.msra.mxu0 0
  %1183 = vmatprep.subr.bf16.mxu0 0
  %1184 = vmatpush1.bf16.msra.mxu0 0
  %1185 = vmatprep.subr.bf16.mxu0 0
  %1186 = vmatpush1.bf16.msra.mxu0 0
  %1187 = vmatprep.subr.bf16.mxu0 0
  %1188 = vmatpush1.bf16.msra.mxu0 0
  %1189 = vmatprep.subr.bf16.mxu0 0
  %1190 = vmatpush1.bf16.msra.mxu0 0
  %1191 = vmatprep.subr.bf16.mxu0 0
  %1192 = vmatpush1.bf16.msra.mxu0 0
  %1193 = vmatprep.subr.bf16.mxu0 0
  %1194 = vmatpush1.bf16.msra.mxu0 0
  %1195 = vmatprep.subr.bf16.mxu0 0
  %1196 = vmatpush1.bf16.msra.mxu0 0
  %1197 = vmatprep.subr.bf16.mxu0 0
  %1198 = vmatpush1.bf16.msra.mxu0 0
  %1199 = vmatprep.mubr.bf16.mxu0 0
  %1200 = vmatmul.mubr.bf16.gmra.mrb[0].mxu0 %v1156
  %v1201 = vpop.f32.mrb[0].mxu0
  %v1202 = vadd.f32 %v1153, %v1201
  %v1203 = vpop.f32.mrb[0].mxu0
  %v1204 = vpop.f32.mrb[0].mxu0
  %v1205 = vadd.f32 %v1153, %v1204
  %v1206 = vpop.f32.mrb[0].mxu0
  %1207 = vmatprep.mubr.bf16.mxu0 0
  %1208 = vmatmul.mubr.bf16.gmra.mrb[0].mxu0 %v1159
  %v1209 = vpop.f32.mrb[0].mxu0
  %v1210 = vadd.f32 %v1153, %v1209
  %v1211 = vpop.f32.mrb[0].mxu0
  %v1212 = vpop.f32.mrb[0].mxu0
  %v1213 = vadd.f32 %v1153, %v1212
  %v1214 = vpop.f32.mrb[0].mxu0
  %1215 = vmatprep.mubr.bf16.mxu0 0
  %1216 = vmatmul.mubr.bf16.gmra.mrb[0].mxu0 %v1162
  %v1217 = vpop.f32.mrb[0].mxu0
  %v1218 = vadd.f32 %v1153, %v1217
  %v1219 = vpop.f32.mrb[0].mxu0
  %v1220 = vpop.f32.mrb[0].mxu0
  %v1221 = vadd.f32 %v1153, %v1220
  %v1222 = vpop.f32.mrb[0].mxu0
  %1223 = vmatprep.mubr.bf16.mxu0 0
  %1224 = vmatmul.mubr.bf16.gmra.mrb[0].mxu0 %v1165
  %v1225 = vpop.f32.mrb[0].mxu0
  %v1226 = vadd.f32 %v1153, %v1225
  %v1227 = vpop.f32.mrb[0].mxu0
  %v1228 = vpop.f32.mrb[0].mxu0
  %v1229 = vpop.f32.mrb[0].mxu0
  %1230 = vdwg.mxu0
  %1231 = vst.msk [vmem:[#allocation5] sm:$0xff] %vm371, %v1202
  %1232 = vst.msk [vmem:[#allocation5 + $0x8] sm:$0xff] %vm371, %v1205
  %1233 = vst.msk [vmem:[#allocation5 + $0x10] sm:$0xff] %vm371, %v1210
  %1234 = vst.msk [vmem:[#allocation5 + $0x18] sm:$0xff] %vm371, %v1213
  %1235 = vst.msk [vmem:[#allocation5 + $0x20] sm:$0xff] %vm371, %v1218
  %1236 = vst.msk [vmem:[#allocation5 + $0x28] sm:$0xff] %vm371, %v1221
  %1237 = vst.msk [vmem:[#allocation5 + $0x30] sm:$0xff] %vm371, %v1226
  %v1238 = vld [vmem:[%s1] sm:$0xf]
  %v1239 = vld [vmem:[%s5 + $0x1] sm:$0x1]
  %v1240 = vlaneseq
  %v1241 = vshrl.u32 %v1240, 7
  %v1242 = vsub.s32 0, %v1241
  %v1243 = vrot.slane %v1239, %v1242
  %v1246 = vunpack.c.l.b16 %v42
  %v1247 = vunpack.c.l.b16 %v43
  %v1248 = vpack.c.b16 %v1247, %v1246
  %1250 = vrot.lane.b32.xlu0 %v1243, 32
  %v1251 = vpop.permute.xlu0 %1250
  %vm1253 = vcmask 72704
  %v1255 = vsel %vm1253, %v1238, 0
  %vm1257 = vcmask 1043456
  %v1258 = vsel %vm1257, 4294967295, 65535
  %v1259 = vsel %vm111, %v1258, 0
  %v1261 = vand.u32 %v1248, %v1259
  %1263 = vmatprep.subr.bf16.mxu0 0
  %1264 = vmatpush1.bf16.msra.mxu0 %v1261
  %1265 = vmatprep.subr.bf16.mxu0 0
  %1266 = vmatpush1.bf16.msra.mxu0 0
  %1267 = vmatprep.subr.bf16.mxu0 0
  %1268 = vmatpush1.bf16.msra.mxu0 0
  %1269 = vmatprep.subr.bf16.mxu0 0
  %1270 = vmatpush1.bf16.msra.mxu0 0
  %1271 = vmatprep.subr.bf16.mxu0 0
  %1272 = vmatpush1.bf16.msra.mxu0 0
  %1273 = vmatprep.subr.bf16.mxu0 0
  %1274 = vmatpush1.bf16.msra.mxu0 0
  %1275 = vmatprep.subr.bf16.mxu0 0
  %1276 = vmatpush1.bf16.msra.mxu0 0
  %1277 = vmatprep.subr.bf16.mxu0 0
  %1278 = vmatpush1.bf16.msra.mxu0 0
  %1279 = vmatprep.subr.bf16.mxu0 0
  %1280 = vmatpush1.bf16.msra.mxu0 0
  %1281 = vmatprep.subr.bf16.mxu0 0
  %1282 = vmatpush1.bf16.msra.mxu0 0
  %1283 = vmatprep.subr.bf16.mxu0 0
  %1284 = vmatpush1.bf16.msra.mxu0 0
  %1285 = vmatprep.subr.bf16.mxu0 0
  %1286 = vmatpush1.bf16.msra.mxu0 0
  %1287 = vmatprep.subr.bf16.mxu0 0
  %1288 = vmatpush1.bf16.msra.mxu0 0
  %1289 = vmatprep.subr.bf16.mxu0 0
  %1290 = vmatpush1.bf16.msra.mxu0 0
  %1291 = vmatprep.subr.bf16.mxu0 0
  %1292 = vmatpush1.bf16.msra.mxu0 0
  %1293 = vmatprep.subr.bf16.mxu0 0
  %1294 = vmatpush1.bf16.msra.mxu0 0
  %1295 = vmatprep.mubr.bf16.mxu0 0
  %1296 = vmatmul.mubr.bf16.gmra.mrb[0].mxu0 %v1255
  %v1297 = vpop.f32.mrb[0].mxu0
  %v1298 = vadd.f32 %v1251, %v1297
  %v1299 = vpop.f32.mrb[0].mxu0
  %v1300 = vpop.f32.mrb[0].mxu0
  %v1301 = vpop.f32.mrb[0].mxu0
  %1302 = vdwg.mxu0
  %v1303 = vld [vmem:[#allocation5] sm:$0xff]
  %v1304 = vadd.f32 %v1298, %v1303
  %v1305 = vmul.f32 %v1304, 0.5
  %v1306 = vtanh.pop %v1305
  %v1307 = vpack.c.bf16 %v1306, %v1306
  %v1312 = vunpack.c.l.b16 %v45
  %v1313 = vunpack.c.l.b16 %v46
  %v1314 = vunpack.c.l.b16 %v47
  %v1315 = vunpack.c.l.b16 %v48
  %v1316 = vpack.c.b16 %v1313, %v1312
  %v1317 = vpack.c.b16 %v1315, %v1314
  %v1321 = vsel %vm371, %v1307, 0
  %1323 = vmatprep.subr.bf16.mxu0 0
  %1324 = vmatpush1.bf16.msra.mxu0 %v1316
  %1325 = vmatprep.subr.bf16.mxu0 0
  %1326 = vmatpush1.bf16.msra.mxu0 %v1317
  %1327 = vmatprep.subr.bf16.mxu0 0
  %1328 = vmatpush1.bf16.msra.mxu0 0
  %1329 = vmatprep.subr.bf16.mxu0 0
  %1330 = vmatpush1.bf16.msra.mxu0 0
  %1331 = vmatprep.subr.bf16.mxu0 0
  %1332 = vmatpush1.bf16.msra.mxu0 0
  %1333 = vmatprep.subr.bf16.mxu0 0
  %1334 = vmatpush1.bf16.msra.mxu0 0
  %1335 = vmatprep.subr.bf16.mxu0 0
  %1336 = vmatpush1.bf16.msra.mxu0 0
  %1337 = vmatprep.subr.bf16.mxu0 0
  %1338 = vmatpush1.bf16.msra.mxu0 0
  %1339 = vmatprep.subr.bf16.mxu0 0
  %1340 = vmatpush1.bf16.msra.mxu0 0
  %1341 = vmatprep.subr.bf16.mxu0 0
  %1342 = vmatpush1.bf16.msra.mxu0 0
  %1343 = vmatprep.subr.bf16.mxu0 0
  %1344 = vmatpush1.bf16.msra.mxu0 0
  %1345 = vmatprep.subr.bf16.mxu0 0
  %1346 = vmatpush1.bf16.msra.mxu0 0
  %1347 = vmatprep.subr.bf16.mxu0 0
  %1348 = vmatpush1.bf16.msra.mxu0 0
  %1349 = vmatprep.subr.bf16.mxu0 0
  %1350 = vmatpush1.bf16.msra.mxu0 0
  %1351 = vmatprep.subr.bf16.mxu0 0
  %1352 = vmatpush1.bf16.msra.mxu0 0
  %1353 = vmatprep.subr.bf16.mxu0 0
  %1354 = vmatpush1.bf16.msra.mxu0 0
  %1355 = vmatprep.mubr.bf16.mxu0 0
  %1356 = vmatmul.mubr.bf16.gmra.mrb[0].mxu0 %v1321
  %v1357 = vpop.f32.mrb[0].mxu0
  %v1358 = vadd.f32 %v218, %v1357
  %v1359 = vpop.f32.mrb[0].mxu0
  %v1360 = vpop.f32.mrb[0].mxu0
  %v1361 = vpop.f32.mrb[0].mxu0
  %1362 = vdwg.mxu0
  %vm1363 = vcmp.gt.f32.partialorder %v1358, 20.0
  %v1364 = vmin.f32 %v1358, 20.0
  %v1365 = vmul.f32 %v1364, 1.442695
  %v1366 = vpow.pop %v1365
  %v1367 = vadd.f32 %v1366, 1.0
  %v1368 = vlog2.pop %v1367
  %v1369 = vmul.f32 %v1368, 0.6931472
  %v1370 = vsel %vm1363, %v1358, %v1369
  %v1371 = vld [vmem:[%s2] sm:$0xff]
  %1373 = vrot.lane.b32.xlu0 %v1371, 8
  %v1374 = vpop.permute.xlu0 %1373
  %v1376 = vmul.f32 %v1370, %v1374
  %1378 = vrot.lane.b32.xlu0 %v1376, 120
  %v1379 = vpop.permute.xlu0 %1378
  %v1381 = vadd.f32 %v1358, %v1379
  %1383 = vrot.lane.b32.xlu0 %v1358, 8
  %v1384 = vpop.permute.xlu0 %1383
  %1387 = vrot.lane.b32.xlu0 %v1370, 8
  %v1388 = vpop.permute.xlu0 %1387
  %vm1390 = vcmask 64512
  %v1391 = vsel %vm1390, %v1381, %v1384
  %vm1392 = vcmask 130048
  %v1393 = vsel %vm1392, %v1391, %v1388
  %vm1394 = vcmask 195584
  %1395 = vst.msk [vmem:[%s6] sm:$0xff] %vm1394, %v1393
  %v1396 = vpack.c.bf16 %v1381, %v1381
  %v1398 = vsel %vm1390, %v1396, 0
  %v1401 = vsel %vm1257, %v44, 0
  %1403 = vmatprep.subr.bf16.mxu0 0
  %1404 = vmatpush1.bf16.msra.mxu0 %v1401
  %1405 = vmatprep.subr.bf16.mxu0 0
  %1406 = vmatpush1.bf16.msra.mxu0 0
  %1407 = vmatprep.subr.bf16.mxu0 0
  %1408 = vmatpush1.bf16.msra.mxu0 0
  %1409 = vmatprep.subr.bf16.mxu0 0
  %1410 = vmatpush1.bf16.msra.mxu0 0
  %1411 = vmatprep.subr.bf16.mxu0 0
  %1412 = vmatpush1.bf16.msra.mxu0 0
  %1413 = vmatprep.subr.bf16.mxu0 0
  %1414 = vmatpush1.bf16.msra.mxu0 0
  %1415 = vmatprep.subr.bf16.mxu0 0
  %1416 = vmatpush1.bf16.msra.mxu0 0
  %1417 = vmatprep.subr.bf16.mxu0 0
  %1418 = vmatpush1.bf16.msra.mxu0 0
  %1419 = vmatprep.subr.bf16.mxu0 0
  %1420 = vmatpush1.bf16.msra.mxu0 0
  %1421 = vmatprep.subr.bf16.mxu0 0
  %1422 = vmatpush1.bf16.msra.mxu0 0
  %1423 = vmatprep.subr.bf16.mxu0 0
  %1424 = vmatpush1.bf16.msra.mxu0 0
  %1425 = vmatprep.subr.bf16.mxu0 0
  %1426 = vmatpush1.bf16.msra.mxu0 0
  %1427 = vmatprep.subr.bf16.mxu0 0
  %1428 = vmatpush1.bf16.msra.mxu0 0
  %1429 = vmatprep.subr.bf16.mxu0 0
  %1430 = vmatpush1.bf16.msra.mxu0 0
  %1431 = vmatprep.subr.bf16.mxu0 0
  %1432 = vmatpush1.bf16.msra.mxu0 0
  %1433 = vmatprep.subr.bf16.mxu0 0
  %1434 = vmatpush1.bf16.msra.mxu0 0
  %1435 = vmatprep.mubr.bf16.mxu0 0
  %1436 = vmatmul.mubr.bf16.gmra.mrb[0].mxu0 %v1398
  %v1437 = vpop.f32.mrb[0].mxu0
  %v1438 = vadd.f32 %v213, %v1437
  %v1439 = vpop.f32.mrb[0].mxu0
  %v1440 = vpop.f32.mrb[0].mxu0
  %v1441 = vpop.f32.mrb[0].mxu0
  %1442 = vdwg.mxu0
  %s1443 = scalar_lea.vmem [#allocation5], 8
  %v1444 = vld [vmem:[%s1443] sm:$0xff]
  %v1445 = vadd.f32 %v1438, %v1444
  %v1446 = vmul.f32 %v1445, 0.5
  %v1447 = vtanh.pop %v1446
  %v1448 = vpack.c.bf16 %v1447, %v1447
  %v1453 = vunpack.c.l.b16 %v49
  %v1454 = vunpack.c.l.b16 %v50
  %v1455 = vunpack.c.l.b16 %v51
  %v1456 = vunpack.c.l.b16 %v52
  %v1457 = vpack.c.b16 %v1454, %v1453
  %v1458 = vpack.c.b16 %v1456, %v1455
  %1462 = vrot.lane.b32.xlu0 %v218, 112
  %v1463 = vpop.permute.xlu0 %1462
  %v1466 = vsel %vm371, %v1448, 0
  %1468 = vmatprep.subr.bf16.mxu0 0
  %1469 = vmatpush1.bf16.msra.mxu0 %v1457
  %1470 = vmatprep.subr.bf16.mxu0 0
  %1471 = vmatpush1.bf16.msra.mxu0 %v1458
  %1472 = vmatprep.subr.bf16.mxu0 0
  %1473 = vmatpush1.bf16.msra.mxu0 0
  %1474 = vmatprep.subr.bf16.mxu0 0
  %1475 = vmatpush1.bf16.msra.mxu0 0
  %1476 = vmatprep.subr.bf16.mxu0 0
  %1477 = vmatpush1.bf16.msra.mxu0 0
  %1478 = vmatprep.subr.bf16.mxu0 0
  %1479 = vmatpush1.bf16.msra.mxu0 0
  %1480 = vmatprep.subr.bf16.mxu0 0
  %1481 = vmatpush1.bf16.msra.mxu0 0
  %1482 = vmatprep.subr.bf16.mxu0 0
  %1483 = vmatpush1.bf16.msra.mxu0 0
  %1484 = vmatprep.subr.bf16.mxu0 0
  %1485 = vmatpush1.bf16.msra.mxu0 0
  %1486 = vmatprep.subr.bf16.mxu0 0
  %1487 = vmatpush1.bf16.msra.mxu0 0
  %1488 = vmatprep.subr.bf16.mxu0 0
  %1489 = vmatpush1.bf16.msra.mxu0 0
  %1490 = vmatprep.subr.bf16.mxu0 0
  %1491 = vmatpush1.bf16.msra.mxu0 0
  %1492 = vmatprep.subr.bf16.mxu0 0
  %1493 = vmatpush1.bf16.msra.mxu0 0
  %1494 = vmatprep.subr.bf16.mxu0 0
  %1495 = vmatpush1.bf16.msra.mxu0 0
  %1496 = vmatprep.subr.bf16.mxu0 0
  %1497 = vmatpush1.bf16.msra.mxu0 0
  %1498 = vmatprep.subr.bf16.mxu0 0
  %1499 = vmatpush1.bf16.msra.mxu0 0
  %1500 = vmatprep.mubr.bf16.mxu0 0
  %1501 = vmatmul.mubr.bf16.gmra.mrb[0].mxu0 %v1466
  %v1502 = vpop.f32.mrb[0].mxu0
  %v1503 = vadd.f32 %v1463, %v1502
  %v1504 = vpop.f32.mrb[0].mxu0
  %v1505 = vpop.f32.mrb[0].mxu0
  %v1506 = vpop.f32.mrb[0].mxu0
  %1507 = vdwg.mxu0
  %vm1508 = vcmp.gt.f32.partialorder %v1503, 20.0
  %v1509 = vmin.f32 %v1503, 20.0
  %v1510 = vmul.f32 %v1509, 1.442695
  %v1511 = vpow.pop %v1510
  %v1512 = vadd.f32 %v1511, 1.0
  %v1513 = vlog2.pop %v1512
  %v1514 = vmul.f32 %v1513, 0.6931472
  %v1515 = vsel %vm1508, %v1503, %v1514
  %s1516 = scalar_lea.vmem %s2, 8
  %v1517 = vld [vmem:[%s1516] sm:$0xff]
  %1519 = vrot.lane.b32.xlu0 %v1517, 8
  %v1520 = vpop.permute.xlu0 %1519
  %v1522 = vmul.f32 %v1515, %v1520
  %1524 = vrot.lane.b32.xlu0 %v1522, 120
  %v1525 = vpop.permute.xlu0 %1524
  %v1527 = vadd.f32 %v1503, %v1525
  %1529 = vrot.lane.b32.xlu0 %v1503, 8
  %v1530 = vpop.permute.xlu0 %1529
  %1533 = vrot.lane.b32.xlu0 %v1515, 8
  %v1534 = vpop.permute.xlu0 %1533
  %v1536 = vsel %vm1390, %v1527, %v1530
  %v1537 = vsel %vm1392, %v1536, %v1534
  %s1538 = scalar_lea.vmem %s6, 8
  %1539 = vst.msk [vmem:[%s1538] sm:$0xff] %vm1394, %v1537
  %v1540 = vpack.c.bf16 %v1527, %v1527
  %v1542 = vsel %vm1390, %v1540, 0
  %1544 = vmatprep.subr.bf16.mxu0 0
  %1545 = vmatpush1.bf16.msra.mxu0 %v1401
  %1546 = vmatprep.subr.bf16.mxu0 0
  %1547 = vmatpush1.bf16.msra.mxu0 0
  %1548 = vmatprep.subr.bf16.mxu0 0
  %1549 = vmatpush1.bf16.msra.mxu0 0
  %1550 = vmatprep.subr.bf16.mxu0 0
  %1551 = vmatpush1.bf16.msra.mxu0 0
  %1552 = vmatprep.subr.bf16.mxu0 0
  %1553 = vmatpush1.bf16.msra.mxu0 0
  %1554 = vmatprep.subr.bf16.mxu0 0
  %1555 = vmatpush1.bf16.msra.mxu0 0
  %1556 = vmatprep.subr.bf16.mxu0 0
  %1557 = vmatpush1.bf16.msra.mxu0 0
  %1558 = vmatprep.subr.bf16.mxu0 0
  %1559 = vmatpush1.bf16.msra.mxu0 0
  %1560 = vmatprep.subr.bf16.mxu0 0
  %1561 = vmatpush1.bf16.msra.mxu0 0
  %1562 = vmatprep.subr.bf16.mxu0 0
  %1563 = vmatpush1.bf16.msra.mxu0 0
  %1564 = vmatprep.subr.bf16.mxu0 0
  %1565 = vmatpush1.bf16.msra.mxu0 0
  %1566 = vmatprep.subr.bf16.mxu0 0
  %1567 = vmatpush1.bf16.msra.mxu0 0
  %1568 = vmatprep.subr.bf16.mxu0 0
  %1569 = vmatpush1.bf16.msra.mxu0 0
  %1570 = vmatprep.subr.bf16.mxu0 0
  %1571 = vmatpush1.bf16.msra.mxu0 0
  %1572 = vmatprep.subr.bf16.mxu0 0
  %1573 = vmatpush1.bf16.msra.mxu0 0
  %1574 = vmatprep.subr.bf16.mxu0 0
  %1575 = vmatpush1.bf16.msra.mxu0 0
  %1576 = vmatprep.mubr.bf16.mxu0 0
  %1577 = vmatmul.mubr.bf16.gmra.mrb[0].mxu0 %v1542
  %v1578 = vpop.f32.mrb[0].mxu0
  %v1579 = vadd.f32 %v213, %v1578
  %v1580 = vpop.f32.mrb[0].mxu0
  %v1581 = vpop.f32.mrb[0].mxu0
  %v1582 = vpop.f32.mrb[0].mxu0
  %1583 = vdwg.mxu0
  %s1584 = scalar_lea.vmem [#allocation5], 16
  %v1585 = vld [vmem:[%s1584] sm:$0xff]
  %v1586 = vadd.f32 %v1579, %v1585
  %v1587 = vmul.f32 %v1586, 0.5
  %v1588 = vtanh.pop %v1587
  %v1589 = vpack.c.bf16 %v1588, %v1588
  %v1591 = vsel %vm371, %v1589, 0
  %1593 = vmatprep.subr.bf16.mxu0 0
  %1594 = vmatpush1.bf16.msra.mxu0 %v1457
  %1595 = vmatprep.subr.bf16.mxu0 0
  %1596 = vmatpush1.bf16.msra.mxu0 %v1458
  %1597 = vmatprep.subr.bf16.mxu0 0
  %1598 = vmatpush1.bf16.msra.mxu0 0
  %1599 = vmatprep.subr.bf16.mxu0 0
  %1600 = vmatpush1.bf16.msra.mxu0 0
  %1601 = vmatprep.subr.bf16.mxu0 0
  %1602 = vmatpush1.bf16.msra.mxu0 0
  %1603 = vmatprep.subr.bf16.mxu0 0
  %1604 = vmatpush1.bf16.msra.mxu0 0
  %1605 = vmatprep.subr.bf16.mxu0 0
  %1606 = vmatpush1.bf16.msra.mxu0 0
  %1607 = vmatprep.subr.bf16.mxu0 0
  %1608 = vmatpush1.bf16.msra.mxu0 0
  %1609 = vmatprep.subr.bf16.mxu0 0
  %1610 = vmatpush1.bf16.msra.mxu0 0
  %1611 = vmatprep.subr.bf16.mxu0 0
  %1612 = vmatpush1.bf16.msra.mxu0 0
  %1613 = vmatprep.subr.bf16.mxu0 0
  %1614 = vmatpush1.bf16.msra.mxu0 0
  %1615 = vmatprep.subr.bf16.mxu0 0
  %1616 = vmatpush1.bf16.msra.mxu0 0
  %1617 = vmatprep.subr.bf16.mxu0 0
  %1618 = vmatpush1.bf16.msra.mxu0 0
  %1619 = vmatprep.subr.bf16.mxu0 0
  %1620 = vmatpush1.bf16.msra.mxu0 0
  %1621 = vmatprep.subr.bf16.mxu0 0
  %1622 = vmatpush1.bf16.msra.mxu0 0
  %1623 = vmatprep.subr.bf16.mxu0 0
  %1624 = vmatpush1.bf16.msra.mxu0 0
  %1625 = vmatprep.mubr.bf16.mxu0 0
  %1626 = vmatmul.mubr.bf16.gmra.mrb[0].mxu0 %v1591
  %v1627 = vpop.f32.mrb[0].mxu0
  %v1628 = vadd.f32 %v1463, %v1627
  %v1629 = vpop.f32.mrb[0].mxu0
  %v1630 = vpop.f32.mrb[0].mxu0
  %v1631 = vpop.f32.mrb[0].mxu0
  %1632 = vdwg.mxu0
  %vm1633 = vcmp.gt.f32.partialorder %v1628, 20.0
  %v1634 = vmin.f32 %v1628, 20.0
  %v1635 = vmul.f32 %v1634, 1.442695
  %v1636 = vpow.pop %v1635
  %v1637 = vadd.f32 %v1636, 1.0
  %v1638 = vlog2.pop %v1637
  %v1639 = vmul.f32 %v1638, 0.6931472
  %v1640 = vsel %vm1633, %v1628, %v1639
  %s1641 = scalar_lea.vmem %s2, 16
  %v1642 = vld [vmem:[%s1641] sm:$0xff]
  %1644 = vrot.lane.b32.xlu0 %v1642, 8
  %v1645 = vpop.permute.xlu0 %1644
  %v1647 = vmul.f32 %v1640, %v1645
  %1649 = vrot.lane.b32.xlu0 %v1647, 120
  %v1650 = vpop.permute.xlu0 %1649
  %v1652 = vadd.f32 %v1628, %v1650
  %1654 = vrot.lane.b32.xlu0 %v1628, 8
  %v1655 = vpop.permute.xlu0 %1654
  %1658 = vrot.lane.b32.xlu0 %v1640, 8
  %v1659 = vpop.permute.xlu0 %1658
  %v1661 = vsel %vm1390, %v1652, %v1655
  %v1662 = vsel %vm1392, %v1661, %v1659
  %s1663 = scalar_lea.vmem %s6, 16
  %1664 = vst.msk [vmem:[%s1663] sm:$0xff] %vm1394, %v1662
  %v1665 = vpack.c.bf16 %v1652, %v1652
  %v1667 = vsel %vm1390, %v1665, 0
  %1669 = vmatprep.subr.bf16.mxu0 0
  %1670 = vmatpush1.bf16.msra.mxu0 %v1401
  %1671 = vmatprep.subr.bf16.mxu0 0
  %1672 = vmatpush1.bf16.msra.mxu0 0
  %1673 = vmatprep.subr.bf16.mxu0 0
  %1674 = vmatpush1.bf16.msra.mxu0 0
  %1675 = vmatprep.subr.bf16.mxu0 0
  %1676 = vmatpush1.bf16.msra.mxu0 0
  %1677 = vmatprep.subr.bf16.mxu0 0
  %1678 = vmatpush1.bf16.msra.mxu0 0
  %1679 = vmatprep.subr.bf16.mxu0 0
  %1680 = vmatpush1.bf16.msra.mxu0 0
  %1681 = vmatprep.subr.bf16.mxu0 0
  %1682 = vmatpush1.bf16.msra.mxu0 0
  %1683 = vmatprep.subr.bf16.mxu0 0
  %1684 = vmatpush1.bf16.msra.mxu0 0
  %1685 = vmatprep.subr.bf16.mxu0 0
  %1686 = vmatpush1.bf16.msra.mxu0 0
  %1687 = vmatprep.subr.bf16.mxu0 0
  %1688 = vmatpush1.bf16.msra.mxu0 0
  %1689 = vmatprep.subr.bf16.mxu0 0
  %1690 = vmatpush1.bf16.msra.mxu0 0
  %1691 = vmatprep.subr.bf16.mxu0 0
  %1692 = vmatpush1.bf16.msra.mxu0 0
  %1693 = vmatprep.subr.bf16.mxu0 0
  %1694 = vmatpush1.bf16.msra.mxu0 0
  %1695 = vmatprep.subr.bf16.mxu0 0
  %1696 = vmatpush1.bf16.msra.mxu0 0
  %1697 = vmatprep.subr.bf16.mxu0 0
  %1698 = vmatpush1.bf16.msra.mxu0 0
  %1699 = vmatprep.subr.bf16.mxu0 0
  %1700 = vmatpush1.bf16.msra.mxu0 0
  %1701 = vmatprep.mubr.bf16.mxu0 0
  %1702 = vmatmul.mubr.bf16.gmra.mrb[0].mxu0 %v1667
  %v1703 = vpop.f32.mrb[0].mxu0
  %v1704 = vadd.f32 %v213, %v1703
  %v1705 = vpop.f32.mrb[0].mxu0
  %v1706 = vpop.f32.mrb[0].mxu0
  %v1707 = vpop.f32.mrb[0].mxu0
  %1708 = vdwg.mxu0
  %s1709 = scalar_lea.vmem [#allocation5], 24
  %v1710 = vld [vmem:[%s1709] sm:$0xff]
  %v1711 = vadd.f32 %v1704, %v1710
  %v1712 = vmul.f32 %v1711, 0.5
  %v1713 = vtanh.pop %v1712
  %v1714 = vpack.c.bf16 %v1713, %v1713
  %v1716 = vsel %vm371, %v1714, 0
  %1718 = vmatprep.subr.bf16.mxu0 0
  %1719 = vmatpush1.bf16.msra.mxu0 %v1457
  %1720 = vmatprep.subr.bf16.mxu0 0
  %1721 = vmatpush1.bf16.msra.mxu0 %v1458
  %1722 = vmatprep.subr.bf16.mxu0 0
  %1723 = vmatpush1.bf16.msra.mxu0 0
  %1724 = vmatprep.subr.bf16.mxu0 0
  %1725 = vmatpush1.bf16.msra.mxu0 0
  %1726 = vmatprep.subr.bf16.mxu0 0
  %1727 = vmatpush1.bf16.msra.mxu0 0
  %1728 = vmatprep.subr.bf16.mxu0 0
  %1729 = vmatpush1.bf16.msra.mxu0 0
  %1730 = vmatprep.subr.bf16.mxu0 0
  %1731 = vmatpush1.bf16.msra.mxu0 0
  %1732 = vmatprep.subr.bf16.mxu0 0
  %1733 = vmatpush1.bf16.msra.mxu0 0
  %1734 = vmatprep.subr.bf16.mxu0 0
  %1735 = vmatpush1.bf16.msra.mxu0 0
  %1736 = vmatprep.subr.bf16.mxu0 0
  %1737 = vmatpush1.bf16.msra.mxu0 0
  %1738 = vmatprep.subr.bf16.mxu0 0
  %1739 = vmatpush1.bf16.msra.mxu0 0
  %1740 = vmatprep.subr.bf16.mxu0 0
  %1741 = vmatpush1.bf16.msra.mxu0 0
  %1742 = vmatprep.subr.bf16.mxu0 0
  %1743 = vmatpush1.bf16.msra.mxu0 0
  %1744 = vmatprep.subr.bf16.mxu0 0
  %1745 = vmatpush1.bf16.msra.mxu0 0
  %1746 = vmatprep.subr.bf16.mxu0 0
  %1747 = vmatpush1.bf16.msra.mxu0 0
  %1748 = vmatprep.subr.bf16.mxu0 0
  %1749 = vmatpush1.bf16.msra.mxu0 0
  %1750 = vmatprep.mubr.bf16.mxu0 0
  %1751 = vmatmul.mubr.bf16.gmra.mrb[0].mxu0 %v1716
  %v1752 = vpop.f32.mrb[0].mxu0
  %v1753 = vadd.f32 %v1463, %v1752
  %v1754 = vpop.f32.mrb[0].mxu0
  %v1755 = vpop.f32.mrb[0].mxu0
  %v1756 = vpop.f32.mrb[0].mxu0
  %1757 = vdwg.mxu0
  %vm1758 = vcmp.gt.f32.partialorder %v1753, 20.0
  %v1759 = vmin.f32 %v1753, 20.0
  %v1760 = vmul.f32 %v1759, 1.442695
  %v1761 = vpow.pop %v1760
  %v1762 = vadd.f32 %v1761, 1.0
  %v1763 = vlog2.pop %v1762
  %v1764 = vmul.f32 %v1763, 0.6931472
  %v1765 = vsel %vm1758, %v1753, %v1764
  %s1766 = scalar_lea.vmem %s2, 24
  %v1767 = vld [vmem:[%s1766] sm:$0xff]
  %1769 = vrot.lane.b32.xlu0 %v1767, 8
  %v1770 = vpop.permute.xlu0 %1769
  %v1772 = vmul.f32 %v1765, %v1770
  %1774 = vrot.lane.b32.xlu0 %v1772, 120
  %v1775 = vpop.permute.xlu0 %1774
  %v1777 = vadd.f32 %v1753, %v1775
  %1779 = vrot.lane.b32.xlu0 %v1753, 8
  %v1780 = vpop.permute.xlu0 %1779
  %1783 = vrot.lane.b32.xlu0 %v1765, 8
  %v1784 = vpop.permute.xlu0 %1783
  %v1786 = vsel %vm1390, %v1777, %v1780
  %v1787 = vsel %vm1392, %v1786, %v1784
  %s1788 = scalar_lea.vmem %s6, 24
  %1789 = vst.msk [vmem:[%s1788] sm:$0xff] %vm1394, %v1787
  %v1790 = vpack.c.bf16 %v1777, %v1777
  %v1792 = vsel %vm1390, %v1790, 0
  %1794 = vmatprep.subr.bf16.mxu0 0
  %1795 = vmatpush1.bf16.msra.mxu0 %v1401
  %1796 = vmatprep.subr.bf16.mxu0 0
  %1797 = vmatpush1.bf16.msra.mxu0 0
  %1798 = vmatprep.subr.bf16.mxu0 0
  %1799 = vmatpush1.bf16.msra.mxu0 0
  %1800 = vmatprep.subr.bf16.mxu0 0
  %1801 = vmatpush1.bf16.msra.mxu0 0
  %1802 = vmatprep.subr.bf16.mxu0 0
  %1803 = vmatpush1.bf16.msra.mxu0 0
  %1804 = vmatprep.subr.bf16.mxu0 0
  %1805 = vmatpush1.bf16.msra.mxu0 0
  %1806 = vmatprep.subr.bf16.mxu0 0
  %1807 = vmatpush1.bf16.msra.mxu0 0
  %1808 = vmatprep.subr.bf16.mxu0 0
  %1809 = vmatpush1.bf16.msra.mxu0 0
  %1810 = vmatprep.subr.bf16.mxu0 0
  %1811 = vmatpush1.bf16.msra.mxu0 0
  %1812 = vmatprep.subr.bf16.mxu0 0
  %1813 = vmatpush1.bf16.msra.mxu0 0
  %1814 = vmatprep.subr.bf16.mxu0 0
  %1815 = vmatpush1.bf16.msra.mxu0 0
  %1816 = vmatprep.subr.bf16.mxu0 0
  %1817 = vmatpush1.bf16.msra.mxu0 0
  %1818 = vmatprep.subr.bf16.mxu0 0
  %1819 = vmatpush1.bf16.msra.mxu0 0
  %1820 = vmatprep.subr.bf16.mxu0 0
  %1821 = vmatpush1.bf16.msra.mxu0 0
  %1822 = vmatprep.subr.bf16.mxu0 0
  %1823 = vmatpush1.bf16.msra.mxu0 0
  %1824 = vmatprep.subr.bf16.mxu0 0
  %1825 = vmatpush1.bf16.msra.mxu0 0
  %1826 = vmatprep.mubr.bf16.mxu0 0
  %1827 = vmatmul.mubr.bf16.gmra.mrb[0].mxu0 %v1792
  %v1828 = vpop.f32.mrb[0].mxu0
  %v1829 = vadd.f32 %v213, %v1828
  %v1830 = vpop.f32.mrb[0].mxu0
  %v1831 = vpop.f32.mrb[0].mxu0
  %v1832 = vpop.f32.mrb[0].mxu0
  %1833 = vdwg.mxu0
  %s1834 = scalar_lea.vmem [#allocation5], 32
  %v1835 = vld [vmem:[%s1834] sm:$0xff]
  %v1836 = vadd.f32 %v1829, %v1835
  %v1837 = vmul.f32 %v1836, 0.5
  %v1838 = vtanh.pop %v1837
  %v1839 = vpack.c.bf16 %v1838, %v1838
  %v1841 = vsel %vm371, %v1839, 0
  %1843 = vmatprep.subr.bf16.mxu0 0
  %1844 = vmatpush1.bf16.msra.mxu0 %v1457
  %1845 = vmatprep.subr.bf16.mxu0 0
  %1846 = vmatpush1.bf16.msra.mxu0 %v1458
  %1847 = vmatprep.subr.bf16.mxu0 0
  %1848 = vmatpush1.bf16.msra.mxu0 0
  %1849 = vmatprep.subr.bf16.mxu0 0
  %1850 = vmatpush1.bf16.msra.mxu0 0
  %1851 = vmatprep.subr.bf16.mxu0 0
  %1852 = vmatpush1.bf16.msra.mxu0 0
  %1853 = vmatprep.subr.bf16.mxu0 0
  %1854 = vmatpush1.bf16.msra.mxu0 0
  %1855 = vmatprep.subr.bf16.mxu0 0
  %1856 = vmatpush1.bf16.msra.mxu0 0
  %1857 = vmatprep.subr.bf16.mxu0 0
  %1858 = vmatpush1.bf16.msra.mxu0 0
  %1859 = vmatprep.subr.bf16.mxu0 0
  %1860 = vmatpush1.bf16.msra.mxu0 0
  %1861 = vmatprep.subr.bf16.mxu0 0
  %1862 = vmatpush1.bf16.msra.mxu0 0
  %1863 = vmatprep.subr.bf16.mxu0 0
  %1864 = vmatpush1.bf16.msra.mxu0 0
  %1865 = vmatprep.subr.bf16.mxu0 0
  %1866 = vmatpush1.bf16.msra.mxu0 0
  %1867 = vmatprep.subr.bf16.mxu0 0
  %1868 = vmatpush1.bf16.msra.mxu0 0
  %1869 = vmatprep.subr.bf16.mxu0 0
  %1870 = vmatpush1.bf16.msra.mxu0 0
  %1871 = vmatprep.subr.bf16.mxu0 0
  %1872 = vmatpush1.bf16.msra.mxu0 0
  %1873 = vmatprep.subr.bf16.mxu0 0
  %1874 = vmatpush1.bf16.msra.mxu0 0
  %1875 = vmatprep.mubr.bf16.mxu0 0
  %1876 = vmatmul.mubr.bf16.gmra.mrb[0].mxu0 %v1841
  %v1877 = vpop.f32.mrb[0].mxu0
  %v1878 = vadd.f32 %v1463, %v1877
  %v1879 = vpop.f32.mrb[0].mxu0
  %v1880 = vpop.f32.mrb[0].mxu0
  %v1881 = vpop.f32.mrb[0].mxu0
  %1882 = vdwg.mxu0
  %vm1883 = vcmp.gt.f32.partialorder %v1878, 20.0
  %v1884 = vmin.f32 %v1878, 20.0
  %v1885 = vmul.f32 %v1884, 1.442695
  %v1886 = vpow.pop %v1885
  %v1887 = vadd.f32 %v1886, 1.0
  %v1888 = vlog2.pop %v1887
  %v1889 = vmul.f32 %v1888, 0.6931472
  %v1890 = vsel %vm1883, %v1878, %v1889
  %s1891 = scalar_lea.vmem %s2, 32
  %v1892 = vld [vmem:[%s1891] sm:$0xff]
  %1894 = vrot.lane.b32.xlu0 %v1892, 8
  %v1895 = vpop.permute.xlu0 %1894
  %v1897 = vmul.f32 %v1890, %v1895
  %1899 = vrot.lane.b32.xlu0 %v1897, 120
  %v1900 = vpop.permute.xlu0 %1899
  %v1902 = vadd.f32 %v1878, %v1900
  %1904 = vrot.lane.b32.xlu0 %v1878, 8
  %v1905 = vpop.permute.xlu0 %1904
  %1908 = vrot.lane.b32.xlu0 %v1890, 8
  %v1909 = vpop.permute.xlu0 %1908
  %v1911 = vsel %vm1390, %v1902, %v1905
  %v1912 = vsel %vm1392, %v1911, %v1909
  %s1913 = scalar_lea.vmem %s6, 32
  %1914 = vst.msk [vmem:[%s1913] sm:$0xff] %vm1394, %v1912
  %v1915 = vpack.c.bf16 %v1902, %v1902
  %v1917 = vsel %vm1390, %v1915, 0
  %1919 = vmatprep.subr.bf16.mxu0 0
  %1920 = vmatpush1.bf16.msra.mxu0 %v1401
  %1921 = vmatprep.subr.bf16.mxu0 0
  %1922 = vmatpush1.bf16.msra.mxu0 0
  %1923 = vmatprep.subr.bf16.mxu0 0
  %1924 = vmatpush1.bf16.msra.mxu0 0
  %1925 = vmatprep.subr.bf16.mxu0 0
  %1926 = vmatpush1.bf16.msra.mxu0 0
  %1927 = vmatprep.subr.bf16.mxu0 0
  %1928 = vmatpush1.bf16.msra.mxu0 0
  %1929 = vmatprep.subr.bf16.mxu0 0
  %1930 = vmatpush1.bf16.msra.mxu0 0
  %1931 = vmatprep.subr.bf16.mxu0 0
  %1932 = vmatpush1.bf16.msra.mxu0 0
  %1933 = vmatprep.subr.bf16.mxu0 0
  %1934 = vmatpush1.bf16.msra.mxu0 0
  %1935 = vmatprep.subr.bf16.mxu0 0
  %1936 = vmatpush1.bf16.msra.mxu0 0
  %1937 = vmatprep.subr.bf16.mxu0 0
  %1938 = vmatpush1.bf16.msra.mxu0 0
  %1939 = vmatprep.subr.bf16.mxu0 0
  %1940 = vmatpush1.bf16.msra.mxu0 0
  %1941 = vmatprep.subr.bf16.mxu0 0
  %1942 = vmatpush1.bf16.msra.mxu0 0
  %1943 = vmatprep.subr.bf16.mxu0 0
  %1944 = vmatpush1.bf16.msra.mxu0 0
  %1945 = vmatprep.subr.bf16.mxu0 0
  %1946 = vmatpush1.bf16.msra.mxu0 0
  %1947 = vmatprep.subr.bf16.mxu0 0
  %1948 = vmatpush1.bf16.msra.mxu0 0
  %1949 = vmatprep.subr.bf16.mxu0 0
  %1950 = vmatpush1.bf16.msra.mxu0 0
  %1951 = vmatprep.mubr.bf16.mxu0 0
  %1952 = vmatmul.mubr.bf16.gmra.mrb[0].mxu0 %v1917
  %v1953 = vpop.f32.mrb[0].mxu0
  %v1954 = vadd.f32 %v213, %v1953
  %v1955 = vpop.f32.mrb[0].mxu0
  %v1956 = vpop.f32.mrb[0].mxu0
  %v1957 = vpop.f32.mrb[0].mxu0
  %1958 = vdwg.mxu0
  %s1959 = scalar_lea.vmem [#allocation5], 40
  %v1960 = vld [vmem:[%s1959] sm:$0xff]
  %v1961 = vadd.f32 %v1954, %v1960
  %v1962 = vmul.f32 %v1961, 0.5
  %v1963 = vtanh.pop %v1962
  %v1964 = vpack.c.bf16 %v1963, %v1963
  %v1966 = vsel %vm371, %v1964, 0
  %1968 = vmatprep.subr.bf16.mxu0 0
  %1969 = vmatpush1.bf16.msra.mxu0 %v1457
  %1970 = vmatprep.subr.bf16.mxu0 0
  %1971 = vmatpush1.bf16.msra.mxu0 %v1458
  %1972 = vmatprep.subr.bf16.mxu0 0
  %1973 = vmatpush1.bf16.msra.mxu0 0
  %1974 = vmatprep.subr.bf16.mxu0 0
  %1975 = vmatpush1.bf16.msra.mxu0 0
  %1976 = vmatprep.subr.bf16.mxu0 0
  %1977 = vmatpush1.bf16.msra.mxu0 0
  %1978 = vmatprep.subr.bf16.mxu0 0
  %1979 = vmatpush1.bf16.msra.mxu0 0
  %1980 = vmatprep.subr.bf16.mxu0 0
  %1981 = vmatpush1.bf16.msra.mxu0 0
  %1982 = vmatprep.subr.bf16.mxu0 0
  %1983 = vmatpush1.bf16.msra.mxu0 0
  %1984 = vmatprep.subr.bf16.mxu0 0
  %1985 = vmatpush1.bf16.msra.mxu0 0
  %1986 = vmatprep.subr.bf16.mxu0 0
  %1987 = vmatpush1.bf16.msra.mxu0 0
  %1988 = vmatprep.subr.bf16.mxu0 0
  %1989 = vmatpush1.bf16.msra.mxu0 0
  %1990 = vmatprep.subr.bf16.mxu0 0
  %1991 = vmatpush1.bf16.msra.mxu0 0
  %1992 = vmatprep.subr.bf16.mxu0 0
  %1993 = vmatpush1.bf16.msra.mxu0 0
  %1994 = vmatprep.subr.bf16.mxu0 0
  %1995 = vmatpush1.bf16.msra.mxu0 0
  %1996 = vmatprep.subr.bf16.mxu0 0
  %1997 = vmatpush1.bf16.msra.mxu0 0
  %1998 = vmatprep.subr.bf16.mxu0 0
  %1999 = vmatpush1.bf16.msra.mxu0 0
  %2000 = vmatprep.mubr.bf16.mxu0 0
  %2001 = vmatmul.mubr.bf16.gmra.mrb[0].mxu0 %v1966
  %v2002 = vpop.f32.mrb[0].mxu0
  %v2003 = vadd.f32 %v1463, %v2002
  %v2004 = vpop.f32.mrb[0].mxu0
  %v2005 = vpop.f32.mrb[0].mxu0
  %v2006 = vpop.f32.mrb[0].mxu0
  %2007 = vdwg.mxu0
  %vm2008 = vcmp.gt.f32.partialorder %v2003, 20.0
  %v2009 = vmin.f32 %v2003, 20.0
  %v2010 = vmul.f32 %v2009, 1.442695
  %v2011 = vpow.pop %v2010
  %v2012 = vadd.f32 %v2011, 1.0
  %v2013 = vlog2.pop %v2012
  %v2014 = vmul.f32 %v2013, 0.6931472
  %v2015 = vsel %vm2008, %v2003, %v2014
  %s2016 = scalar_lea.vmem %s2, 40
  %v2017 = vld [vmem:[%s2016] sm:$0xff]
  %2019 = vrot.lane.b32.xlu0 %v2017, 8
  %v2020 = vpop.permute.xlu0 %2019
  %v2022 = vmul.f32 %v2015, %v2020
  %2024 = vrot.lane.b32.xlu0 %v2022, 120
  %v2025 = vpop.permute.xlu0 %2024
  %v2027 = vadd.f32 %v2003, %v2025
  %2029 = vrot.lane.b32.xlu0 %v2003, 8
  %v2030 = vpop.permute.xlu0 %2029
  %2033 = vrot.lane.b32.xlu0 %v2015, 8
  %v2034 = vpop.permute.xlu0 %2033
  %v2036 = vsel %vm1390, %v2027, %v2030
  %v2037 = vsel %vm1392, %v2036, %v2034
  %s2038 = scalar_lea.vmem %s6, 40
  %2039 = vst.msk [vmem:[%s2038] sm:$0xff] %vm1394, %v2037
  %v2040 = vpack.c.bf16 %v2027, %v2027
  %v2042 = vsel %vm1390, %v2040, 0
  %2044 = vmatprep.subr.bf16.mxu0 0
  %2045 = vmatpush1.bf16.msra.mxu0 %v1401
  %2046 = vmatprep.subr.bf16.mxu0 0
  %2047 = vmatpush1.bf16.msra.mxu0 0
  %2048 = vmatprep.subr.bf16.mxu0 0
  %2049 = vmatpush1.bf16.msra.mxu0 0
  %2050 = vmatprep.subr.bf16.mxu0 0
  %2051 = vmatpush1.bf16.msra.mxu0 0
  %2052 = vmatprep.subr.bf16.mxu0 0
  %2053 = vmatpush1.bf16.msra.mxu0 0
  %2054 = vmatprep.subr.bf16.mxu0 0
  %2055 = vmatpush1.bf16.msra.mxu0 0
  %2056 = vmatprep.subr.bf16.mxu0 0
  %2057 = vmatpush1.bf16.msra.mxu0 0
  %2058 = vmatprep.subr.bf16.mxu0 0
  %2059 = vmatpush1.bf16.msra.mxu0 0
  %2060 = vmatprep.subr.bf16.mxu0 0
  %2061 = vmatpush1.bf16.msra.mxu0 0
  %2062 = vmatprep.subr.bf16.mxu0 0
  %2063 = vmatpush1.bf16.msra.mxu0 0
  %2064 = vmatprep.subr.bf16.mxu0 0
  %2065 = vmatpush1.bf16.msra.mxu0 0
  %2066 = vmatprep.subr.bf16.mxu0 0
  %2067 = vmatpush1.bf16.msra.mxu0 0
  %2068 = vmatprep.subr.bf16.mxu0 0
  %2069 = vmatpush1.bf16.msra.mxu0 0
  %2070 = vmatprep.subr.bf16.mxu0 0
  %2071 = vmatpush1.bf16.msra.mxu0 0
  %2072 = vmatprep.subr.bf16.mxu0 0
  %2073 = vmatpush1.bf16.msra.mxu0 0
  %2074 = vmatprep.subr.bf16.mxu0 0
  %2075 = vmatpush1.bf16.msra.mxu0 0
  %2076 = vmatprep.mubr.bf16.mxu0 0
  %2077 = vmatmul.mubr.bf16.gmra.mrb[0].mxu0 %v2042
  %v2078 = vpop.f32.mrb[0].mxu0
  %v2079 = vadd.f32 %v213, %v2078
  %v2080 = vpop.f32.mrb[0].mxu0
  %v2081 = vpop.f32.mrb[0].mxu0
  %v2082 = vpop.f32.mrb[0].mxu0
  %2083 = vdwg.mxu0
  %s2084 = scalar_lea.vmem [#allocation5], 48
  %v2085 = vld [vmem:[%s2084] sm:$0xff]
  %v2086 = vadd.f32 %v2079, %v2085
  %v2087 = vmul.f32 %v2086, 0.5
  %v2088 = vtanh.pop %v2087
  %v2089 = vpack.c.bf16 %v2088, %v2088
  %v2091 = vsel %vm371, %v2089, 0
  %2093 = vmatprep.subr.bf16.mxu0 0
  %2094 = vmatpush1.bf16.msra.mxu0 %v1457
  %2095 = vmatprep.subr.bf16.mxu0 0
  %2096 = vmatpush1.bf16.msra.mxu0 %v1458
  %2097 = vmatprep.subr.bf16.mxu0 0
  %2098 = vmatpush1.bf16.msra.mxu0 0
  %2099 = vmatprep.subr.bf16.mxu0 0
  %2100 = vmatpush1.bf16.msra.mxu0 0
  %2101 = vmatprep.subr.bf16.mxu0 0
  %2102 = vmatpush1.bf16.msra.mxu0 0
  %2103 = vmatprep.subr.bf16.mxu0 0
  %2104 = vmatpush1.bf16.msra.mxu0 0
  %2105 = vmatprep.subr.bf16.mxu0 0
  %2106 = vmatpush1.bf16.msra.mxu0 0
  %2107 = vmatprep.subr.bf16.mxu0 0
  %2108 = vmatpush1.bf16.msra.mxu0 0
  %2109 = vmatprep.subr.bf16.mxu0 0
  %2110 = vmatpush1.bf16.msra.mxu0 0
  %2111 = vmatprep.subr.bf16.mxu0 0
  %2112 = vmatpush1.bf16.msra.mxu0 0
  %2113 = vmatprep.subr.bf16.mxu0 0
  %2114 = vmatpush1.bf16.msra.mxu0 0
  %2115 = vmatprep.subr.bf16.mxu0 0
  %2116 = vmatpush1.bf16.msra.mxu0 0
  %2117 = vmatprep.subr.bf16.mxu0 0
  %2118 = vmatpush1.bf16.msra.mxu0 0
  %2119 = vmatprep.subr.bf16.mxu0 0
  %2120 = vmatpush1.bf16.msra.mxu0 0
  %2121 = vmatprep.subr.bf16.mxu0 0
  %2122 = vmatpush1.bf16.msra.mxu0 0
  %2123 = vmatprep.subr.bf16.mxu0 0
  %2124 = vmatpush1.bf16.msra.mxu0 0
  %2125 = vmatprep.mubr.bf16.mxu0 0
  %2126 = vmatmul.mubr.bf16.gmra.mrb[0].mxu0 %v2091
  %v2127 = vpop.f32.mrb[0].mxu0
  %v2128 = vadd.f32 %v1463, %v2127
  %v2129 = vpop.f32.mrb[0].mxu0
  %v2130 = vpop.f32.mrb[0].mxu0
  %v2131 = vpop.f32.mrb[0].mxu0
  %2132 = vdwg.mxu0
  %vm2133 = vcmp.gt.f32.partialorder %v2128, 20.0
  %v2134 = vmin.f32 %v2128, 20.0
  %v2135 = vmul.f32 %v2134, 1.442695
  %v2136 = vpow.pop %v2135
  %v2137 = vadd.f32 %v2136, 1.0
  %v2138 = vlog2.pop %v2137
  %v2139 = vmul.f32 %v2138, 0.6931472
  %v2140 = vsel %vm2133, %v2128, %v2139
  %s2141 = scalar_lea.vmem %s2, 48
  %v2142 = vld [vmem:[%s2141] sm:$0xff]
  %2144 = vrot.lane.b32.xlu0 %v2142, 8
  %v2145 = vpop.permute.xlu0 %2144
  %v2147 = vmul.f32 %v2140, %v2145
  %2149 = vrot.lane.b32.xlu0 %v2147, 120
  %v2150 = vpop.permute.xlu0 %2149
  %v2152 = vadd.f32 %v2128, %v2150
  %2154 = vrot.lane.b32.xlu0 %v2128, 8
  %v2155 = vpop.permute.xlu0 %2154
  %2158 = vrot.lane.b32.xlu0 %v2140, 8
  %v2159 = vpop.permute.xlu0 %2158
  %v2161 = vsel %vm1390, %v2152, %v2155
  %v2162 = vsel %vm1392, %v2161, %v2159
  %s2163 = scalar_lea.vmem %s6, 48
  %2164 = vst.msk [vmem:[%s2163] sm:$0xff] %vm1394, %v2162
  // Predicated region
  $region26: #{rnn_stinf_forward.1} parent=0 // pred_check
    _
  $region27: #{rnn_stinf_forward.1} parent=0 // pred_check_branch
    %2166 = sbr.rel (0) target = $region29
  $region28: #{rnn_stinf_forward.1} parent=0 // pred_region
    _
  $region29: #{rnn_stinf_forward.1} parent=0 // pred_fallthru
    _
  // Predicated region
  $region30: #{rnn_stinf_forward.1} parent=0 // pred_check
    _
  $region31: #{rnn_stinf_forward.1} parent=0 // pred_check_branch
    %2168 = sbr.rel (0) target = $region33
  $region32: #{rnn_stinf_forward.1} parent=0 // pred_region
    _
  $region33: #{rnn_stinf_forward.1} parent=0 // pred_fallthru
    _

</llo_original>
